<compile_context>
chip_gen: v5e
topology: v5e:2x2
jax: 0.10.0
libtpu: 0.0.40
codegen_flags: <defaults>
</compile_context>

<pallas_src>
import jax
import jax.numpy as jnp
from jax.experimental import pallas as pl
from jax.experimental.pallas import tpu as pltpu

BN_EPS = 1e-5
HI = jax.lax.Precision.HIGHEST   # used only by the pure-JAX reference


# ----------------------------- kernel helpers ------------------------------ #

def _per_channel_sum_ld(v, C, W2):
    """v: (1, W2*C).  Cyclic lane-roll reduction over the W2 spatial positions
    of each channel group; every lane ends up holding its channel's total
    (i.e. the per-channel sum, already channel-tiled).  Exact f32."""
    if (W2 & (W2 - 1)) == 0:                       # power of two: log2(W2) rolls
        s = 1
        while s < W2:
            v = v + pltpu.roll(v, shift=s * C, axis=1)
            s *= 2
        return v
    acc, cur = v, v                                # general: W2 - 1 rolls
    for _ in range(W2 - 1):
        cur = pltpu.roll(cur, shift=C, axis=1)
        acc = acc + cur
    return acc


def _bn_train_ld(y, gamma_lane, beta_lane, C, W2):
    """Training-mode BatchNorm2d on a lane-dense (R, W2*C) tensor.

    Two-pass statistics (mean, then centered variance).  gamma / beta are
    channel-tiled (1, W2*C)."""
    R = y.shape[0]
    inv_n = 1.0 / (R * W2)
    mean = _per_channel_sum_ld(jnp.sum(y, axis=0, keepdims=True), C, W2) * inv_n
    d = y - mean
    var = _per_channel_sum_ld(jnp.sum(d * d, axis=0, keepdims=True), C, W2) * inv_n
    return d * (jax.lax.rsqrt(var + BN_EPS) * gamma_lane) + beta_lane


def _depthwise3x3_ld(x, taps_ref, C, valid_h, valid_w):
    """Depthwise 3x3 conv, padding=1 (cross-correlation), lane-dense layout.

    x:        (R, W2*C) f32, rows = (batch, out-row), lanes = w*C + c
    taps_ref: (9, W2*C) channel-tiled taps, row = ky*3 + kx
    valid_h:  {dy: (R, 1) f32} edge masks (hoisted, shared across calls)
    valid_w:  {dx: (1, W2*C) f32}
    The depthwise bias is omitted on purpose: it cancels exactly in the
    train-mode BatchNorm that follows."""
    R, WC = x.shape
    acc = None
    for dx in (-1, 0, 1):
        if dx == 0:
            xc = x
        else:
            xc = pltpu.roll(x, shift=(-dx * C) % WC, axis=1) * valid_w[dx]
        for dy in (-1, 0, 1):
            if dy == 0:
                v = xc
            else:
                v = pltpu.roll(xc, shift=(-dy) % R, axis=0) * valid_h[dy]
            t = (dy + 1) * 3 + (dx + 1)
            term = v * taps_ref[t:t + 1, :]
            acc = term if acc is None else acc + term
    return acc


# ------------------------------ Pallas kernel ------------------------------- #

def _make_decoder_kernel(B, H, W, Cin, Cskip, Cout, has_skip):
    """Builds the fused DecoderBlock kernel body (skip / no-skip variants)."""
    H2, W2 = 2 * H, 2 * W
    R = B * H2
    WCin, WCout, WCskip = W2 * Cin, W2 * Cout, W2 * Cskip
    bf16 = jnp.bfloat16

    def kernel(*refs):
        it = iter(refs)
        x_ref = next(it)                               # (B*H, W*Cin)  f32 low-res
        skip_ref = next(it) if has_skip else None      # (R, WCskip)   f32
        mh_ref = next(it)                              # (R, B*H)      bf16 kron(I_B, Mh)
        gwin_ref = next(it)                            # (W*Cin, WCin) bf16 kron(Mw^T, I)
        wpk_ref = next(it)                             # (., WCout)    bf16 packed weights
        taps1x_ref = next(it)                          # (9, WCin)     f32
        taps1s_ref = next(it) if has_skip else None    # (9, WCskip)   f32
        taps2_ref = next(it)                           # (9, WCout)    f32
        vec_ref = next(it)                             # (5, WCout)    f32 [bid,g1,b1,g2,b2]
        out_ref = next(it)                             # (R, WCout)    f32

        # --- edge-validity masks, computed once and shared by all depthwise ---
        hrow = jax.lax.broadcasted_iota(jnp.int32, (B, H2, 1), 1).reshape(R, 1)
        vh = {-1: (hrow != 0).astype(jnp.float32),
              +1: (hrow != H2 - 1).astype(jnp.float32)}

        def lane_masks(WC, C):
            lane = jax.lax.broadcasted_iota(jnp.int32, (1, WC), 1)
            return {-1: (lane >= C).astype(jnp.float32),
                    +1: (lane < WC - C).astype(jnp.float32)}

        vw_in = lane_masks(WCin, Cin)
        vw_out = lane_masks(WCout, Cout)

        # --- separable 2x bilinear upsample (align_corners=True) -------------
        # H pass over the whole batch (block-diagonal Mh), then W pass; all
        # matmuls bf16-in / f32-accumulate, no HIGHEST-precision emulation.
        x_h = jnp.dot(mh_ref[...], x_ref[...].astype(bf16),
                      preferred_element_type=jnp.float32)          # (R, W*Cin)
        x_h16 = x_h.astype(bf16)
        xup = jnp.dot(x_h16, gwin_ref[...],
                      preferred_element_type=jnp.float32)          # (R, WCin)

        # --- residual = identity 1x1 conv folded through the upsample --------
        r0 = W * Cin
        residual = jnp.dot(x_h16, wpk_ref[0:r0, :],
                           preferred_element_type=jnp.float32) + vec_ref[0:1, :]

        # --- conv1 = DSConv(in+skip -> out); the torch.cat is fused away by
        # --- splitting the depthwise taps / block-diag pointwise per source.
        d1x = _depthwise3x3_ld(xup, taps1x_ref, Cin, vh, vw_in)
        y1 = jnp.dot(d1x.astype(bf16), wpk_ref[r0:r0 + WCin, :],
                     preferred_element_type=jnp.float32)
        r1 = r0 + WCin
        if has_skip:
            vw_sk = vw_in if Cskip == Cin else lane_masks(WCskip, Cskip)
            d1s = _depthwise3x3_ld(skip_ref[...], taps1s_ref, Cskip, vh, vw_sk)
            y1 = y1 + jnp.dot(d1s.astype(bf16), wpk_ref[r1:r1 + WCskip, :],
                              preferred_element_type=jnp.float32)
            r1 = r1 + WCskip
        # depthwise / pointwise biases cancel in train-mode BN -> omitted.
        y1 = _bn_train_ld(y1, vec_ref[1:2, :], vec_ref[2:3, :], Cout, W2)

        # --- conv2 = DSConv(out -> out) ---------------------------------------
        d2 = _depthwise3x3_ld(y1, taps2_ref, Cout, vh, vw_out)
        y2 = jnp.dot(d2.astype(bf16), wpk_ref[r1:r1 + WCout, :],
                     preferred_element_type=jnp.float32)
        y2 = _bn_train_ld(y2, vec_ref[3:4, :], vec_ref[4:5, :], Cout, W2)

        # lane-dense (R, W2*Cout) store: last dim is a multiple of 128.
        out_ref[...] = y2 + residual

    return kernel


# --------------------------------- wrapper ---------------------------------- #

def _interp_matrix_1d(n_in, n_out):
    """Bilinear interpolation matrix (align_corners=True), shape (n_out, n_in)."""
    pos = jnp.arange(n_out, dtype=jnp.float32) * (n_in - 1) / (n_out - 1)
    lo = jnp.clip(jnp.floor(pos).astype(jnp.int32), 0, n_in - 2)
    frac = pos - lo.astype(jnp.float32)
    rows = jnp.arange(n_out)
    m = jnp.zeros((n_out, n_in), jnp.float32)
    m = m.at[rows, lo].add(1.0 - frac)
    m = m.at[rows, lo + 1].add(frac)
    return m


def decoder_block_forward(x_nchw, skip_nchw, p):
    """Pallas-backed forward. x: (B, Cin, H, W); skip: (B, Cskip, 2H, 2W) or None."""
    B, Cin, H, W = x_nchw.shape
    H2, W2 = 2 * H, 2 * W
    Cout = p["wid"].shape[1]
    has_skip = skip_nchw is not None
    Cskip = skip_nchw.shape[1] if has_skip else 0
    R = B * H2
    WCin, WCout, WCskip = W2 * Cin, W2 * Cout, W2 * Cskip
    f32, bf16 = jnp.float32, jnp.bfloat16

    def tile_lane(v, reps):                          # (r, C) -> (r, reps*C)
        return jnp.tile(v.astype(f32), (1, reps))

    # lane-dense activations: rows = (b, h), lanes = w*C + c
    x_ld = jnp.transpose(x_nchw, (0, 2, 3, 1)).reshape(B * H, W * Cin).astype(f32)

    # separable-upsample / folded-identity matrices (all tiny)
    mh = _interp_matrix_1d(H, H2)                                  # (H2, H)
    mw = _interp_matrix_1d(W, W2)                                  # (W2, W)
    mh_bd = jnp.kron(jnp.eye(B, dtype=f32), mh).astype(bf16)       # (R, B*H)
    gw_in = jnp.kron(mw.T, jnp.eye(Cin, dtype=f32)).astype(bf16)   # (W*Cin, WCin)

    # packed bf16 weight slab (all parts share W2*Cout columns):
    #   [ kron(Mw^T, Wid) ; kron(I_W2, pw1_x) ; kron(I_W2, pw1_skip)? ; kron(I_W2, pw2) ]
    eye_w2 = jnp.eye(W2, dtype=f32)
    parts = [jnp.kron(mw.T, p["wid"]), jnp.kron(eye_w2, p["pw1"][:Cin])]
    if has_skip:
        parts.append(jnp.kron(eye_w2, p["pw1"][Cin:]))
    parts.append(jnp.kron(eye_w2, p["pw2"]))
    wpk = jnp.concatenate(parts, axis=0).astype(bf16)

    # channel-tiled depthwise taps and per-channel vectors
    dw1 = p["dw1"].reshape(9, -1)                                  # (9, Cin+Cskip)
    taps1x = tile_lane(dw1[:, :Cin], W2)                           # (9, WCin)
    taps2 = tile_lane(p["dw2"].reshape(9, -1), W2)                 # (9, WCout)
    vec = jnp.concatenate([tile_lane(p["bid"], W2),
                           tile_lane(p["g1"], W2), tile_lane(p["b1"], W2),
                           tile_lane(p["g2"], W2), tile_lane(p["b2"], W2)],
                          axis=0)                                  # (5, WCout)

    args = [x_ld]
    if has_skip:
        args.append(jnp.transpose(skip_nchw, (0, 2, 3, 1))
                    .reshape(R, WCskip).astype(f32))
    args += [mh_bd, gw_in, wpk, taps1x]
    if has_skip:
        args.append(tile_lane(dw1[:, Cin:], W2))                   # (9, WCskip)
    args += [taps2, vec]

    vmem_spec = pl.BlockSpec(memory_space=pltpu.MemorySpace.VMEM)
    out_ld = pl.pallas_call(
        _make_decoder_kernel(B, H, W, Cin, Cskip, Cout, has_skip),
        out_shape=jax.ShapeDtypeStruct((R, WCout), jnp.float32),
        in_specs=[vmem_spec] * len(args),
        out_specs=vmem_spec,
        compiler_params=pltpu.CompilerParams(
            # the full working set is well under a few MiB now that the dense
            # kron(Mh, Mw) matrix is gone; keep an explicit, modest limit.
            vmem_limit_bytes=32 * 1024 * 1024),
    )(*args)
    return jnp.transpose(out_ld.reshape(B, H2, W2, Cout), (0, 3, 1, 2))  # NCHW


# ------------------------ pure-JAX reference (check) ------------------------ #

def _upsample2x_nhwc_ref(x_nhwc):
    B, H, W, C = x_nhwc.shape
    mh = _interp_matrix_1d(H, 2 * H)
    mw = _interp_matrix_1d(W, 2 * W)
    y = jnp.einsum("ph,bhwc->bpwc", mh, x_nhwc, precision=HI)
    y = jnp.einsum("qw,bpwc->bpqc", mw, y, precision=HI)
    return y


def _bn_ref(z, gamma, beta):
    mean = jnp.mean(z, axis=(0, 1, 2), keepdims=True)
    var = jnp.mean((z - mean) ** 2, axis=(0, 1, 2), keepdims=True)
    return (z - mean) * jax.lax.rsqrt(var + BN_EPS) * gamma + beta


def _dsconv_ref(z, dw, dwb, pw, pwb):
    C = z.shape[-1]
    k = dw.reshape(3, 3, 1, C)  # HWIO, depthwise
    d = jax.lax.conv_general_dilated(
        z, k, window_strides=(1, 1), padding="SAME",
        dimension_numbers=("NHWC", "HWIO", "NHWC"),
        feature_group_count=C, precision=HI) + dwb.reshape(1, 1, 1, C)
    return jnp.einsum("bhwc,cd->bhwd", d, pw, precision=HI) + pwb.reshape(1, 1, 1, -1)


def decoder_block_reference(x_nchw, skip_nchw, p):
    x_nhwc = jnp.transpose(x_nchw, (0, 2, 3, 1)).astype(jnp.float32)
    xup = _upsample2x_nhwc_ref(x_nhwc)
    residual = jnp.einsum("bhwc,cd->bhwd", xup, p["wid"], precision=HI) \
        + p["bid"].reshape(1, 1, 1, -1)
    if skip_nchw is not None:
        skip_nhwc = jnp.transpose(skip_nchw, (0, 2, 3, 1)).astype(jnp.float32)
        ft = jnp.concatenate([xup, skip_nhwc], axis=-1)
    else:
        ft = xup
    y = _dsconv_ref(ft, p["dw1"], p["dwb1"], p["pw1"], p["pwb1"])
    y = _bn_ref(y, p["g1"].reshape(1, 1, 1, -1), p["b1"].reshape(1, 1, 1, -1))
    y = _dsconv_ref(y, p["dw2"], p["dwb2"], p["pw2"], p["pwb2"])
    y = _bn_ref(y, p["g2"].reshape(1, 1, 1, -1), p["b2"].reshape(1, 1, 1, -1))
    y = y + residual
    return jnp.transpose(y, (0, 3, 1, 2))


# ------------------------------- parameters --------------------------------- #

def init_params(key, in_ch, out_ch, skip_ch):
    c1 = in_ch + skip_ch
    ks = jax.random.split(key, 16)

    def rn(k, shape, scale=0.1):
        return scale * jax.random.normal(k, shape, jnp.float32)

    return dict(
        # identity 1x1 conv (in_ch -> out_ch), with bias
        wid=rn(ks[0], (in_ch, out_ch)), bid=rn(ks[1], (1, out_ch)),
        # DSConv1: depthwise 3x3 on c1 channels + pointwise c1 -> out_ch
        dw1=rn(ks[2], (3, 3, c1)), dwb1=rn(ks[3], (1, c1)),
        pw1=rn(ks[4], (c1, out_ch)), pwb1=rn(ks[5], (1, out_ch)),
        g1=1.0 + rn(ks[6], (1, out_ch)), b1=rn(ks[7], (1, out_ch)),
        # DSConv2: depthwise 3x3 on out_ch + pointwise out_ch -> out_ch
        dw2=rn(ks[8], (3, 3, out_ch)), dwb2=rn(ks[9], (1, out_ch)),
        pw2=rn(ks[10], (out_ch, out_ch)), pwb2=rn(ks[11], (1, out_ch)),
        g2=1.0 + rn(ks[12], (1, out_ch)), b2=rn(ks[13], (1, out_ch)),
    )


if __name__ == "__main__":
    B, Cin, H, W = 2, 4, 16, 16
    Cskip, Cout = 4, 8

    key = jax.random.PRNGKey(0)
    k_x, k_s, k_p = jax.random.split(key, 3)
    x = jax.random.normal(k_x, (B, Cin, H, W), jnp.float32)
    skip = jax.random.normal(k_s, (B, Cskip, 2 * H, 2 * W), jnp.float32)
    params = init_params(k_p, Cin, Cout, Cskip)

    out = decoder_block_forward(x, skip, params)
    out = jax.block_until_ready(out)
    assert out.shape == (B, Cout, 2 * H, 2 * W), out.shape

    ref = decoder_block_reference(x, skip, params)
    max_err = float(jnp.max(jnp.abs(out - ref)))
    # bf16-in / f32-accumulate matmuls (upsample / pointwise / residual) vs the
    # f32-HIGHEST reference -> ~1e-2 level differences are expected.
    if not bool(jnp.allclose(out, ref, atol=5e-2, rtol=5e-2)):
        raise AssertionError(f"Pallas kernel mismatch vs reference, max|err|={max_err}")

    print("KERNEL_OK")
</pallas_src>

<mosaic_0001>
module attributes {stable_mosaic.version = 11 : i64} {
  func.func @kernel(%arg0: memref<32x64xf32, #tpu.memory_space<vmem>>, %arg1: memref<64x128xf32, #tpu.memory_space<vmem>>, %arg2: memref<64x32xbf16, #tpu.memory_space<vmem>>, %arg3: memref<64x128xbf16, #tpu.memory_space<vmem>>, %arg4: memref<576x256xbf16, #tpu.memory_space<vmem>>, %arg5: memref<9x128xf32, #tpu.memory_space<vmem>>, %arg6: memref<9x128xf32, #tpu.memory_space<vmem>>, %arg7: memref<9x256xf32, #tpu.memory_space<vmem>>, %arg8: memref<5x256xf32, #tpu.memory_space<vmem>>, %arg9: memref<64x256xf32, #tpu.memory_space<vmem>>) attributes {dimension_semantics = [], scalar_prefetch = 0 : i64, scratch_operands = 0 : i64, tpu.core_type = #tpu.core_type<tc>} {
    %0 = tpu.iota {dimensions = array<i32: 1>} : vector<2x32x1xi32>
    %1 = vector.shape_cast %0 : vector<2x32x1xi32> to vector<64x1xi32>
    %c0_i32 = arith.constant 0 : i32
    %2 = vector.broadcast %c0_i32 : i32 to vector<64x1xi32>
    %3 = arith.cmpi ne, %1, %2 : vector<64x1xi32>
    %4 = arith.extui %3 : vector<64x1xi1> to vector<64x1xi32>
    %5 = arith.sitofp %4 : vector<64x1xi32> to vector<64x1xf32>
    %c31_i32 = arith.constant 31 : i32
    %6 = vector.broadcast %c31_i32 : i32 to vector<64x1xi32>
    %7 = arith.cmpi ne, %1, %6 : vector<64x1xi32>
    %8 = arith.extui %7 : vector<64x1xi1> to vector<64x1xi32>
    %9 = arith.sitofp %8 : vector<64x1xi32> to vector<64x1xf32>
    %10 = tpu.iota {dimensions = array<i32: 1>} : vector<1x128xi32>
    %c4_i32 = arith.constant 4 : i32
    %11 = vector.broadcast %c4_i32 : i32 to vector<1x128xi32>
    %12 = arith.cmpi sge, %10, %11 : vector<1x128xi32>
    %13 = arith.extui %12 : vector<1x128xi1> to vector<1x128xi32>
    %14 = arith.sitofp %13 : vector<1x128xi32> to vector<1x128xf32>
    %c124_i32 = arith.constant 124 : i32
    %15 = vector.broadcast %c124_i32 : i32 to vector<1x128xi32>
    %16 = arith.cmpi slt, %10, %15 : vector<1x128xi32>
    %17 = arith.extui %16 : vector<1x128xi1> to vector<1x128xi32>
    %18 = arith.sitofp %17 : vector<1x128xi32> to vector<1x128xf32>
    %19 = tpu.iota {dimensions = array<i32: 1>} : vector<1x256xi32>
    %c8_i32 = arith.constant 8 : i32
    %20 = vector.broadcast %c8_i32 : i32 to vector<1x256xi32>
    %21 = arith.cmpi sge, %19, %20 : vector<1x256xi32>
    %22 = arith.extui %21 : vector<1x256xi1> to vector<1x256xi32>
    %23 = arith.sitofp %22 : vector<1x256xi32> to vector<1x256xf32>
    %c248_i32 = arith.constant 248 : i32
    %24 = vector.broadcast %c248_i32 : i32 to vector<1x256xi32>
    %25 = arith.cmpi slt, %19, %24 : vector<1x256xi32>
    %26 = arith.extui %25 : vector<1x256xi1> to vector<1x256xi32>
    %27 = arith.sitofp %26 : vector<1x256xi32> to vector<1x256xf32>
    %c0 = arith.constant 0 : index
    %c0_0 = arith.constant 0 : index
    %28 = vector.load %arg2[%c0, %c0_0] : memref<64x32xbf16, #tpu.memory_space<vmem>>, vector<64x32xbf16>
    %c0_1 = arith.constant 0 : index
    %c0_2 = arith.constant 0 : index
    %29 = vector.load %arg0[%c0_1, %c0_2] : memref<32x64xf32, #tpu.memory_space<vmem>>, vector<32x64xf32>
    %30 = arith.truncf %29 : vector<32x64xf32> to vector<32x64xbf16>
    %cst = arith.constant dense<0.000000e+00> : vector<64x64xf32>
    %31 = tpu.matmul %28, %30, %cst {dimension_numbers = #tpu.dot_dimension_numbers<[1], [0], [0], [1], [0, 0, 1, 1], [], []>} : vector<64x32xbf16>, vector<32x64xbf16>, vector<64x64xf32> -> vector<64x64xf32>
    %32 = arith.truncf %31 : vector<64x64xf32> to vector<64x64xbf16>
    %c0_3 = arith.constant 0 : index
    %c0_4 = arith.constant 0 : index
    %33 = vector.load %arg3[%c0_3, %c0_4] : memref<64x128xbf16, #tpu.memory_space<vmem>>, vector<64x128xbf16>
    %cst_5 = arith.constant dense<0.000000e+00> : vector<64x128xf32>
    %34 = tpu.matmul %32, %33, %cst_5 {dimension_numbers = #tpu.dot_dimension_numbers<[1], [0], [0], [1], [0, 0, 1, 1], [], []>} : vector<64x64xbf16>, vector<64x128xbf16>, vector<64x128xf32> -> vector<64x128xf32>
    %c0_6 = arith.constant 0 : index
    %c0_7 = arith.constant 0 : index
    %35 = vector.load %arg4[%c0_6, %c0_7] : memref<576x256xbf16, #tpu.memory_space<vmem>>, vector<64x256xbf16>
    %cst_8 = arith.constant dense<0.000000e+00> : vector<64x256xf32>
    %36 = tpu.matmul %32, %35, %cst_8 {dimension_numbers = #tpu.dot_dimension_numbers<[1], [0], [0], [1], [0, 0, 1, 1], [], []>} : vector<64x64xbf16>, vector<64x256xbf16>, vector<64x256xf32> -> vector<64x256xf32>
    %c0_9 = arith.constant 0 : index
    %c0_10 = arith.constant 0 : index
    %37 = vector.load %arg8[%c0_9, %c0_10] : memref<5x256xf32, #tpu.memory_space<vmem>>, vector<1x256xf32>
    %38 = vector.broadcast %37 : vector<1x256xf32> to vector<64x256xf32>
    %39 = arith.addf %36, %38 : vector<64x256xf32>
    %c4_i32_11 = arith.constant 4 : i32
    %40 = tpu.dynamic_rotate %34 by %c4_i32_11 dim 1 : vector<64x128xf32>, i32 -> vector<64x128xf32>
    %41 = vector.broadcast %14 : vector<1x128xf32> to vector<64x128xf32>
    %42 = arith.mulf %40, %41 : vector<64x128xf32>
    %c1_i32 = arith.constant 1 : i32
    %43 = tpu.dynamic_rotate %42 by %c1_i32 dim 0 : vector<64x128xf32>, i32 -> vector<64x128xf32>
    %44 = vector.broadcast %5 : vector<64x1xf32> to vector<64x128xf32>
    %45 = arith.mulf %43, %44 : vector<64x128xf32>
    %c0_12 = arith.constant 0 : index
    %c0_13 = arith.constant 0 : index
    %46 = vector.load %arg5[%c0_12, %c0_13] : memref<9x128xf32, #tpu.memory_space<vmem>>, vector<1x128xf32>
    %47 = vector.broadcast %46 : vector<1x128xf32> to vector<64x128xf32>
    %48 = arith.mulf %45, %47 : vector<64x128xf32>
    %c3 = arith.constant 3 : index
    %c0_14 = arith.constant 0 : index
    %49 = vector.load %arg5[%c3, %c0_14] : memref<9x128xf32, #tpu.memory_space<vmem>>, vector<1x128xf32>
    %50 = vector.broadcast %49 : vector<1x128xf32> to vector<64x128xf32>
    %51 = arith.mulf %42, %50 : vector<64x128xf32>
    %52 = arith.addf %48, %51 : vector<64x128xf32>
    %c63_i32 = arith.constant 63 : i32
    %53 = tpu.dynamic_rotate %42 by %c63_i32 dim 0 : vector<64x128xf32>, i32 -> vector<64x128xf32>
    %54 = vector.broadcast %9 : vector<64x1xf32> to vector<64x128xf32>
    %55 = arith.mulf %53, %54 : vector<64x128xf32>
    %c6 = arith.constant 6 : index
    %c0_15 = arith.constant 0 : index
    %56 = vector.load %arg5[%c6, %c0_15] : memref<9x128xf32, #tpu.memory_space<vmem>>, vector<1x128xf32>
    %57 = vector.broadcast %56 : vector<1x128xf32> to vector<64x128xf32>
    %58 = arith.mulf %55, %57 : vector<64x128xf32>
    %59 = arith.addf %52, %58 : vector<64x128xf32>
    %c1_i32_16 = arith.constant 1 : i32
    %60 = tpu.dynamic_rotate %34 by %c1_i32_16 dim 0 : vector<64x128xf32>, i32 -> vector<64x128xf32>
    %61 = vector.broadcast %5 : vector<64x1xf32> to vector<64x128xf32>
    %62 = arith.mulf %60, %61 : vector<64x128xf32>
    %c1 = arith.constant 1 : index
    %c0_17 = arith.constant 0 : index
    %63 = vector.load %arg5[%c1, %c0_17] : memref<9x128xf32, #tpu.memory_space<vmem>>, vector<1x128xf32>
    %64 = vector.broadcast %63 : vector<1x128xf32> to vector<64x128xf32>
    %65 = arith.mulf %62, %64 : vector<64x128xf32>
    %66 = arith.addf %59, %65 : vector<64x128xf32>
    %c4 = arith.constant 4 : index
    %c0_18 = arith.constant 0 : index
    %67 = vector.load %arg5[%c4, %c0_18] : memref<9x128xf32, #tpu.memory_space<vmem>>, vector<1x128xf32>
    %68 = vector.broadcast %67 : vector<1x128xf32> to vector<64x128xf32>
    %69 = arith.mulf %34, %68 : vector<64x128xf32>
    %70 = arith.addf %66, %69 : vector<64x128xf32>
    %c63_i32_19 = arith.constant 63 : i32
    %71 = tpu.dynamic_rotate %34 by %c63_i32_19 dim 0 : vector<64x128xf32>, i32 -> vector<64x128xf32>
    %72 = vector.broadcast %9 : vector<64x1xf32> to vector<64x128xf32>
    %73 = arith.mulf %71, %72 : vector<64x128xf32>
    %c7 = arith.constant 7 : index
    %c0_20 = arith.constant 0 : index
    %74 = vector.load %arg5[%c7, %c0_20] : memref<9x128xf32, #tpu.memory_space<vmem>>, vector<1x128xf32>
    %75 = vector.broadcast %74 : vector<1x128xf32> to vector<64x128xf32>
    %76 = arith.mulf %73, %75 : vector<64x128xf32>
    %77 = arith.addf %70, %76 : vector<64x128xf32>
    %c124_i32_21 = arith.constant 124 : i32
    %78 = tpu.dynamic_rotate %34 by %c124_i32_21 dim 1 : vector<64x128xf32>, i32 -> vector<64x128xf32>
    %79 = vector.broadcast %18 : vector<1x128xf32> to vector<64x128xf32>
    %80 = arith.mulf %78, %79 : vector<64x128xf32>
    %c1_i32_22 = arith.constant 1 : i32
    %81 = tpu.dynamic_rotate %80 by %c1_i32_22 dim 0 : vector<64x128xf32>, i32 -> vector<64x128xf32>
    %82 = vector.broadcast %5 : vector<64x1xf32> to vector<64x128xf32>
    %83 = arith.mulf %81, %82 : vector<64x128xf32>
    %c2 = arith.constant 2 : index
    %c0_23 = arith.constant 0 : index
    %84 = vector.load %arg5[%c2, %c0_23] : memref<9x128xf32, #tpu.memory_space<vmem>>, vector<1x128xf32>
    %85 = vector.broadcast %84 : vector<1x128xf32> to vector<64x128xf32>
    %86 = arith.mulf %83, %85 : vector<64x128xf32>
    %87 = arith.addf %77, %86 : vector<64x128xf32>
    %c5 = arith.constant 5 : index
    %c0_24 = arith.constant 0 : index
    %88 = vector.load %arg5[%c5, %c0_24] : memref<9x128xf32, #tpu.memory_space<vmem>>, vector<1x128xf32>
    %89 = vector.broadcast %88 : vector<1x128xf32> to vector<64x128xf32>
    %90 = arith.mulf %80, %89 : vector<64x128xf32>
    %91 = arith.addf %87, %90 : vector<64x128xf32>
    %c63_i32_25 = arith.constant 63 : i32
    %92 = tpu.dynamic_rotate %80 by %c63_i32_25 dim 0 : vector<64x128xf32>, i32 -> vector<64x128xf32>
    %93 = vector.broadcast %9 : vector<64x1xf32> to vector<64x128xf32>
    %94 = arith.mulf %92, %93 : vector<64x128xf32>
    %c8 = arith.constant 8 : index
    %c0_26 = arith.constant 0 : index
    %95 = vector.load %arg5[%c8, %c0_26] : memref<9x128xf32, #tpu.memory_space<vmem>>, vector<1x128xf32>
    %96 = vector.broadcast %95 : vector<1x128xf32> to vector<64x128xf32>
    %97 = arith.mulf %94, %96 : vector<64x128xf32>
    %98 = arith.addf %91, %97 : vector<64x128xf32>
    %99 = arith.truncf %98 : vector<64x128xf32> to vector<64x128xbf16>
    %c64 = arith.constant 64 : index
    %c0_27 = arith.constant 0 : index
    %100 = vector.load %arg4[%c64, %c0_27] : memref<576x256xbf16, #tpu.memory_space<vmem>>, vector<128x256xbf16>
    %cst_28 = arith.constant dense<0.000000e+00> : vector<64x256xf32>
    %101 = tpu.matmul %99, %100, %cst_28 {dimension_numbers = #tpu.dot_dimension_numbers<[1], [0], [0], [1], [0, 0, 1, 1], [], []>} : vector<64x128xbf16>, vector<128x256xbf16>, vector<64x256xf32> -> vector<64x256xf32>
    %c0_29 = arith.constant 0 : index
    %c0_30 = arith.constant 0 : index
    %102 = vector.load %arg1[%c0_29, %c0_30] : memref<64x128xf32, #tpu.memory_space<vmem>>, vector<64x128xf32>
    %c4_i32_31 = arith.constant 4 : i32
    %103 = tpu.dynamic_rotate %102 by %c4_i32_31 dim 1 : vector<64x128xf32>, i32 -> vector<64x128xf32>
    %104 = vector.broadcast %14 : vector<1x128xf32> to vector<64x128xf32>
    %105 = arith.mulf %103, %104 : vector<64x128xf32>
    %c1_i32_32 = arith.constant 1 : i32
    %106 = tpu.dynamic_rotate %105 by %c1_i32_32 dim 0 : vector<64x128xf32>, i32 -> vector<64x128xf32>
    %107 = vector.broadcast %5 : vector<64x1xf32> to vector<64x128xf32>
    %108 = arith.mulf %106, %107 : vector<64x128xf32>
    %c0_33 = arith.constant 0 : index
    %c0_34 = arith.constant 0 : index
    %109 = vector.load %arg6[%c0_33, %c0_34] : memref<9x128xf32, #tpu.memory_space<vmem>>, vector<1x128xf32>
    %110 = vector.broadcast %109 : vector<1x128xf32> to vector<64x128xf32>
    %111 = arith.mulf %108, %110 : vector<64x128xf32>
    %c3_35 = arith.constant 3 : index
    %c0_36 = arith.constant 0 : index
    %112 = vector.load %arg6[%c3_35, %c0_36] : memref<9x128xf32, #tpu.memory_space<vmem>>, vector<1x128xf32>
    %113 = vector.broadcast %112 : vector<1x128xf32> to vector<64x128xf32>
    %114 = arith.mulf %105, %113 : vector<64x128xf32>
    %115 = arith.addf %111, %114 : vector<64x128xf32>
    %c63_i32_37 = arith.constant 63 : i32
    %116 = tpu.dynamic_rotate %105 by %c63_i32_37 dim 0 : vector<64x128xf32>, i32 -> vector<64x128xf32>
    %117 = vector.broadcast %9 : vector<64x1xf32> to vector<64x128xf32>
    %118 = arith.mulf %116, %117 : vector<64x128xf32>
    %c6_38 = arith.constant 6 : index
    %c0_39 = arith.constant 0 : index
    %119 = vector.load %arg6[%c6_38, %c0_39] : memref<9x128xf32, #tpu.memory_space<vmem>>, vector<1x128xf32>
    %120 = vector.broadcast %119 : vector<1x128xf32> to vector<64x128xf32>
    %121 = arith.mulf %118, %120 : vector<64x128xf32>
    %122 = arith.addf %115, %121 : vector<64x128xf32>
    %c1_i32_40 = arith.constant 1 : i32
    %123 = tpu.dynamic_rotate %102 by %c1_i32_40 dim 0 : vector<64x128xf32>, i32 -> vector<64x128xf32>
    %124 = vector.broadcast %5 : vector<64x1xf32> to vector<64x128xf32>
    %125 = arith.mulf %123, %124 : vector<64x128xf32>
    %c1_41 = arith.constant 1 : index
    %c0_42 = arith.constant 0 : index
    %126 = vector.load %arg6[%c1_41, %c0_42] : memref<9x128xf32, #tpu.memory_space<vmem>>, vector<1x128xf32>
    %127 = vector.broadcast %126 : vector<1x128xf32> to vector<64x128xf32>
    %128 = arith.mulf %125, %127 : vector<64x128xf32>
    %129 = arith.addf %122, %128 : vector<64x128xf32>
    %c4_43 = arith.constant 4 : index
    %c0_44 = arith.constant 0 : index
    %130 = vector.load %arg6[%c4_43, %c0_44] : memref<9x128xf32, #tpu.memory_space<vmem>>, vector<1x128xf32>
    %131 = vector.broadcast %130 : vector<1x128xf32> to vector<64x128xf32>
    %132 = arith.mulf %102, %131 : vector<64x128xf32>
    %133 = arith.addf %129, %132 : vector<64x128xf32>
    %c63_i32_45 = arith.constant 63 : i32
    %134 = tpu.dynamic_rotate %102 by %c63_i32_45 dim 0 : vector<64x128xf32>, i32 -> vector<64x128xf32>
    %135 = vector.broadcast %9 : vector<64x1xf32> to vector<64x128xf32>
    %136 = arith.mulf %134, %135 : vector<64x128xf32>
    %c7_46 = arith.constant 7 : index
    %c0_47 = arith.constant 0 : index
    %137 = vector.load %arg6[%c7_46, %c0_47] : memref<9x128xf32, #tpu.memory_space<vmem>>, vector<1x128xf32>
    %138 = vector.broadcast %137 : vector<1x128xf32> to vector<64x128xf32>
    %139 = arith.mulf %136, %138 : vector<64x128xf32>
    %140 = arith.addf %133, %139 : vector<64x128xf32>
    %c124_i32_48 = arith.constant 124 : i32
    %141 = tpu.dynamic_rotate %102 by %c124_i32_48 dim 1 : vector<64x128xf32>, i32 -> vector<64x128xf32>
    %142 = vector.broadcast %18 : vector<1x128xf32> to vector<64x128xf32>
    %143 = arith.mulf %141, %142 : vector<64x128xf32>
    %c1_i32_49 = arith.constant 1 : i32
    %144 = tpu.dynamic_rotate %143 by %c1_i32_49 dim 0 : vector<64x128xf32>, i32 -> vector<64x128xf32>
    %145 = vector.broadcast %5 : vector<64x1xf32> to vector<64x128xf32>
    %146 = arith.mulf %144, %145 : vector<64x128xf32>
    %c2_50 = arith.constant 2 : index
    %c0_51 = arith.constant 0 : index
    %147 = vector.load %arg6[%c2_50, %c0_51] : memref<9x128xf32, #tpu.memory_space<vmem>>, vector<1x128xf32>
    %148 = vector.broadcast %147 : vector<1x128xf32> to vector<64x128xf32>
    %149 = arith.mulf %146, %148 : vector<64x128xf32>
    %150 = arith.addf %140, %149 : vector<64x128xf32>
    %c5_52 = arith.constant 5 : index
    %c0_53 = arith.constant 0 : index
    %151 = vector.load %arg6[%c5_52, %c0_53] : memref<9x128xf32, #tpu.memory_space<vmem>>, vector<1x128xf32>
    %152 = vector.broadcast %151 : vector<1x128xf32> to vector<64x128xf32>
    %153 = arith.mulf %143, %152 : vector<64x128xf32>
    %154 = arith.addf %150, %153 : vector<64x128xf32>
    %c63_i32_54 = arith.constant 63 : i32
    %155 = tpu.dynamic_rotate %143 by %c63_i32_54 dim 0 : vector<64x128xf32>, i32 -> vector<64x128xf32>
    %156 = vector.broadcast %9 : vector<64x1xf32> to vector<64x128xf32>
    %157 = arith.mulf %155, %156 : vector<64x128xf32>
    %c8_55 = arith.constant 8 : index
    %c0_56 = arith.constant 0 : index
    %158 = vector.load %arg6[%c8_55, %c0_56] : memref<9x128xf32, #tpu.memory_space<vmem>>, vector<1x128xf32>
    %159 = vector.broadcast %158 : vector<1x128xf32> to vector<64x128xf32>
    %160 = arith.mulf %157, %159 : vector<64x128xf32>
    %161 = arith.addf %154, %160 : vector<64x128xf32>
    %162 = arith.truncf %161 : vector<64x128xf32> to vector<64x128xbf16>
    %c192 = arith.constant 192 : index
    %c0_57 = arith.constant 0 : index
    %163 = vector.load %arg4[%c192, %c0_57] : memref<576x256xbf16, #tpu.memory_space<vmem>>, vector<128x256xbf16>
    %cst_58 = arith.constant dense<0.000000e+00> : vector<64x256xf32>
    %164 = tpu.matmul %162, %163, %cst_58 {dimension_numbers = #tpu.dot_dimension_numbers<[1], [0], [0], [1], [0, 0, 1, 1], [], []>} : vector<64x128xbf16>, vector<128x256xbf16>, vector<64x256xf32> -> vector<64x256xf32>
    %165 = arith.addf %101, %164 : vector<64x256xf32>
    %c1_59 = arith.constant 1 : index
    %c0_60 = arith.constant 0 : index
    %166 = vector.load %arg8[%c1_59, %c0_60] : memref<5x256xf32, #tpu.memory_space<vmem>>, vector<1x256xf32>
    %c2_61 = arith.constant 2 : index
    %c0_62 = arith.constant 0 : index
    %167 = vector.load %arg8[%c2_61, %c0_62] : memref<5x256xf32, #tpu.memory_space<vmem>>, vector<1x256xf32>
    %cst_63 = arith.constant dense<0.000000e+00> : vector<256xf32>
    %168 = vector.multi_reduction <add>, %165, %cst_63 [0] : vector<64x256xf32> to vector<256xf32>
    %169 = vector.shape_cast %168 : vector<256xf32> to vector<1x256xf32>
    %c8_i32_64 = arith.constant 8 : i32
    %170 = tpu.dynamic_rotate %169 by %c8_i32_64 dim 1 : vector<1x256xf32>, i32 -> vector<1x256xf32>
    %171 = arith.addf %169, %170 : vector<1x256xf32>
    %c16_i32 = arith.constant 16 : i32
    %172 = tpu.dynamic_rotate %171 by %c16_i32 dim 1 : vector<1x256xf32>, i32 -> vector<1x256xf32>
    %173 = arith.addf %171, %172 : vector<1x256xf32>
    %c32_i32 = arith.constant 32 : i32
    %174 = tpu.dynamic_rotate %173 by %c32_i32 dim 1 : vector<1x256xf32>, i32 -> vector<1x256xf32>
    %175 = arith.addf %173, %174 : vector<1x256xf32>
    %c64_i32 = arith.constant 64 : i32
    %176 = tpu.dynamic_rotate %175 by %c64_i32 dim 1 : vector<1x256xf32>, i32 -> vector<1x256xf32>
    %177 = arith.addf %175, %176 : vector<1x256xf32>
    %c128_i32 = arith.constant 128 : i32
    %178 = tpu.dynamic_rotate %177 by %c128_i32 dim 1 : vector<1x256xf32>, i32 -> vector<1x256xf32>
    %179 = arith.addf %177, %178 : vector<1x256xf32>
    %cst_65 = arith.constant 4.8828125E-4 : f32
    %180 = vector.broadcast %cst_65 : f32 to vector<1x256xf32>
    %181 = arith.mulf %179, %180 : vector<1x256xf32>
    %182 = vector.broadcast %181 : vector<1x256xf32> to vector<64x256xf32>
    %183 = arith.subf %165, %182 : vector<64x256xf32>
    %184 = arith.mulf %183, %183 : vector<64x256xf32>
    %cst_66 = arith.constant dense<0.000000e+00> : vector<256xf32>
    %185 = vector.multi_reduction <add>, %184, %cst_66 [0] : vector<64x256xf32> to vector<256xf32>
    %186 = vector.shape_cast %185 : vector<256xf32> to vector<1x256xf32>
    %c8_i32_67 = arith.constant 8 : i32
    %187 = tpu.dynamic_rotate %186 by %c8_i32_67 dim 1 : vector<1x256xf32>, i32 -> vector<1x256xf32>
    %188 = arith.addf %186, %187 : vector<1x256xf32>
    %c16_i32_68 = arith.constant 16 : i32
    %189 = tpu.dynamic_rotate %188 by %c16_i32_68 dim 1 : vector<1x256xf32>, i32 -> vector<1x256xf32>
    %190 = arith.addf %188, %189 : vector<1x256xf32>
    %c32_i32_69 = arith.constant 32 : i32
    %191 = tpu.dynamic_rotate %190 by %c32_i32_69 dim 1 : vector<1x256xf32>, i32 -> vector<1x256xf32>
    %192 = arith.addf %190, %191 : vector<1x256xf32>
    %c64_i32_70 = arith.constant 64 : i32
    %193 = tpu.dynamic_rotate %192 by %c64_i32_70 dim 1 : vector<1x256xf32>, i32 -> vector<1x256xf32>
    %194 = arith.addf %192, %193 : vector<1x256xf32>
    %c128_i32_71 = arith.constant 128 : i32
    %195 = tpu.dynamic_rotate %194 by %c128_i32_71 dim 1 : vector<1x256xf32>, i32 -> vector<1x256xf32>
    %196 = arith.addf %194, %195 : vector<1x256xf32>
    %cst_72 = arith.constant 4.8828125E-4 : f32
    %197 = vector.broadcast %cst_72 : f32 to vector<1x256xf32>
    %198 = arith.mulf %196, %197 : vector<1x256xf32>
    %cst_73 = arith.constant 9.99999974E-6 : f32
    %199 = vector.broadcast %cst_73 : f32 to vector<1x256xf32>
    %200 = arith.addf %198, %199 : vector<1x256xf32>
    %201 = math.rsqrt %200 : vector<1x256xf32>
    %202 = arith.mulf %201, %166 : vector<1x256xf32>
    %203 = vector.broadcast %202 : vector<1x256xf32> to vector<64x256xf32>
    %204 = arith.mulf %183, %203 : vector<64x256xf32>
    %205 = vector.broadcast %167 : vector<1x256xf32> to vector<64x256xf32>
    %206 = arith.addf %204, %205 : vector<64x256xf32>
    %c8_i32_74 = arith.constant 8 : i32
    %207 = tpu.dynamic_rotate %206 by %c8_i32_74 dim 1 : vector<64x256xf32>, i32 -> vector<64x256xf32>
    %208 = vector.broadcast %23 : vector<1x256xf32> to vector<64x256xf32>
    %209 = arith.mulf %207, %208 : vector<64x256xf32>
    %c1_i32_75 = arith.constant 1 : i32
    %210 = tpu.dynamic_rotate %209 by %c1_i32_75 dim 0 : vector<64x256xf32>, i32 -> vector<64x256xf32>
    %211 = vector.broadcast %5 : vector<64x1xf32> to vector<64x256xf32>
    %212 = arith.mulf %210, %211 : vector<64x256xf32>
    %c0_76 = arith.constant 0 : index
    %c0_77 = arith.constant 0 : index
    %213 = vector.load %arg7[%c0_76, %c0_77] : memref<9x256xf32, #tpu.memory_space<vmem>>, vector<1x256xf32>
    %214 = vector.broadcast %213 : vector<1x256xf32> to vector<64x256xf32>
    %215 = arith.mulf %212, %214 : vector<64x256xf32>
    %c3_78 = arith.constant 3 : index
    %c0_79 = arith.constant 0 : index
    %216 = vector.load %arg7[%c3_78, %c0_79] : memref<9x256xf32, #tpu.memory_space<vmem>>, vector<1x256xf32>
    %217 = vector.broadcast %216 : vector<1x256xf32> to vector<64x256xf32>
    %218 = arith.mulf %209, %217 : vector<64x256xf32>
    %219 = arith.addf %215, %218 : vector<64x256xf32>
    %c63_i32_80 = arith.constant 63 : i32
    %220 = tpu.dynamic_rotate %209 by %c63_i32_80 dim 0 : vector<64x256xf32>, i32 -> vector<64x256xf32>
    %221 = vector.broadcast %9 : vector<64x1xf32> to vector<64x256xf32>
    %222 = arith.mulf %220, %221 : vector<64x256xf32>
    %c6_81 = arith.constant 6 : index
    %c0_82 = arith.constant 0 : index
    %223 = vector.load %arg7[%c6_81, %c0_82] : memref<9x256xf32, #tpu.memory_space<vmem>>, vector<1x256xf32>
    %224 = vector.broadcast %223 : vector<1x256xf32> to vector<64x256xf32>
    %225 = arith.mulf %222, %224 : vector<64x256xf32>
    %226 = arith.addf %219, %225 : vector<64x256xf32>
    %c1_i32_83 = arith.constant 1 : i32
    %227 = tpu.dynamic_rotate %206 by %c1_i32_83 dim 0 : vector<64x256xf32>, i32 -> vector<64x256xf32>
    %228 = vector.broadcast %5 : vector<64x1xf32> to vector<64x256xf32>
    %229 = arith.mulf %227, %228 : vector<64x256xf32>
    %c1_84 = arith.constant 1 : index
    %c0_85 = arith.constant 0 : index
    %230 = vector.load %arg7[%c1_84, %c0_85] : memref<9x256xf32, #tpu.memory_space<vmem>>, vector<1x256xf32>
    %231 = vector.broadcast %230 : vector<1x256xf32> to vector<64x256xf32>
    %232 = arith.mulf %229, %231 : vector<64x256xf32>
    %233 = arith.addf %226, %232 : vector<64x256xf32>
    %c4_86 = arith.constant 4 : index
    %c0_87 = arith.constant 0 : index
    %234 = vector.load %arg7[%c4_86, %c0_87] : memref<9x256xf32, #tpu.memory_space<vmem>>, vector<1x256xf32>
    %235 = vector.broadcast %234 : vector<1x256xf32> to vector<64x256xf32>
    %236 = arith.mulf %206, %235 : vector<64x256xf32>
    %237 = arith.addf %233, %236 : vector<64x256xf32>
    %c63_i32_88 = arith.constant 63 : i32
    %238 = tpu.dynamic_rotate %206 by %c63_i32_88 dim 0 : vector<64x256xf32>, i32 -> vector<64x256xf32>
    %239 = vector.broadcast %9 : vector<64x1xf32> to vector<64x256xf32>
    %240 = arith.mulf %238, %239 : vector<64x256xf32>
    %c7_89 = arith.constant 7 : index
    %c0_90 = arith.constant 0 : index
    %241 = vector.load %arg7[%c7_89, %c0_90] : memref<9x256xf32, #tpu.memory_space<vmem>>, vector<1x256xf32>
    %242 = vector.broadcast %241 : vector<1x256xf32> to vector<64x256xf32>
    %243 = arith.mulf %240, %242 : vector<64x256xf32>
    %244 = arith.addf %237, %243 : vector<64x256xf32>
    %c248_i32_91 = arith.constant 248 : i32
    %245 = tpu.dynamic_rotate %206 by %c248_i32_91 dim 1 : vector<64x256xf32>, i32 -> vector<64x256xf32>
    %246 = vector.broadcast %27 : vector<1x256xf32> to vector<64x256xf32>
    %247 = arith.mulf %245, %246 : vector<64x256xf32>
    %c1_i32_92 = arith.constant 1 : i32
    %248 = tpu.dynamic_rotate %247 by %c1_i32_92 dim 0 : vector<64x256xf32>, i32 -> vector<64x256xf32>
    %249 = vector.broadcast %5 : vector<64x1xf32> to vector<64x256xf32>
    %250 = arith.mulf %248, %249 : vector<64x256xf32>
    %c2_93 = arith.constant 2 : index
    %c0_94 = arith.constant 0 : index
    %251 = vector.load %arg7[%c2_93, %c0_94] : memref<9x256xf32, #tpu.memory_space<vmem>>, vector<1x256xf32>
    %252 = vector.broadcast %251 : vector<1x256xf32> to vector<64x256xf32>
    %253 = arith.mulf %250, %252 : vector<64x256xf32>
    %254 = arith.addf %244, %253 : vector<64x256xf32>
    %c5_95 = arith.constant 5 : index
    %c0_96 = arith.constant 0 : index
    %255 = vector.load %arg7[%c5_95, %c0_96] : memref<9x256xf32, #tpu.memory_space<vmem>>, vector<1x256xf32>
    %256 = vector.broadcast %255 : vector<1x256xf32> to vector<64x256xf32>
    %257 = arith.mulf %247, %256 : vector<64x256xf32>
    %258 = arith.addf %254, %257 : vector<64x256xf32>
    %c63_i32_97 = arith.constant 63 : i32
    %259 = tpu.dynamic_rotate %247 by %c63_i32_97 dim 0 : vector<64x256xf32>, i32 -> vector<64x256xf32>
    %260 = vector.broadcast %9 : vector<64x1xf32> to vector<64x256xf32>
    %261 = arith.mulf %259, %260 : vector<64x256xf32>
    %c8_98 = arith.constant 8 : index
    %c0_99 = arith.constant 0 : index
    %262 = vector.load %arg7[%c8_98, %c0_99] : memref<9x256xf32, #tpu.memory_space<vmem>>, vector<1x256xf32>
    %263 = vector.broadcast %262 : vector<1x256xf32> to vector<64x256xf32>
    %264 = arith.mulf %261, %263 : vector<64x256xf32>
    %265 = arith.addf %258, %264 : vector<64x256xf32>
    %266 = arith.truncf %265 : vector<64x256xf32> to vector<64x256xbf16>
    %c320 = arith.constant 320 : index
    %c0_100 = arith.constant 0 : index
    %267 = vector.load %arg4[%c320, %c0_100] : memref<576x256xbf16, #tpu.memory_space<vmem>>, vector<256x256xbf16>
    %cst_101 = arith.constant dense<0.000000e+00> : vector<64x256xf32>
    %268 = tpu.matmul %266, %267, %cst_101 {dimension_numbers = #tpu.dot_dimension_numbers<[1], [0], [0], [1], [0, 0, 1, 1], [], []>} : vector<64x256xbf16>, vector<256x256xbf16>, vector<64x256xf32> -> vector<64x256xf32>
    %c3_102 = arith.constant 3 : index
    %c0_103 = arith.constant 0 : index
    %269 = vector.load %arg8[%c3_102, %c0_103] : memref<5x256xf32, #tpu.memory_space<vmem>>, vector<1x256xf32>
    %c4_104 = arith.constant 4 : index
    %c0_105 = arith.constant 0 : index
    %270 = vector.load %arg8[%c4_104, %c0_105] : memref<5x256xf32, #tpu.memory_space<vmem>>, vector<1x256xf32>
    %cst_106 = arith.constant dense<0.000000e+00> : vector<256xf32>
    %271 = vector.multi_reduction <add>, %268, %cst_106 [0] : vector<64x256xf32> to vector<256xf32>
    %272 = vector.shape_cast %271 : vector<256xf32> to vector<1x256xf32>
    %c8_i32_107 = arith.constant 8 : i32
    %273 = tpu.dynamic_rotate %272 by %c8_i32_107 dim 1 : vector<1x256xf32>, i32 -> vector<1x256xf32>
    %274 = arith.addf %272, %273 : vector<1x256xf32>
    %c16_i32_108 = arith.constant 16 : i32
    %275 = tpu.dynamic_rotate %274 by %c16_i32_108 dim 1 : vector<1x256xf32>, i32 -> vector<1x256xf32>
    %276 = arith.addf %274, %275 : vector<1x256xf32>
    %c32_i32_109 = arith.constant 32 : i32
    %277 = tpu.dynamic_rotate %276 by %c32_i32_109 dim 1 : vector<1x256xf32>, i32 -> vector<1x256xf32>
    %278 = arith.addf %276, %277 : vector<1x256xf32>
    %c64_i32_110 = arith.constant 64 : i32
    %279 = tpu.dynamic_rotate %278 by %c64_i32_110 dim 1 : vector<1x256xf32>, i32 -> vector<1x256xf32>
    %280 = arith.addf %278, %279 : vector<1x256xf32>
    %c128_i32_111 = arith.constant 128 : i32
    %281 = tpu.dynamic_rotate %280 by %c128_i32_111 dim 1 : vector<1x256xf32>, i32 -> vector<1x256xf32>
    %282 = arith.addf %280, %281 : vector<1x256xf32>
    %cst_112 = arith.constant 4.8828125E-4 : f32
    %283 = vector.broadcast %cst_112 : f32 to vector<1x256xf32>
    %284 = arith.mulf %282, %283 : vector<1x256xf32>
    %285 = vector.broadcast %284 : vector<1x256xf32> to vector<64x256xf32>
    %286 = arith.subf %268, %285 : vector<64x256xf32>
    %287 = arith.mulf %286, %286 : vector<64x256xf32>
    %cst_113 = arith.constant dense<0.000000e+00> : vector<256xf32>
    %288 = vector.multi_reduction <add>, %287, %cst_113 [0] : vector<64x256xf32> to vector<256xf32>
    %289 = vector.shape_cast %288 : vector<256xf32> to vector<1x256xf32>
    %c8_i32_114 = arith.constant 8 : i32
    %290 = tpu.dynamic_rotate %289 by %c8_i32_114 dim 1 : vector<1x256xf32>, i32 -> vector<1x256xf32>
    %291 = arith.addf %289, %290 : vector<1x256xf32>
    %c16_i32_115 = arith.constant 16 : i32
    %292 = tpu.dynamic_rotate %291 by %c16_i32_115 dim 1 : vector<1x256xf32>, i32 -> vector<1x256xf32>
    %293 = arith.addf %291, %292 : vector<1x256xf32>
    %c32_i32_116 = arith.constant 32 : i32
    %294 = tpu.dynamic_rotate %293 by %c32_i32_116 dim 1 : vector<1x256xf32>, i32 -> vector<1x256xf32>
    %295 = arith.addf %293, %294 : vector<1x256xf32>
    %c64_i32_117 = arith.constant 64 : i32
    %296 = tpu.dynamic_rotate %295 by %c64_i32_117 dim 1 : vector<1x256xf32>, i32 -> vector<1x256xf32>
    %297 = arith.addf %295, %296 : vector<1x256xf32>
    %c128_i32_118 = arith.constant 128 : i32
    %298 = tpu.dynamic_rotate %297 by %c128_i32_118 dim 1 : vector<1x256xf32>, i32 -> vector<1x256xf32>
    %299 = arith.addf %297, %298 : vector<1x256xf32>
    %cst_119 = arith.constant 4.8828125E-4 : f32
    %300 = vector.broadcast %cst_119 : f32 to vector<1x256xf32>
    %301 = arith.mulf %299, %300 : vector<1x256xf32>
    %cst_120 = arith.constant 9.99999974E-6 : f32
    %302 = vector.broadcast %cst_120 : f32 to vector<1x256xf32>
    %303 = arith.addf %301, %302 : vector<1x256xf32>
    %304 = math.rsqrt %303 : vector<1x256xf32>
    %305 = arith.mulf %304, %269 : vector<1x256xf32>
    %306 = vector.broadcast %305 : vector<1x256xf32> to vector<64x256xf32>
    %307 = arith.mulf %286, %306 : vector<64x256xf32>
    %308 = vector.broadcast %270 : vector<1x256xf32> to vector<64x256xf32>
    %309 = arith.addf %307, %308 : vector<64x256xf32>
    %310 = arith.addf %309, %39 : vector<64x256xf32>
    %c0_121 = arith.constant 0 : index
    %c0_122 = arith.constant 0 : index
    %311 = vector.load %arg9[%c0_121, %c0_122] : memref<64x256xf32, #tpu.memory_space<vmem>>, vector<64x256xf32>
    tpu.vector_store %arg9[%c0_121, %c0_122], %310 {strides = array<i32>} : memref<64x256xf32, #tpu.memory_space<vmem>>, vector<64x256xf32>,
    return
  }
}

</mosaic_0001>

<llo_original>
// kernel: tpu_custom_call.1
$region0: #{tpu_custom_call.1}
  #allocation0 [shape = 'u32[]', space=smem, size = 0x4, offset = 0x4, fixed_abs, tag = 'smem constant byte address 0x4 - core index']
  #allocation1 [shape = 'u32[72,128]{1,0:T(1,128)}', space=vmem, size = 0x9000, scoped, tag = 'internal scratch']
  %s0 = inlined_call_operand.vmem [shape: f32[32,64], index: 0, kind: input, shape index: {}]
  %s1 = inlined_call_operand.hbm [shape: f32[64,128], index: 1, kind: input, shape index: {}]
  %s2 = inlined_call_operand.vmem [shape: bf16[64,32], index: 2, kind: input, shape index: {}]
  %s3 = inlined_call_operand.hbm [shape: bf16[64,128], index: 3, kind: input, shape index: {}]
  %s4 = inlined_call_operand.hbm [shape: bf16[576,256], index: 4, kind: input, shape index: {}]
  %s5 = inlined_call_operand.vmem [shape: f32[9,128], index: 5, kind: input, shape index: {}]
  %s6 = inlined_call_operand.hbm [shape: f32[9,128], index: 6, kind: input, shape index: {}]
  %s7 = inlined_call_operand.hbm [shape: f32[9,256], index: 7, kind: input, shape index: {}]
  %s8 = inlined_call_operand.hbm [shape: f32[5,256], index: 8, kind: input, shape index: {}]
  %s9 = inlined_call_operand.hbm [shape: f32[64,256], index: 9, kind: output, shape index: {}]
  %s10 = sld [smem:[#allocation0]]
  $region70: #{tpu_custom_call.1} parent=0
    _
  %s12 = ssub.s32 1, %s10
  %s13 = scalar_select 0, %s12, %s10
  $region1: #{tpu_custom_call.1} parent=0
    #allocation2 [shape = 'u8[32768]{0}', space=vmem, size = 0x8000, scoped, tag = 'input window, operand 1, single buffered']
    #allocation3 [shape = 's32[1]{0}', space=sflag, size = 0x4, scoped, tag = 'scoped memory for tpu_custom_call.1']
    #allocation4 [shape = 's32[1]{0}', space=sflag, size = 0x4, scoped, tag = 'scoped memory for tpu_custom_call.1']
    #allocation5 [shape = 'u8[16384]{0}', space=vmem, size = 0x4000, scoped, tag = 'input window, operand 3, single buffered']
    #allocation6 [shape = 's32[1]{0}', space=sflag, size = 0x4, scoped, tag = 'scoped memory for tpu_custom_call.1']
    #allocation7 [shape = 'u8[294912]{0}', space=vmem, size = 0x48000, scoped, tag = 'input window, operand 4, single buffered']
    #allocation8 [shape = 'u8[8192]{0}', space=vmem, size = 0x2000, scoped, tag = 'input window, operand 6, single buffered']
    #allocation9 [shape = 's32[1]{0}', space=sflag, size = 0x4, scoped, tag = 'scoped memory for tpu_custom_call.1']
    #allocation10 [shape = 'u8[16384]{0}', space=vmem, size = 0x4000, scoped, tag = 'input window, operand 7, single buffered']
    #allocation11 [shape = 'u8[8192]{0}', space=vmem, size = 0x2000, scoped, tag = 'input window, operand 8, single buffered']
    #allocation12 [shape = 's32[1]{0}', space=sflag, size = 0x4, scoped, tag = 'scoped memory for tpu_custom_call.1']
    #allocation13 [shape = 'u8[65536]{0}', space=vmem, size = 0x10000, scoped, tag = 'output window, operand 0, single buffered']
    %14 = vsyncpa [#allocation3], 0
    %15 = vsyncpa [#allocation6], 0
    %16 = vsyncpa [#allocation9], 0
    %17 = vsyncpa [#allocation12], 0
    %18 = vsyncpa [#allocation4], 0
    // Predicated region
    $region2: #{tpu_custom_call.1} parent=1 // pred_check
      _
    $region3: #{tpu_custom_call.1} parent=1 // pred_check_branch
      %20 = sbr.rel (0) target = $region5
    $region4: #{tpu_custom_call.1} parent=1 // pred_region
      _
    $region5: #{tpu_custom_call.1} parent=1 // pred_fallthru
      _
    // Predicated region
    $region6: #{tpu_custom_call.1} parent=1 // pred_check
      _
    $region7: #{tpu_custom_call.1} parent=1 // pred_check_branch
      %22 = sbr.rel (0) target = $region9
    $region8: #{tpu_custom_call.1} parent=1 // pred_region
      %24 = vsyncadd [#allocation3], 0
      %s25 = sshll.u32 %s1, 4
      %s26 = int_to_ptr.hbm [resolvable:$true] %s25
      %s27 = sshll.u32 [#allocation2], 4
      %s28 = int_to_ptr.vmem [resolvable:$true] %s27
      %33 = dma.hbm_to_vmem [thread:$0]  %s26, 1024, %s28, [#allocation3], 128, 128, 8
    $region9: #{tpu_custom_call.1} parent=1 // pred_fallthru
      _
    // Predicated region
    $region10: #{tpu_custom_call.1} parent=1 // pred_check
      _
    $region11: #{tpu_custom_call.1} parent=1 // pred_check_branch
      %35 = sbr.rel (0) target = $region13
    $region12: #{tpu_custom_call.1} parent=1 // pred_region
      _
    $region13: #{tpu_custom_call.1} parent=1 // pred_fallthru
      _
    // Predicated region
    $region14: #{tpu_custom_call.1} parent=1 // pred_check
      _
    $region15: #{tpu_custom_call.1} parent=1 // pred_check_branch
      %37 = sbr.rel (0) target = $region17
    $region16: #{tpu_custom_call.1} parent=1 // pred_region
      %39 = vsyncadd [#allocation6], 0
      %s40 = sshll.u32 %s3, 4
      %s41 = int_to_ptr.hbm [resolvable:$true] %s40
      %s42 = sshll.u32 [#allocation5], 4
      %s43 = int_to_ptr.vmem [resolvable:$true] %s42
      %48 = dma.hbm_to_vmem [thread:$0]  %s41, 512, %s43, [#allocation6], 64, 64, 4
    $region17: #{tpu_custom_call.1} parent=1 // pred_fallthru
      _
    // Predicated region
    $region18: #{tpu_custom_call.1} parent=1 // pred_check
      _
    $region19: #{tpu_custom_call.1} parent=1 // pred_check_branch
      %50 = sbr.rel (0) target = $region21
    $region20: #{tpu_custom_call.1} parent=1 // pred_region
      %52 = vsyncadd [#allocation6], 0
      %s53 = sshll.u32 %s4, 4
      %s54 = int_to_ptr.hbm [resolvable:$true] %s53
      %s55 = sshll.u32 [#allocation7], 4
      %s56 = int_to_ptr.vmem [resolvable:$true] %s55
      %61 = dma.hbm_to_vmem [thread:$0]  %s54, 9216, %s56, [#allocation6], 128, 128, 8
    $region21: #{tpu_custom_call.1} parent=1 // pred_fallthru
      _
    // Predicated region
    $region22: #{tpu_custom_call.1} parent=1 // pred_check
      _
    $region23: #{tpu_custom_call.1} parent=1 // pred_check_branch
      %63 = sbr.rel (0) target = $region25
    $region24: #{tpu_custom_call.1} parent=1 // pred_region
      _
    $region25: #{tpu_custom_call.1} parent=1 // pred_fallthru
      _
    // Predicated region
    $region26: #{tpu_custom_call.1} parent=1 // pred_check
      _
    $region27: #{tpu_custom_call.1} parent=1 // pred_check_branch
      %65 = sbr.rel (0) target = $region29
    $region28: #{tpu_custom_call.1} parent=1 // pred_region
      %67 = vsyncadd [#allocation9], 0
      %s68 = sshll.u32 %s6, 4
      %s69 = int_to_ptr.hbm [resolvable:$true] %s68
      %s70 = sshll.u32 [#allocation8], 4
      %s71 = int_to_ptr.vmem [resolvable:$true] %s70
      %76 = dma.hbm_to_vmem [thread:$0]  %s69, 256, %s71, [#allocation9], 128, 128, 8
    $region29: #{tpu_custom_call.1} parent=1 // pred_fallthru
      _
    // Predicated region
    $region30: #{tpu_custom_call.1} parent=1 // pred_check
      _
    $region31: #{tpu_custom_call.1} parent=1 // pred_check_branch
      %78 = sbr.rel (0) target = $region33
    $region32: #{tpu_custom_call.1} parent=1 // pred_region
      %80 = vsyncadd [#allocation9], 0
      %s81 = sshll.u32 %s7, 4
      %s82 = int_to_ptr.hbm [resolvable:$true] %s81
      %s83 = sshll.u32 [#allocation10], 4
      %s84 = int_to_ptr.vmem [resolvable:$true] %s83
      %89 = dma.hbm_to_vmem [thread:$0]  %s82, 512, %s84, [#allocation9], 256, 256, 16
    $region33: #{tpu_custom_call.1} parent=1 // pred_fallthru
      _
    // Predicated region
    $region34: #{tpu_custom_call.1} parent=1 // pred_check
      _
    $region35: #{tpu_custom_call.1} parent=1 // pred_check_branch
      %91 = sbr.rel (0) target = $region37
    $region36: #{tpu_custom_call.1} parent=1 // pred_region
      %93 = vsyncadd [#allocation12], 0
      %s95 = sshll.u32 %s8, 4
      %s96 = int_to_ptr.hbm [resolvable:$true] %s95
      %s97 = sshll.u32 [#allocation11], 4
      %s98 = int_to_ptr.vmem [resolvable:$true] %s97
      %100 = dma.hbm_to_vmem [thread:$0]  %s96, 256, %s98, [#allocation12]
    $region37: #{tpu_custom_call.1} parent=1 // pred_fallthru
      _
    // Predicated region
    $region38: #{tpu_custom_call.1} parent=1 // pred_check
      _
    $region39: #{tpu_custom_call.1} parent=1 // pred_check_branch
      %102 = sbr.rel (0) target = $region41
    $region40: #{tpu_custom_call.1} parent=1 // pred_region
      %104 = dma.done [#allocation3], 1024
    $region41: #{tpu_custom_call.1} parent=1 // pred_fallthru
      _
    // Predicated region
    $region42: #{tpu_custom_call.1} parent=1 // pred_check
      _
    $region43: #{tpu_custom_call.1} parent=1 // pred_check_branch
      %106 = sbr.rel (0) target = $region45
    $region44: #{tpu_custom_call.1} parent=1 // pred_region
      %108 = dma.done [#allocation6], 512
    $region45: #{tpu_custom_call.1} parent=1 // pred_fallthru
      _
    // Predicated region
    $region46: #{tpu_custom_call.1} parent=1 // pred_check
      _
    $region47: #{tpu_custom_call.1} parent=1 // pred_check_branch
      %110 = sbr.rel (0) target = $region49
    $region48: #{tpu_custom_call.1} parent=1 // pred_region
      %112 = dma.done [#allocation6], 9216
    $region49: #{tpu_custom_call.1} parent=1 // pred_fallthru
      _
    // Predicated region
    $region50: #{tpu_custom_call.1} parent=1 // pred_check
      _
    $region51: #{tpu_custom_call.1} parent=1 // pred_check_branch
      %114 = sbr.rel (0) target = $region53
    $region52: #{tpu_custom_call.1} parent=1 // pred_region
      %116 = dma.done [#allocation9], 256
    $region53: #{tpu_custom_call.1} parent=1 // pred_fallthru
      _
    // Predicated region
    $region54: #{tpu_custom_call.1} parent=1 // pred_check
      _
    $region55: #{tpu_custom_call.1} parent=1 // pred_check_branch
      %118 = sbr.rel (0) target = $region57
    $region56: #{tpu_custom_call.1} parent=1 // pred_region
      %120 = dma.done [#allocation9], 512
    $region57: #{tpu_custom_call.1} parent=1 // pred_fallthru
      _
    // Predicated region
    $region58: #{tpu_custom_call.1} parent=1 // pred_check
      _
    $region59: #{tpu_custom_call.1} parent=1 // pred_check_branch
      %122 = sbr.rel (0) target = $region61
    $region60: #{tpu_custom_call.1} parent=1 // pred_region
      %124 = dma.done [#allocation12], 256
    $region61: #{tpu_custom_call.1} parent=1 // pred_fallthru
      _
    %v126 = vlaneseq
    %v127 = vshrl.u32 %v126, 7
    %v128 = vadd.s32 %v127, 8
    %v129 = vadd.s32 %v127, 16
    %v130 = vadd.s32 %v127, 24
    %vm131 = vcmp.ne.s32.totalorder %v127, 0
    %vm132 = vcmp.ne.s32.totalorder %v128, 0
    %vm133 = vcmp.ne.s32.totalorder %v129, 0
    %vm134 = vcmp.ne.s32.totalorder %v130, 0
    %v135 = vsel %vm131, 1, 0
    %v136 = vsel %vm132, 1, 0
    %v137 = vsel %vm133, 1, 0
    %v138 = vsel %vm134, 1, 0
    %v139 = vcvt.s32.f32 %v135
    %v140 = vcvt.s32.f32 %v136
    %v141 = vcvt.s32.f32 %v137
    %v142 = vcvt.s32.f32 %v138
    %vm143 = vcmp.ne.s32.totalorder %v127, 31
    %vm144 = vcmp.ne.s32.totalorder %v128, 31
    %vm145 = vcmp.ne.s32.totalorder %v129, 31
    %vm146 = vcmp.ne.s32.totalorder %v130, 31
    %v147 = vsel %vm143, 1, 0
    %v148 = vsel %vm144, 1, 0
    %v149 = vsel %vm145, 1, 0
    %v150 = vsel %vm146, 1, 0
    %v151 = vcvt.s32.f32 %v147
    %v152 = vcvt.s32.f32 %v148
    %v153 = vcvt.s32.f32 %v149
    %v154 = vcvt.s32.f32 %v150
    %v155 = vlaneseq
    %v156 = vand.u32 %v155, 127
    %vm157 = vcmp.ge.s32.totalorder %v156, 4
    %v158 = vsel %vm157, 1, 0
    %v159 = vcvt.s32.f32 %v158
    %vm160 = vcmp.lt.s32.totalorder %v156, 124
    %v161 = vsel %vm160, 1, 0
    %v162 = vcvt.s32.f32 %v161
    %v163 = vadd.s32 %v156, 128
    %vm164 = vcmp.ge.s32.totalorder %v156, 8
    %vm165 = vcmp.ge.s32.totalorder %v163, 8
    %v166 = vsel %vm164, 1, 0
    %v167 = vsel %vm165, 1, 0
    %v168 = vcvt.s32.f32 %v166
    %v169 = vcvt.s32.f32 %v167
    %vm170 = vcmp.lt.s32.totalorder %v156, 248
    %vm171 = vcmp.lt.s32.totalorder %v163, 248
    %v172 = vsel %vm170, 1, 0
    %v173 = vsel %vm171, 1, 0
    %v174 = vcvt.s32.f32 %v172
    %v175 = vcvt.s32.f32 %v173
    %v176 = vld [vmem:[%s2] sm:$0xf]
    %v177 = vld [vmem:[%s2 + $0x4] sm:$0xf]
    %v178 = vld [vmem:[%s2 + $0x8] sm:$0xf]
    %v179 = vld [vmem:[%s2 + $0xc] sm:$0xf]
    %v180 = vld [vmem:[%s2 + $0x10] sm:$0xf]
    %v181 = vld [vmem:[%s2 + $0x14] sm:$0xf]
    %v182 = vld [vmem:[%s2 + $0x18] sm:$0xf]
    %v183 = vld [vmem:[%s2 + $0x1c] sm:$0xf]
    %v184 = vld [vmem:[%s0] sm:$0xff]
    %v185 = vld [vmem:[%s0 + $0x8] sm:$0xff]
    %v186 = vld [vmem:[%s0 + $0x10] sm:$0xff]
    %v187 = vld [vmem:[%s0 + $0x18] sm:$0xff]
    %v188 = vpack.c.bf16 %v185, %v184
    %v189 = vpack.c.bf16 %v187, %v186
    %v198 = vunpack.c.l.b16 %v176
    %v199 = vunpack.c.l.b16 %v177
    %v200 = vunpack.c.l.b16 %v178
    %v201 = vunpack.c.l.b16 %v179
    %v202 = vunpack.c.l.b16 %v180
    %v203 = vunpack.c.l.b16 %v181
    %v204 = vunpack.c.l.b16 %v182
    %v205 = vunpack.c.l.b16 %v183
    %v206 = vpack.c.b16 %v199, %v198
    %v207 = vpack.c.b16 %v201, %v200
    %v208 = vpack.c.b16 %v203, %v202
    %v209 = vpack.c.b16 %v205, %v204
    %vm210 = vcmask 261120
    %v212 = vsel %vm210, %v206, 0
    %v215 = vsel %vm210, %v207, 0
    %v218 = vsel %vm210, %v208, 0
    %v221 = vsel %vm210, %v209, 0
    %223 = vmatpush.bf16.msra.mxu0 0
    %224 = vmatpush.bf16.msra.mxu0 0
    %225 = vmatpush.bf16.msra.mxu0 0
    %226 = vmatpush.bf16.msra.mxu0 0
    %227 = vmatpush.bf16.msra.mxu0 0
    %228 = vmatpush.bf16.msra.mxu0 0
    %229 = vmatpush.bf16.msra.mxu0 %v189
    %230 = vmatpush.bf16.msra.mxu0 %v188
    %231 = vmatmul.bf16.gmra.mxu0 %v212
    %v232 = vpop.f32.mrf.mxu0
    %v233 = vadd.f32 0.0, %v232
    %v234 = vpop.f32.mrf.mxu0
    %v235 = vadd.f32 0.0, %v234
    %236 = vmatmul.bf16.gmra.mxu0 %v215
    %v237 = vpop.f32.mrf.mxu0
    %v238 = vadd.f32 0.0, %v237
    %v239 = vpop.f32.mrf.mxu0
    %v240 = vadd.f32 0.0, %v239
    %241 = vmatmul.bf16.gmra.mxu0 %v218
    %v242 = vpop.f32.mrf.mxu0
    %v243 = vadd.f32 0.0, %v242
    %v244 = vpop.f32.mrf.mxu0
    %v245 = vadd.f32 0.0, %v244
    %246 = vmatmul.bf16.gmra.mxu0 %v221
    %v247 = vpop.f32.mrf.mxu0
    %v248 = vadd.f32 0.0, %v247
    %v249 = vpop.f32.mrf.mxu0
    %v250 = vadd.f32 0.0, %v249
    %251 = vdwg.mxu0
    %v252 = vpack.c.bf16 %v235, %v233
    %v253 = vpack.c.bf16 %v240, %v238
    %v254 = vpack.c.bf16 %v245, %v243
    %v255 = vpack.c.bf16 %v250, %v248
    %v256 = vld [vmem:[#allocation5] sm:$0xf]
    %v257 = vld [vmem:[#allocation5 + $0x4] sm:$0xf]
    %v258 = vld [vmem:[#allocation5 + $0x8] sm:$0xf]
    %v259 = vld [vmem:[#allocation5 + $0xc] sm:$0xf]
    %v260 = vld [vmem:[#allocation5 + $0x10] sm:$0xf]
    %v261 = vld [vmem:[#allocation5 + $0x14] sm:$0xf]
    %v262 = vld [vmem:[#allocation5 + $0x18] sm:$0xf]
    %v263 = vld [vmem:[#allocation5 + $0x1c] sm:$0xf]
    %v272 = vunpack.c.l.b16 %v256
    %v273 = vunpack.c.l.b16 %v257
    %v274 = vunpack.c.l.b16 %v258
    %v275 = vunpack.c.l.b16 %v259
    %v276 = vunpack.c.l.b16 %v260
    %v277 = vunpack.c.l.b16 %v261
    %v278 = vunpack.c.l.b16 %v262
    %v279 = vunpack.c.l.b16 %v263
    %v280 = vpack.c.b16 %v273, %v272
    %v281 = vpack.c.b16 %v275, %v274
    %v282 = vpack.c.b16 %v277, %v276
    %v283 = vpack.c.b16 %v279, %v278
    %vm288 = vcmask 523264
    %v290 = vsel %vm288, %v252, 0
    %v293 = vsel %vm288, %v253, 0
    %v296 = vsel %vm288, %v254, 0
    %v299 = vsel %vm288, %v255, 0
    %301 = vmatpush.bf16.msra.mxu0 0
    %302 = vmatpush.bf16.msra.mxu0 0
    %303 = vmatpush.bf16.msra.mxu0 0
    %304 = vmatpush.bf16.msra.mxu0 0
    %305 = vmatpush.bf16.msra.mxu0 %v283
    %306 = vmatpush.bf16.msra.mxu0 %v282
    %307 = vmatpush.bf16.msra.mxu0 %v281
    %308 = vmatpush.bf16.msra.mxu0 %v280
    %309 = vmatmul.bf16.gmra.mxu0 %v290
    %v310 = vpop.f32.mrf.mxu0
    %v311 = vadd.f32 0.0, %v310
    %v312 = vpop.f32.mrf.mxu0
    %v313 = vadd.f32 0.0, %v312
    %314 = vmatmul.bf16.gmra.mxu0 %v293
    %v315 = vpop.f32.mrf.mxu0
    %v316 = vadd.f32 0.0, %v315
    %v317 = vpop.f32.mrf.mxu0
    %v318 = vadd.f32 0.0, %v317
    %319 = vmatmul.bf16.gmra.mxu0 %v296
    %v320 = vpop.f32.mrf.mxu0
    %v321 = vadd.f32 0.0, %v320
    %v322 = vpop.f32.mrf.mxu0
    %v323 = vadd.f32 0.0, %v322
    %324 = vmatmul.bf16.gmra.mxu0 %v299
    %v325 = vpop.f32.mrf.mxu0
    %v326 = vadd.f32 0.0, %v325
    %v327 = vpop.f32.mrf.mxu0
    %v328 = vadd.f32 0.0, %v327
    %329 = vdwg.mxu0
    %v330 = vld [vmem:[#allocation7] sm:$0xff]
    %v331 = vld [vmem:[#allocation7 + $0x8] sm:$0xff]
    %v332 = vld [vmem:[#allocation7 + $0x10] sm:$0xff]
    %v333 = vld [vmem:[#allocation7 + $0x18] sm:$0xff]
    %v334 = vld [vmem:[#allocation7 + $0x20] sm:$0xff]
    %v335 = vld [vmem:[#allocation7 + $0x28] sm:$0xff]
    %v336 = vld [vmem:[#allocation7 + $0x30] sm:$0xff]
    %v337 = vld [vmem:[#allocation7 + $0x38] sm:$0xff]
    %v338 = vld [vmem:[#allocation11] ss:$8 sm:$0x3]
    %v340 = vperm.slane %v338, 0
    %v341 = vperm.slane %v338, 1
    %v352 = vunpack.c.l.b16 %v330
    %v353 = vunpack.c.h.b16 %v330
    %v354 = vunpack.c.l.b16 %v331
    %v355 = vunpack.c.h.b16 %v331
    %v356 = vunpack.c.l.b16 %v332
    %v357 = vunpack.c.h.b16 %v332
    %v358 = vunpack.c.l.b16 %v333
    %v359 = vunpack.c.h.b16 %v333
    %v360 = vunpack.c.l.b16 %v334
    %v361 = vunpack.c.h.b16 %v334
    %v362 = vunpack.c.l.b16 %v335
    %v363 = vunpack.c.h.b16 %v335
    %v364 = vunpack.c.l.b16 %v336
    %v365 = vunpack.c.h.b16 %v336
    %v366 = vunpack.c.l.b16 %v337
    %v367 = vunpack.c.h.b16 %v337
    %v368 = vpack.c.b16 %v354, %v352
    %v369 = vpack.c.b16 %v355, %v353
    %v370 = vpack.c.b16 %v358, %v356
    %v371 = vpack.c.b16 %v359, %v357
    %v372 = vpack.c.b16 %v362, %v360
    %v373 = vpack.c.b16 %v363, %v361
    %v374 = vpack.c.b16 %v366, %v364
    %v375 = vpack.c.b16 %v367, %v365
    %384 = vmatpush.bf16.msra.mxu0 0
    %385 = vmatpush.bf16.msra.mxu0 0
    %386 = vmatpush.bf16.msra.mxu0 0
    %387 = vmatpush.bf16.msra.mxu0 0
    %388 = vmatpush.bf16.msra.mxu0 %v374
    %389 = vmatpush.bf16.msra.mxu0 %v372
    %390 = vmatpush.bf16.msra.mxu0 %v370
    %391 = vmatpush.bf16.msra.mxu0 %v368
    %392 = vmatmul.bf16.gmra.mxu0 %v290
    %v393 = vpop.f32.mrf.mxu0
    %v394 = vadd.f32 %v340, %v393
    %v395 = vpop.f32.mrf.mxu0
    %v396 = vadd.f32 %v340, %v395
    %397 = vmatmul.bf16.gmra.mxu0 %v293
    %v398 = vpop.f32.mrf.mxu0
    %v399 = vadd.f32 %v340, %v398
    %v400 = vpop.f32.mrf.mxu0
    %v401 = vadd.f32 %v340, %v400
    %402 = vmatmul.bf16.gmra.mxu0 %v296
    %v403 = vpop.f32.mrf.mxu0
    %v404 = vadd.f32 %v340, %v403
    %v405 = vpop.f32.mrf.mxu0
    %v406 = vadd.f32 %v340, %v405
    %407 = vmatmul.bf16.gmra.mxu0 %v299
    %v408 = vpop.f32.mrf.mxu0
    %v409 = vadd.f32 %v340, %v408
    %v410 = vpop.f32.mrf.mxu0
    %v411 = vadd.f32 %v340, %v410
    %412 = vdwg.mxu0
    %413 = vmatpush.bf16.msra.mxu0 0
    %414 = vmatpush.bf16.msra.mxu0 0
    %415 = vmatpush.bf16.msra.mxu0 0
    %416 = vmatpush.bf16.msra.mxu0 0
    %417 = vmatpush.bf16.msra.mxu0 %v375
    %418 = vmatpush.bf16.msra.mxu0 %v373
    %419 = vmatpush.bf16.msra.mxu0 %v371
    %420 = vmatpush.bf16.msra.mxu0 %v369
    %421 = vmatmul.bf16.gmra.mxu0 %v290
    %v422 = vpop.f32.mrf.mxu0
    %v423 = vadd.f32 %v341, %v422
    %v424 = vpop.f32.mrf.mxu0
    %v425 = vadd.f32 %v341, %v424
    %426 = vmatmul.bf16.gmra.mxu0 %v293
    %v427 = vpop.f32.mrf.mxu0
    %v428 = vadd.f32 %v341, %v427
    %v429 = vpop.f32.mrf.mxu0
    %v430 = vadd.f32 %v341, %v429
    %431 = vmatmul.bf16.gmra.mxu0 %v296
    %v432 = vpop.f32.mrf.mxu0
    %v433 = vadd.f32 %v341, %v432
    %v434 = vpop.f32.mrf.mxu0
    %v435 = vadd.f32 %v341, %v434
    %436 = vmatmul.bf16.gmra.mxu0 %v299
    %v437 = vpop.f32.mrf.mxu0
    %v438 = vadd.f32 %v341, %v437
    %v439 = vpop.f32.mrf.mxu0
    %v440 = vadd.f32 %v341, %v439
    %441 = vdwg.mxu0
    %442 = vrot.lane.b32.xlu0 %v311, 4
    %v443 = vpop.permute.xlu0 %442
    %444 = vrot.lane.b32.xlu0 %v313, 4
    %v445 = vpop.permute.xlu0 %444
    %446 = vrot.lane.b32.xlu0 %v316, 4
    %v447 = vpop.permute.xlu0 %446
    %448 = vrot.lane.b32.xlu0 %v318, 4
    %v449 = vpop.permute.xlu0 %448
    %450 = vrot.lane.b32.xlu0 %v321, 4
    %v451 = vpop.permute.xlu0 %450
    %452 = vrot.lane.b32.xlu0 %v323, 4
    %v453 = vpop.permute.xlu0 %452
    %454 = vrot.lane.b32.xlu0 %v326, 4
    %v455 = vpop.permute.xlu0 %454
    %456 = vrot.lane.b32.xlu0 %v328, 4
    %v457 = vpop.permute.xlu0 %456
    %v458 = vmul.f32 %v443, %v159
    %v459 = vmul.f32 %v445, %v159
    %v460 = vmul.f32 %v447, %v159
    %v461 = vmul.f32 %v449, %v159
    %v462 = vmul.f32 %v451, %v159
    %v463 = vmul.f32 %v453, %v159
    %v464 = vmul.f32 %v455, %v159
    %v465 = vmul.f32 %v457, %v159
    %v466 = vrot.slane %v458, 7
    %v467 = vrot.slane %v459, 7
    %v468 = vrot.slane %v460, 7
    %v469 = vrot.slane %v461, 7
    %v470 = vrot.slane %v462, 7
    %v471 = vrot.slane %v463, 7
    %v472 = vrot.slane %v464, 7
    %v473 = vrot.slane %v465, 7
    %vm474 = vcmp.lt.s32.totalorder %v127, 1
    %v475 = vsel %vm474, %v472, %v473
    %v476 = vsel %vm474, %v471, %v472
    %v477 = vsel %vm474, %v470, %v471
    %v478 = vsel %vm474, %v469, %v470
    %v479 = vsel %vm474, %v468, %v469
    %v480 = vsel %vm474, %v467, %v468
    %v481 = vsel %vm474, %v466, %v467
    %v482 = vsel %vm474, %v473, %v466
    %v483 = vmul.f32 %v482, %v139
    %v484 = vmul.f32 %v481, %v140
    %v485 = vmul.f32 %v480, %v141
    %v486 = vmul.f32 %v479, %v142
    %v487 = vmul.f32 %v478, %v139
    %v488 = vmul.f32 %v477, %v140
    %v489 = vmul.f32 %v476, %v141
    %v490 = vmul.f32 %v475, %v142
    %v491 = vld [vmem:[%s5] sm:$0x1]
    %v492 = vperm.slane %v491, 0
    %v493 = vmul.f32 %v483, %v492
    %v494 = vmul.f32 %v484, %v492
    %v495 = vmul.f32 %v485, %v492
    %v496 = vmul.f32 %v486, %v492
    %v497 = vmul.f32 %v487, %v492
    %v498 = vmul.f32 %v488, %v492
    %v499 = vmul.f32 %v489, %v492
    %v500 = vmul.f32 %v490, %v492
    %v501 = vld [vmem:[%s5 + $0x3] sm:$0x1]
    %v502 = vperm.slane %v501, 0
    %v503 = vmul.f32 %v458, %v502
    %v504 = vmul.f32 %v459, %v502
    %v505 = vmul.f32 %v460, %v502
    %v506 = vmul.f32 %v461, %v502
    %v507 = vmul.f32 %v462, %v502
    %v508 = vmul.f32 %v463, %v502
    %v509 = vmul.f32 %v464, %v502
    %v510 = vmul.f32 %v465, %v502
    %v511 = vadd.f32 %v493, %v503
    %v512 = vadd.f32 %v494, %v504
    %v513 = vadd.f32 %v495, %v505
    %v514 = vadd.f32 %v496, %v506
    %v515 = vadd.f32 %v497, %v507
    %v516 = vadd.f32 %v498, %v508
    %v517 = vadd.f32 %v499, %v509
    %v518 = vadd.f32 %v500, %v510
    %v519 = vrot.slane %v458, 1
    %v520 = vrot.slane %v459, 1
    %v521 = vrot.slane %v460, 1
    %v522 = vrot.slane %v461, 1
    %v523 = vrot.slane %v462, 1
    %v524 = vrot.slane %v463, 1
    %v525 = vrot.slane %v464, 1
    %v526 = vrot.slane %v465, 1
    %vm527 = vcmp.lt.s32.totalorder %v127, 7
    %v528 = vsel %vm527, %v525, %v526
    %v529 = vsel %vm527, %v524, %v525
    %v530 = vsel %vm527, %v523, %v524
    %v531 = vsel %vm527, %v522, %v523
    %v532 = vsel %vm527, %v521, %v522
    %v533 = vsel %vm527, %v520, %v521
    %v534 = vsel %vm527, %v519, %v520
    %v535 = vsel %vm527, %v526, %v519
    %v536 = vmul.f32 %v534, %v151
    %v537 = vmul.f32 %v533, %v152
    %v538 = vmul.f32 %v532, %v153
    %v539 = vmul.f32 %v531, %v154
    %v540 = vmul.f32 %v530, %v151
    %v541 = vmul.f32 %v529, %v152
    %v542 = vmul.f32 %v528, %v153
    %v543 = vmul.f32 %v535, %v154
    %v544 = vld [vmem:[%s5 + $0x6] sm:$0x1]
    %v545 = vperm.slane %v544, 0
    %v546 = vmul.f32 %v536, %v545
    %v547 = vmul.f32 %v537, %v545
    %v548 = vmul.f32 %v538, %v545
    %v549 = vmul.f32 %v539, %v545
    %v550 = vmul.f32 %v540, %v545
    %v551 = vmul.f32 %v541, %v545
    %v552 = vmul.f32 %v542, %v545
    %v553 = vmul.f32 %v543, %v545
    %v554 = vadd.f32 %v511, %v546
    %v555 = vadd.f32 %v512, %v547
    %v556 = vadd.f32 %v513, %v548
    %v557 = vadd.f32 %v514, %v549
    %v558 = vadd.f32 %v515, %v550
    %v559 = vadd.f32 %v516, %v551
    %v560 = vadd.f32 %v517, %v552
    %v561 = vadd.f32 %v518, %v553
    %v562 = vrot.slane %v311, 7
    %v563 = vrot.slane %v313, 7
    %v564 = vrot.slane %v316, 7
    %v565 = vrot.slane %v318, 7
    %v566 = vrot.slane %v321, 7
    %v567 = vrot.slane %v323, 7
    %v568 = vrot.slane %v326, 7
    %v569 = vrot.slane %v328, 7
    %v570 = vsel %vm474, %v568, %v569
    %v571 = vsel %vm474, %v567, %v568
    %v572 = vsel %vm474, %v566, %v567
    %v573 = vsel %vm474, %v565, %v566
    %v574 = vsel %vm474, %v564, %v565
    %v575 = vsel %vm474, %v563, %v564
    %v576 = vsel %vm474, %v562, %v563
    %v577 = vsel %vm474, %v569, %v562
    %v578 = vmul.f32 %v577, %v139
    %v579 = vmul.f32 %v576, %v140
    %v580 = vmul.f32 %v575, %v141
    %v581 = vmul.f32 %v574, %v142
    %v582 = vmul.f32 %v573, %v139
    %v583 = vmul.f32 %v572, %v140
    %v584 = vmul.f32 %v571, %v141
    %v585 = vmul.f32 %v570, %v142
    %v586 = vld [vmem:[%s5 + $0x1] sm:$0x1]
    %v587 = vperm.slane %v586, 0
    %v588 = vmul.f32 %v578, %v587
    %v589 = vmul.f32 %v579, %v587
    %v590 = vmul.f32 %v580, %v587
    %v591 = vmul.f32 %v581, %v587
    %v592 = vmul.f32 %v582, %v587
    %v593 = vmul.f32 %v583, %v587
    %v594 = vmul.f32 %v584, %v587
    %v595 = vmul.f32 %v585, %v587
    %v596 = vadd.f32 %v554, %v588
    %v597 = vadd.f32 %v555, %v589
    %v598 = vadd.f32 %v556, %v590
    %v599 = vadd.f32 %v557, %v591
    %v600 = vadd.f32 %v558, %v592
    %v601 = vadd.f32 %v559, %v593
    %v602 = vadd.f32 %v560, %v594
    %v603 = vadd.f32 %v561, %v595
    %v604 = vld [vmem:[%s5 + $0x4] sm:$0x1]
    %v605 = vperm.slane %v604, 0
    %v606 = vmul.f32 %v311, %v605
    %v607 = vmul.f32 %v313, %v605
    %v608 = vmul.f32 %v316, %v605
    %v609 = vmul.f32 %v318, %v605
    %v610 = vmul.f32 %v321, %v605
    %v611 = vmul.f32 %v323, %v605
    %v612 = vmul.f32 %v326, %v605
    %v613 = vmul.f32 %v328, %v605
    %v614 = vadd.f32 %v596, %v606
    %v615 = vadd.f32 %v597, %v607
    %v616 = vadd.f32 %v598, %v608
    %v617 = vadd.f32 %v599, %v609
    %v618 = vadd.f32 %v600, %v610
    %v619 = vadd.f32 %v601, %v611
    %v620 = vadd.f32 %v602, %v612
    %v621 = vadd.f32 %v603, %v613
    %v622 = vrot.slane %v311, 1
    %v623 = vrot.slane %v313, 1
    %v624 = vrot.slane %v316, 1
    %v625 = vrot.slane %v318, 1
    %v626 = vrot.slane %v321, 1
    %v627 = vrot.slane %v323, 1
    %v628 = vrot.slane %v326, 1
    %v629 = vrot.slane %v328, 1
    %v630 = vsel %vm527, %v628, %v629
    %v631 = vsel %vm527, %v627, %v628
    %v632 = vsel %vm527, %v626, %v627
    %v633 = vsel %vm527, %v625, %v626
    %v634 = vsel %vm527, %v624, %v625
    %v635 = vsel %vm527, %v623, %v624
    %v636 = vsel %vm527, %v622, %v623
    %v637 = vsel %vm527, %v629, %v622
    %v638 = vmul.f32 %v636, %v151
    %v639 = vmul.f32 %v635, %v152
    %v640 = vmul.f32 %v634, %v153
    %v641 = vmul.f32 %v633, %v154
    %v642 = vmul.f32 %v632, %v151
    %v643 = vmul.f32 %v631, %v152
    %v644 = vmul.f32 %v630, %v153
    %v645 = vmul.f32 %v637, %v154
    %v646 = vld [vmem:[%s5 + $0x7] sm:$0x1]
    %v647 = vperm.slane %v646, 0
    %v648 = vmul.f32 %v638, %v647
    %v649 = vmul.f32 %v639, %v647
    %v650 = vmul.f32 %v640, %v647
    %v651 = vmul.f32 %v641, %v647
    %v652 = vmul.f32 %v642, %v647
    %v653 = vmul.f32 %v643, %v647
    %v654 = vmul.f32 %v644, %v647
    %v655 = vmul.f32 %v645, %v647
    %v656 = vadd.f32 %v614, %v648
    %v657 = vadd.f32 %v615, %v649
    %v658 = vadd.f32 %v616, %v650
    %v659 = vadd.f32 %v617, %v651
    %v660 = vadd.f32 %v618, %v652
    %v661 = vadd.f32 %v619, %v653
    %v662 = vadd.f32 %v620, %v654
    %v663 = vadd.f32 %v621, %v655
    %664 = vrot.lane.b32.xlu0 %v311, 124
    %v665 = vpop.permute.xlu0 %664
    %666 = vrot.lane.b32.xlu0 %v313, 124
    %v667 = vpop.permute.xlu0 %666
    %668 = vrot.lane.b32.xlu0 %v316, 124
    %v669 = vpop.permute.xlu0 %668
    %670 = vrot.lane.b32.xlu0 %v318, 124
    %v671 = vpop.permute.xlu0 %670
    %672 = vrot.lane.b32.xlu0 %v321, 124
    %v673 = vpop.permute.xlu0 %672
    %674 = vrot.lane.b32.xlu0 %v323, 124
    %v675 = vpop.permute.xlu0 %674
    %676 = vrot.lane.b32.xlu0 %v326, 124
    %v677 = vpop.permute.xlu0 %676
    %678 = vrot.lane.b32.xlu0 %v328, 124
    %v679 = vpop.permute.xlu0 %678
    %v680 = vmul.f32 %v665, %v162
    %v681 = vmul.f32 %v667, %v162
    %v682 = vmul.f32 %v669, %v162
    %v683 = vmul.f32 %v671, %v162
    %v684 = vmul.f32 %v673, %v162
    %v685 = vmul.f32 %v675, %v162
    %v686 = vmul.f32 %v677, %v162
    %v687 = vmul.f32 %v679, %v162
    %v688 = vrot.slane %v680, 7
    %v689 = vrot.slane %v681, 7
    %v690 = vrot.slane %v682, 7
    %v691 = vrot.slane %v683, 7
    %v692 = vrot.slane %v684, 7
    %v693 = vrot.slane %v685, 7
    %v694 = vrot.slane %v686, 7
    %v695 = vrot.slane %v687, 7
    %v696 = vsel %vm474, %v694, %v695
    %v697 = vsel %vm474, %v693, %v694
    %v698 = vsel %vm474, %v692, %v693
    %v699 = vsel %vm474, %v691, %v692
    %v700 = vsel %vm474, %v690, %v691
    %v701 = vsel %vm474, %v689, %v690
    %v702 = vsel %vm474, %v688, %v689
    %v703 = vsel %vm474, %v695, %v688
    %v704 = vmul.f32 %v703, %v139
    %v705 = vmul.f32 %v702, %v140
    %v706 = vmul.f32 %v701, %v141
    %v707 = vmul.f32 %v700, %v142
    %v708 = vmul.f32 %v699, %v139
    %v709 = vmul.f32 %v698, %v140
    %v710 = vmul.f32 %v697, %v141
    %v711 = vmul.f32 %v696, %v142
    %v712 = vld [vmem:[%s5 + $0x2] sm:$0x1]
    %v713 = vperm.slane %v712, 0
    %v714 = vmul.f32 %v704, %v713
    %v715 = vmul.f32 %v705, %v713
    %v716 = vmul.f32 %v706, %v713
    %v717 = vmul.f32 %v707, %v713
    %v718 = vmul.f32 %v708, %v713
    %v719 = vmul.f32 %v709, %v713
    %v720 = vmul.f32 %v710, %v713
    %v721 = vmul.f32 %v711, %v713
    %v722 = vadd.f32 %v656, %v714
    %v723 = vadd.f32 %v657, %v715
    %v724 = vadd.f32 %v658, %v716
    %v725 = vadd.f32 %v659, %v717
    %v726 = vadd.f32 %v660, %v718
    %v727 = vadd.f32 %v661, %v719
    %v728 = vadd.f32 %v662, %v720
    %v729 = vadd.f32 %v663, %v721
    %v730 = vld [vmem:[%s5 + $0x5] sm:$0x1]
    %v731 = vperm.slane %v730, 0
    %v732 = vmul.f32 %v680, %v731
    %v733 = vmul.f32 %v681, %v731
    %v734 = vmul.f32 %v682, %v731
    %v735 = vmul.f32 %v683, %v731
    %v736 = vmul.f32 %v684, %v731
    %v737 = vmul.f32 %v685, %v731
    %v738 = vmul.f32 %v686, %v731
    %v739 = vmul.f32 %v687, %v731
    %v740 = vadd.f32 %v722, %v732
    %v741 = vadd.f32 %v723, %v733
    %v742 = vadd.f32 %v724, %v734
    %v743 = vadd.f32 %v725, %v735
    %v744 = vadd.f32 %v726, %v736
    %v745 = vadd.f32 %v727, %v737
    %v746 = vadd.f32 %v728, %v738
    %v747 = vadd.f32 %v729, %v739
    %v748 = vrot.slane %v680, 1
    %v749 = vrot.slane %v681, 1
    %v750 = vrot.slane %v682, 1
    %v751 = vrot.slane %v683, 1
    %v752 = vrot.slane %v684, 1
    %v753 = vrot.slane %v685, 1
    %v754 = vrot.slane %v686, 1
    %v755 = vrot.slane %v687, 1
    %v756 = vsel %vm527, %v754, %v755
    %v757 = vsel %vm527, %v753, %v754
    %v758 = vsel %vm527, %v752, %v753
    %v759 = vsel %vm527, %v751, %v752
    %v760 = vsel %vm527, %v750, %v751
    %v761 = vsel %vm527, %v749, %v750
    %v762 = vsel %vm527, %v748, %v749
    %v763 = vsel %vm527, %v755, %v748
    %v764 = vmul.f32 %v762, %v151
    %v765 = vmul.f32 %v761, %v152
    %v766 = vmul.f32 %v760, %v153
    %v767 = vmul.f32 %v759, %v154
    %v768 = vmul.f32 %v758, %v151
    %v769 = vmul.f32 %v757, %v152
    %v770 = vmul.f32 %v756, %v153
    %v771 = vmul.f32 %v763, %v154
    %v772 = vld [vmem:[%s5 + $0x8] sm:$0x1]
    %v773 = vperm.slane %v772, 0
    %v774 = vmul.f32 %v764, %v773
    %v775 = vmul.f32 %v765, %v773
    %v776 = vmul.f32 %v766, %v773
    %v777 = vmul.f32 %v767, %v773
    %v778 = vmul.f32 %v768, %v773
    %v779 = vmul.f32 %v769, %v773
    %v780 = vmul.f32 %v770, %v773
    %v781 = vmul.f32 %v771, %v773
    %v782 = vadd.f32 %v740, %v774
    %v783 = vadd.f32 %v741, %v775
    %v784 = vadd.f32 %v742, %v776
    %v785 = vadd.f32 %v743, %v777
    %v786 = vadd.f32 %v744, %v778
    %v787 = vadd.f32 %v745, %v779
    %v788 = vadd.f32 %v746, %v780
    %v789 = vadd.f32 %v747, %v781
    %v790 = vpack.c.bf16 %v783, %v782
    %v791 = vpack.c.bf16 %v785, %v784
    %v792 = vpack.c.bf16 %v787, %v786
    %v793 = vpack.c.bf16 %v789, %v788
    %v794 = vld [vmem:[#allocation7 + $0x40] sm:$0xff]
    %v795 = vld [vmem:[#allocation7 + $0x48] sm:$0xff]
    %v796 = vld [vmem:[#allocation7 + $0x50] sm:$0xff]
    %v797 = vld [vmem:[#allocation7 + $0x58] sm:$0xff]
    %v798 = vld [vmem:[#allocation7 + $0x60] sm:$0xff]
    %v799 = vld [vmem:[#allocation7 + $0x68] sm:$0xff]
    %v800 = vld [vmem:[#allocation7 + $0x70] sm:$0xff]
    %v801 = vld [vmem:[#allocation7 + $0x78] sm:$0xff]
    %v802 = vld [vmem:[#allocation7 + $0x80] sm:$0xff]
    %v803 = vld [vmem:[#allocation7 + $0x88] sm:$0xff]
    %v804 = vld [vmem:[#allocation7 + $0x90] sm:$0xff]
    %v805 = vld [vmem:[#allocation7 + $0x98] sm:$0xff]
    %v806 = vld [vmem:[#allocation7 + $0xa0] sm:$0xff]
    %v807 = vld [vmem:[#allocation7 + $0xa8] sm:$0xff]
    %v808 = vld [vmem:[#allocation7 + $0xb0] sm:$0xff]
    %v809 = vld [vmem:[#allocation7 + $0xb8] sm:$0xff]
    %v810 = vld [vmem:[#allocation2] sm:$0xff]
    %v811 = vld [vmem:[#allocation2 + $0x8] sm:$0xff]
    %v812 = vld [vmem:[#allocation2 + $0x10] sm:$0xff]
    %v813 = vld [vmem:[#allocation2 + $0x18] sm:$0xff]
    %v814 = vld [vmem:[#allocation2 + $0x20] sm:$0xff]
    %v815 = vld [vmem:[#allocation2 + $0x28] sm:$0xff]
    %v816 = vld [vmem:[#allocation2 + $0x30] sm:$0xff]
    %v817 = vld [vmem:[#allocation2 + $0x38] sm:$0xff]
    %818 = vrot.lane.b32.xlu0 %v810, 4
    %v819 = vpop.permute.xlu0 %818
    %820 = vrot.lane.b32.xlu0 %v811, 4
    %v821 = vpop.permute.xlu0 %820
    %822 = vrot.lane.b32.xlu0 %v812, 4
    %v823 = vpop.permute.xlu0 %822
    %824 = vrot.lane.b32.xlu0 %v813, 4
    %v825 = vpop.permute.xlu0 %824
    %826 = vrot.lane.b32.xlu0 %v814, 4
    %v827 = vpop.permute.xlu0 %826
    %828 = vrot.lane.b32.xlu0 %v815, 4
    %v829 = vpop.permute.xlu0 %828
    %830 = vrot.lane.b32.xlu0 %v816, 4
    %v831 = vpop.permute.xlu0 %830
    %832 = vrot.lane.b32.xlu0 %v817, 4
    %v833 = vpop.permute.xlu0 %832
    %v834 = vmul.f32 %v819, %v159
    %v835 = vmul.f32 %v821, %v159
    %v836 = vmul.f32 %v823, %v159
    %v837 = vmul.f32 %v825, %v159
    %v838 = vmul.f32 %v827, %v159
    %v839 = vmul.f32 %v829, %v159
    %v840 = vmul.f32 %v831, %v159
    %v841 = vmul.f32 %v833, %v159
    %v842 = vrot.slane %v834, 7
    %v843 = vrot.slane %v835, 7
    %v844 = vrot.slane %v836, 7
    %v845 = vrot.slane %v837, 7
    %v846 = vrot.slane %v838, 7
    %v847 = vrot.slane %v839, 7
    %v848 = vrot.slane %v840, 7
    %v849 = vrot.slane %v841, 7
    %v850 = vsel %vm474, %v848, %v849
    %v851 = vsel %vm474, %v847, %v848
    %v852 = vsel %vm474, %v846, %v847
    %v853 = vsel %vm474, %v845, %v846
    %v854 = vsel %vm474, %v844, %v845
    %v855 = vsel %vm474, %v843, %v844
    %v856 = vsel %vm474, %v842, %v843
    %v857 = vsel %vm474, %v849, %v842
    %v858 = vmul.f32 %v857, %v139
    %v859 = vmul.f32 %v856, %v140
    %v860 = vmul.f32 %v855, %v141
    %v861 = vmul.f32 %v854, %v142
    %v862 = vmul.f32 %v853, %v139
    %v863 = vmul.f32 %v852, %v140
    %v864 = vmul.f32 %v851, %v141
    %v865 = vmul.f32 %v850, %v142
    %v866 = vld [vmem:[#allocation8] sm:$0x1]
    %v867 = vperm.slane %v866, 0
    %v868 = vmul.f32 %v858, %v867
    %v869 = vmul.f32 %v859, %v867
    %v870 = vmul.f32 %v860, %v867
    %v871 = vmul.f32 %v861, %v867
    %v872 = vmul.f32 %v862, %v867
    %v873 = vmul.f32 %v863, %v867
    %v874 = vmul.f32 %v864, %v867
    %v875 = vmul.f32 %v865, %v867
    %v876 = vld [vmem:[#allocation8 + $0x3] sm:$0x1]
    %v877 = vperm.slane %v876, 0
    %v878 = vmul.f32 %v834, %v877
    %v879 = vmul.f32 %v835, %v877
    %v880 = vmul.f32 %v836, %v877
    %v881 = vmul.f32 %v837, %v877
    %v882 = vmul.f32 %v838, %v877
    %v883 = vmul.f32 %v839, %v877
    %v884 = vmul.f32 %v840, %v877
    %v885 = vmul.f32 %v841, %v877
    %v886 = vadd.f32 %v868, %v878
    %v887 = vadd.f32 %v869, %v879
    %v888 = vadd.f32 %v870, %v880
    %v889 = vadd.f32 %v871, %v881
    %v890 = vadd.f32 %v872, %v882
    %v891 = vadd.f32 %v873, %v883
    %v892 = vadd.f32 %v874, %v884
    %v893 = vadd.f32 %v875, %v885
    %v894 = vrot.slane %v834, 1
    %v895 = vrot.slane %v835, 1
    %v896 = vrot.slane %v836, 1
    %v897 = vrot.slane %v837, 1
    %v898 = vrot.slane %v838, 1
    %v899 = vrot.slane %v839, 1
    %v900 = vrot.slane %v840, 1
    %v901 = vrot.slane %v841, 1
    %v902 = vsel %vm527, %v900, %v901
    %v903 = vsel %vm527, %v899, %v900
    %v904 = vsel %vm527, %v898, %v899
    %v905 = vsel %vm527, %v897, %v898
    %v906 = vsel %vm527, %v896, %v897
    %v907 = vsel %vm527, %v895, %v896
    %v908 = vsel %vm527, %v894, %v895
    %v909 = vsel %vm527, %v901, %v894
    %v910 = vmul.f32 %v908, %v151
    %v911 = vmul.f32 %v907, %v152
    %v912 = vmul.f32 %v906, %v153
    %v913 = vmul.f32 %v905, %v154
    %v914 = vmul.f32 %v904, %v151
    %v915 = vmul.f32 %v903, %v152
    %v916 = vmul.f32 %v902, %v153
    %v917 = vmul.f32 %v909, %v154
    %v918 = vld [vmem:[#allocation8 + $0x6] sm:$0x1]
    %v919 = vperm.slane %v918, 0
    %v920 = vmul.f32 %v910, %v919
    %v921 = vmul.f32 %v911, %v919
    %v922 = vmul.f32 %v912, %v919
    %v923 = vmul.f32 %v913, %v919
    %v924 = vmul.f32 %v914, %v919
    %v925 = vmul.f32 %v915, %v919
    %v926 = vmul.f32 %v916, %v919
    %v927 = vmul.f32 %v917, %v919
    %v928 = vadd.f32 %v886, %v920
    %v929 = vadd.f32 %v887, %v921
    %v930 = vadd.f32 %v888, %v922
    %v931 = vadd.f32 %v889, %v923
    %v932 = vadd.f32 %v890, %v924
    %v933 = vadd.f32 %v891, %v925
    %v934 = vadd.f32 %v892, %v926
    %v935 = vadd.f32 %v893, %v927
    %v936 = vrot.slane %v810, 7
    %v937 = vrot.slane %v811, 7
    %v938 = vrot.slane %v812, 7
    %v939 = vrot.slane %v813, 7
    %v940 = vrot.slane %v814, 7
    %v941 = vrot.slane %v815, 7
    %v942 = vrot.slane %v816, 7
    %v943 = vrot.slane %v817, 7
    %v944 = vsel %vm474, %v942, %v943
    %v945 = vsel %vm474, %v941, %v942
    %v946 = vsel %vm474, %v940, %v941
    %v947 = vsel %vm474, %v939, %v940
    %v948 = vsel %vm474, %v938, %v939
    %v949 = vsel %vm474, %v937, %v938
    %v950 = vsel %vm474, %v936, %v937
    %v951 = vsel %vm474, %v943, %v936
    %v952 = vmul.f32 %v951, %v139
    %v953 = vmul.f32 %v950, %v140
    %v954 = vmul.f32 %v949, %v141
    %v955 = vmul.f32 %v948, %v142
    %v956 = vmul.f32 %v947, %v139
    %v957 = vmul.f32 %v946, %v140
    %v958 = vmul.f32 %v945, %v141
    %v959 = vmul.f32 %v944, %v142
    %v960 = vld [vmem:[#allocation8 + $0x1] sm:$0x1]
    %v961 = vperm.slane %v960, 0
    %v962 = vmul.f32 %v952, %v961
    %v963 = vmul.f32 %v953, %v961
    %v964 = vmul.f32 %v954, %v961
    %v965 = vmul.f32 %v955, %v961
    %v966 = vmul.f32 %v956, %v961
    %v967 = vmul.f32 %v957, %v961
    %v968 = vmul.f32 %v958, %v961
    %v969 = vmul.f32 %v959, %v961
    %v970 = vadd.f32 %v928, %v962
    %v971 = vadd.f32 %v929, %v963
    %v972 = vadd.f32 %v930, %v964
    %v973 = vadd.f32 %v931, %v965
    %v974 = vadd.f32 %v932, %v966
    %v975 = vadd.f32 %v933, %v967
    %v976 = vadd.f32 %v934, %v968
    %v977 = vadd.f32 %v935, %v969
    %v978 = vld [vmem:[#allocation8 + $0x4] sm:$0x1]
    %v979 = vperm.slane %v978, 0
    %v980 = vmul.f32 %v810, %v979
    %v981 = vmul.f32 %v811, %v979
    %v982 = vmul.f32 %v812, %v979
    %v983 = vmul.f32 %v813, %v979
    %v984 = vmul.f32 %v814, %v979
    %v985 = vmul.f32 %v815, %v979
    %v986 = vmul.f32 %v816, %v979
    %v987 = vmul.f32 %v817, %v979
    %v988 = vadd.f32 %v970, %v980
    %v989 = vadd.f32 %v971, %v981
    %v990 = vadd.f32 %v972, %v982
    %v991 = vadd.f32 %v973, %v983
    %v992 = vadd.f32 %v974, %v984
    %v993 = vadd.f32 %v975, %v985
    %v994 = vadd.f32 %v976, %v986
    %v995 = vadd.f32 %v977, %v987
    %v996 = vrot.slane %v810, 1
    %v997 = vrot.slane %v811, 1
    %v998 = vrot.slane %v812, 1
    %v999 = vrot.slane %v813, 1
    %v1000 = vrot.slane %v814, 1
    %v1001 = vrot.slane %v815, 1
    %v1002 = vrot.slane %v816, 1
    %v1003 = vrot.slane %v817, 1
    %v1004 = vsel %vm527, %v1002, %v1003
    %v1005 = vsel %vm527, %v1001, %v1002
    %v1006 = vsel %vm527, %v1000, %v1001
    %v1007 = vsel %vm527, %v999, %v1000
    %v1008 = vsel %vm527, %v998, %v999
    %v1009 = vsel %vm527, %v997, %v998
    %v1010 = vsel %vm527, %v996, %v997
    %v1011 = vsel %vm527, %v1003, %v996
    %v1012 = vmul.f32 %v1010, %v151
    %v1013 = vmul.f32 %v1009, %v152
    %v1014 = vmul.f32 %v1008, %v153
    %v1015 = vmul.f32 %v1007, %v154
    %v1016 = vmul.f32 %v1006, %v151
    %v1017 = vmul.f32 %v1005, %v152
    %v1018 = vmul.f32 %v1004, %v153
    %v1019 = vmul.f32 %v1011, %v154
    %v1020 = vld [vmem:[#allocation8 + $0x7] sm:$0x1]
    %v1021 = vperm.slane %v1020, 0
    %v1022 = vmul.f32 %v1012, %v1021
    %v1023 = vmul.f32 %v1013, %v1021
    %v1024 = vmul.f32 %v1014, %v1021
    %v1025 = vmul.f32 %v1015, %v1021
    %v1026 = vmul.f32 %v1016, %v1021
    %v1027 = vmul.f32 %v1017, %v1021
    %v1028 = vmul.f32 %v1018, %v1021
    %v1029 = vmul.f32 %v1019, %v1021
    %v1030 = vadd.f32 %v988, %v1022
    %v1031 = vadd.f32 %v989, %v1023
    %v1032 = vadd.f32 %v990, %v1024
    %v1033 = vadd.f32 %v991, %v1025
    %v1034 = vadd.f32 %v992, %v1026
    %v1035 = vadd.f32 %v993, %v1027
    %v1036 = vadd.f32 %v994, %v1028
    %v1037 = vadd.f32 %v995, %v1029
    %1038 = vrot.lane.b32.xlu0 %v810, 124
    %v1039 = vpop.permute.xlu0 %1038
    %1040 = vrot.lane.b32.xlu0 %v811, 124
    %v1041 = vpop.permute.xlu0 %1040
    %1042 = vrot.lane.b32.xlu0 %v812, 124
    %v1043 = vpop.permute.xlu0 %1042
    %1044 = vrot.lane.b32.xlu0 %v813, 124
    %v1045 = vpop.permute.xlu0 %1044
    %1046 = vrot.lane.b32.xlu0 %v814, 124
    %v1047 = vpop.permute.xlu0 %1046
    %1048 = vrot.lane.b32.xlu0 %v815, 124
    %v1049 = vpop.permute.xlu0 %1048
    %1050 = vrot.lane.b32.xlu0 %v816, 124
    %v1051 = vpop.permute.xlu0 %1050
    %1052 = vrot.lane.b32.xlu0 %v817, 124
    %v1053 = vpop.permute.xlu0 %1052
    %v1054 = vmul.f32 %v1039, %v162
    %v1055 = vmul.f32 %v1041, %v162
    %v1056 = vmul.f32 %v1043, %v162
    %v1057 = vmul.f32 %v1045, %v162
    %v1058 = vmul.f32 %v1047, %v162
    %v1059 = vmul.f32 %v1049, %v162
    %v1060 = vmul.f32 %v1051, %v162
    %v1061 = vmul.f32 %v1053, %v162
    %v1062 = vrot.slane %v1054, 7
    %v1063 = vrot.slane %v1055, 7
    %v1064 = vrot.slane %v1056, 7
    %v1065 = vrot.slane %v1057, 7
    %v1066 = vrot.slane %v1058, 7
    %v1067 = vrot.slane %v1059, 7
    %v1068 = vrot.slane %v1060, 7
    %v1069 = vrot.slane %v1061, 7
    %v1070 = vsel %vm474, %v1068, %v1069
    %v1071 = vsel %vm474, %v1067, %v1068
    %v1072 = vsel %vm474, %v1066, %v1067
    %v1073 = vsel %vm474, %v1065, %v1066
    %v1074 = vsel %vm474, %v1064, %v1065
    %v1075 = vsel %vm474, %v1063, %v1064
    %v1076 = vsel %vm474, %v1062, %v1063
    %v1077 = vsel %vm474, %v1069, %v1062
    %v1078 = vmul.f32 %v1077, %v139
    %v1079 = vmul.f32 %v1076, %v140
    %v1080 = vmul.f32 %v1075, %v141
    %v1081 = vmul.f32 %v1074, %v142
    %v1082 = vmul.f32 %v1073, %v139
    %v1083 = vmul.f32 %v1072, %v140
    %v1084 = vmul.f32 %v1071, %v141
    %v1085 = vmul.f32 %v1070, %v142
    %v1086 = vld [vmem:[#allocation8 + $0x2] sm:$0x1]
    %v1087 = vperm.slane %v1086, 0
    %v1088 = vmul.f32 %v1078, %v1087
    %v1089 = vmul.f32 %v1079, %v1087
    %v1090 = vmul.f32 %v1080, %v1087
    %v1091 = vmul.f32 %v1081, %v1087
    %v1092 = vmul.f32 %v1082, %v1087
    %v1093 = vmul.f32 %v1083, %v1087
    %v1094 = vmul.f32 %v1084, %v1087
    %v1095 = vmul.f32 %v1085, %v1087
    %v1096 = vadd.f32 %v1030, %v1088
    %v1097 = vadd.f32 %v1031, %v1089
    %v1098 = vadd.f32 %v1032, %v1090
    %v1099 = vadd.f32 %v1033, %v1091
    %v1100 = vadd.f32 %v1034, %v1092
    %v1101 = vadd.f32 %v1035, %v1093
    %v1102 = vadd.f32 %v1036, %v1094
    %v1103 = vadd.f32 %v1037, %v1095
    %v1104 = vld [vmem:[#allocation8 + $0x5] sm:$0x1]
    %v1105 = vperm.slane %v1104, 0
    %v1106 = vmul.f32 %v1054, %v1105
    %v1107 = vmul.f32 %v1055, %v1105
    %v1108 = vmul.f32 %v1056, %v1105
    %v1109 = vmul.f32 %v1057, %v1105
    %v1110 = vmul.f32 %v1058, %v1105
    %v1111 = vmul.f32 %v1059, %v1105
    %v1112 = vmul.f32 %v1060, %v1105
    %v1113 = vmul.f32 %v1061, %v1105
    %v1114 = vadd.f32 %v1096, %v1106
    %v1115 = vadd.f32 %v1097, %v1107
    %v1116 = vadd.f32 %v1098, %v1108
    %v1117 = vadd.f32 %v1099, %v1109
    %v1118 = vadd.f32 %v1100, %v1110
    %v1119 = vadd.f32 %v1101, %v1111
    %v1120 = vadd.f32 %v1102, %v1112
    %v1121 = vadd.f32 %v1103, %v1113
    %v1122 = vrot.slane %v1054, 1
    %v1123 = vrot.slane %v1055, 1
    %v1124 = vrot.slane %v1056, 1
    %v1125 = vrot.slane %v1057, 1
    %v1126 = vrot.slane %v1058, 1
    %v1127 = vrot.slane %v1059, 1
    %v1128 = vrot.slane %v1060, 1
    %v1129 = vrot.slane %v1061, 1
    %v1130 = vsel %vm527, %v1128, %v1129
    %v1131 = vsel %vm527, %v1127, %v1128
    %v1132 = vsel %vm527, %v1126, %v1127
    %v1133 = vsel %vm527, %v1125, %v1126
    %v1134 = vsel %vm527, %v1124, %v1125
    %v1135 = vsel %vm527, %v1123, %v1124
    %v1136 = vsel %vm527, %v1122, %v1123
    %v1137 = vsel %vm527, %v1129, %v1122
    %v1138 = vmul.f32 %v1136, %v151
    %v1139 = vmul.f32 %v1135, %v152
    %v1140 = vmul.f32 %v1134, %v153
    %v1141 = vmul.f32 %v1133, %v154
    %v1142 = vmul.f32 %v1132, %v151
    %v1143 = vmul.f32 %v1131, %v152
    %v1144 = vmul.f32 %v1130, %v153
    %v1145 = vmul.f32 %v1137, %v154
    %v1146 = vld [vmem:[#allocation8 + $0x8] sm:$0x1]
    %v1147 = vperm.slane %v1146, 0
    %v1148 = vmul.f32 %v1138, %v1147
    %v1149 = vmul.f32 %v1139, %v1147
    %v1150 = vmul.f32 %v1140, %v1147
    %v1151 = vmul.f32 %v1141, %v1147
    %v1152 = vmul.f32 %v1142, %v1147
    %v1153 = vmul.f32 %v1143, %v1147
    %v1154 = vmul.f32 %v1144, %v1147
    %v1155 = vmul.f32 %v1145, %v1147
    %v1156 = vadd.f32 %v1114, %v1148
    %v1157 = vadd.f32 %v1115, %v1149
    %v1158 = vadd.f32 %v1116, %v1150
    %v1159 = vadd.f32 %v1117, %v1151
    %v1160 = vadd.f32 %v1118, %v1152
    %v1161 = vadd.f32 %v1119, %v1153
    %v1162 = vadd.f32 %v1120, %v1154
    %v1163 = vadd.f32 %v1121, %v1155
    %v1164 = vpack.c.bf16 %v1157, %v1156
    %v1165 = vpack.c.bf16 %v1159, %v1158
    %v1166 = vpack.c.bf16 %v1161, %v1160
    %v1167 = vpack.c.bf16 %v1163, %v1162
    %v1168 = vld [vmem:[#allocation7 + $0xc0] sm:$0xff]
    %v1169 = vld [vmem:[#allocation7 + $0xc8] sm:$0xff]
    %v1170 = vld [vmem:[#allocation7 + $0xd0] sm:$0xff]
    %v1171 = vld [vmem:[#allocation7 + $0xd8] sm:$0xff]
    %v1172 = vld [vmem:[#allocation7 + $0xe0] sm:$0xff]
    %v1173 = vld [vmem:[#allocation7 + $0xe8] sm:$0xff]
    %v1174 = vld [vmem:[#allocation7 + $0xf0] sm:$0xff]
    %v1175 = vld [vmem:[#allocation7 + $0xf8] sm:$0xff]
    %v1176 = vld [vmem:[#allocation7 + $0x100] sm:$0xff]
    %v1177 = vld [vmem:[#allocation7 + $0x108] sm:$0xff]
    %v1178 = vld [vmem:[#allocation7 + $0x110] sm:$0xff]
    %v1179 = vld [vmem:[#allocation7 + $0x118] sm:$0xff]
    %v1180 = vld [vmem:[#allocation7 + $0x120] sm:$0xff]
    %v1181 = vld [vmem:[#allocation7 + $0x128] sm:$0xff]
    %v1182 = vld [vmem:[#allocation7 + $0x130] sm:$0xff]
    %v1183 = vld [vmem:[#allocation7 + $0x138] sm:$0xff]
    %v1200 = vunpack.c.l.b16 %v1168
    %v1201 = vunpack.c.h.b16 %v1168
    %v1202 = vunpack.c.l.b16 %v1169
    %v1203 = vunpack.c.h.b16 %v1169
    %v1204 = vunpack.c.l.b16 %v1170
    %v1205 = vunpack.c.h.b16 %v1170
    %v1206 = vunpack.c.l.b16 %v1171
    %v1207 = vunpack.c.h.b16 %v1171
    %v1208 = vunpack.c.l.b16 %v1172
    %v1209 = vunpack.c.h.b16 %v1172
    %v1210 = vunpack.c.l.b16 %v1173
    %v1211 = vunpack.c.h.b16 %v1173
    %v1212 = vunpack.c.l.b16 %v1174
    %v1213 = vunpack.c.h.b16 %v1174
    %v1214 = vunpack.c.l.b16 %v1175
    %v1215 = vunpack.c.h.b16 %v1175
    %v1216 = vunpack.c.l.b16 %v1176
    %v1217 = vunpack.c.h.b16 %v1176
    %v1218 = vunpack.c.l.b16 %v1177
    %v1219 = vunpack.c.h.b16 %v1177
    %v1220 = vunpack.c.l.b16 %v1178
    %v1221 = vunpack.c.h.b16 %v1178
    %v1222 = vunpack.c.l.b16 %v1179
    %v1223 = vunpack.c.h.b16 %v1179
    %v1224 = vunpack.c.l.b16 %v1180
    %v1225 = vunpack.c.h.b16 %v1180
    %v1226 = vunpack.c.l.b16 %v1181
    %v1227 = vunpack.c.h.b16 %v1181
    %v1228 = vunpack.c.l.b16 %v1182
    %v1229 = vunpack.c.h.b16 %v1182
    %v1230 = vunpack.c.l.b16 %v1183
    %v1231 = vunpack.c.h.b16 %v1183
    %v1232 = vpack.c.b16 %v1202, %v1200
    %v1233 = vpack.c.b16 %v1203, %v1201
    %v1234 = vpack.c.b16 %v1206, %v1204
    %v1235 = vpack.c.b16 %v1207, %v1205
    %v1236 = vpack.c.b16 %v1210, %v1208
    %v1237 = vpack.c.b16 %v1211, %v1209
    %v1238 = vpack.c.b16 %v1214, %v1212
    %v1239 = vpack.c.b16 %v1215, %v1213
    %v1240 = vpack.c.b16 %v1218, %v1216
    %v1241 = vpack.c.b16 %v1219, %v1217
    %v1242 = vpack.c.b16 %v1222, %v1220
    %v1243 = vpack.c.b16 %v1223, %v1221
    %v1244 = vpack.c.b16 %v1226, %v1224
    %v1245 = vpack.c.b16 %v1227, %v1225
    %v1246 = vpack.c.b16 %v1230, %v1228
    %v1247 = vpack.c.b16 %v1231, %v1229
    %1264 = vmatpush.bf16.msra.mxu0 %v1246
    %1265 = vmatpush.bf16.msra.mxu0 %v1244
    %1266 = vmatpush.bf16.msra.mxu0 %v1242
    %1267 = vmatpush.bf16.msra.mxu0 %v1240
    %1268 = vmatpush.bf16.msra.mxu0 %v1238
    %1269 = vmatpush.bf16.msra.mxu0 %v1236
    %1270 = vmatpush.bf16.msra.mxu0 %v1234
    %1271 = vmatpush.bf16.msra.mxu0 %v1232
    %1272 = vmatmul.bf16.gmra.mxu0 %v1164
    %v1273 = vpop.f32.mrf.mxu0
    %v1274 = vadd.f32 0.0, %v1273
    %v1275 = vpop.f32.mrf.mxu0
    %v1276 = vadd.f32 0.0, %v1275
    %1277 = vmatmul.bf16.gmra.mxu0 %v1165
    %v1278 = vpop.f32.mrf.mxu0
    %v1279 = vadd.f32 0.0, %v1278
    %v1280 = vpop.f32.mrf.mxu0
    %v1281 = vadd.f32 0.0, %v1280
    %1282 = vmatmul.bf16.gmra.mxu0 %v1166
    %v1283 = vpop.f32.mrf.mxu0
    %v1284 = vadd.f32 0.0, %v1283
    %v1285 = vpop.f32.mrf.mxu0
    %v1286 = vadd.f32 0.0, %v1285
    %1287 = vmatmul.bf16.gmra.mxu0 %v1167
    %v1288 = vpop.f32.mrf.mxu0
    %v1289 = vadd.f32 0.0, %v1288
    %v1290 = vpop.f32.mrf.mxu0
    %v1291 = vadd.f32 0.0, %v1290
    %1292 = vdwg.mxu0
    %1293 = vmatpush.bf16.msra.mxu0 %v1247
    %1294 = vmatpush.bf16.msra.mxu0 %v1245
    %1295 = vmatpush.bf16.msra.mxu0 %v1243
    %1296 = vmatpush.bf16.msra.mxu0 %v1241
    %1297 = vmatpush.bf16.msra.mxu0 %v1239
    %1298 = vmatpush.bf16.msra.mxu0 %v1237
    %1299 = vmatpush.bf16.msra.mxu0 %v1235
    %1300 = vmatpush.bf16.msra.mxu0 %v1233
    %1301 = vmatmul.bf16.gmra.mxu0 %v1164
    %v1302 = vpop.f32.mrf.mxu0
    %v1303 = vadd.f32 0.0, %v1302
    %v1304 = vpop.f32.mrf.mxu0
    %v1305 = vadd.f32 0.0, %v1304
    %1306 = vmatmul.bf16.gmra.mxu0 %v1165
    %v1307 = vpop.f32.mrf.mxu0
    %v1308 = vadd.f32 0.0, %v1307
    %v1309 = vpop.f32.mrf.mxu0
    %v1310 = vadd.f32 0.0, %v1309
    %1311 = vmatmul.bf16.gmra.mxu0 %v1166
    %v1312 = vpop.f32.mrf.mxu0
    %v1313 = vadd.f32 0.0, %v1312
    %v1314 = vpop.f32.mrf.mxu0
    %v1315 = vadd.f32 0.0, %v1314
    %1316 = vmatmul.bf16.gmra.mxu0 %v1167
    %v1317 = vpop.f32.mrf.mxu0
    %v1318 = vadd.f32 0.0, %v1317
    %v1319 = vpop.f32.mrf.mxu0
    %v1320 = vadd.f32 0.0, %v1319
    %1321 = vdwg.mxu0
    %v1338 = vunpack.c.l.b16 %v794
    %v1339 = vunpack.c.h.b16 %v794
    %v1340 = vunpack.c.l.b16 %v795
    %v1341 = vunpack.c.h.b16 %v795
    %v1342 = vunpack.c.l.b16 %v796
    %v1343 = vunpack.c.h.b16 %v796
    %v1344 = vunpack.c.l.b16 %v797
    %v1345 = vunpack.c.h.b16 %v797
    %v1346 = vunpack.c.l.b16 %v798
    %v1347 = vunpack.c.h.b16 %v798
    %v1348 = vunpack.c.l.b16 %v799
    %v1349 = vunpack.c.h.b16 %v799
    %v1350 = vunpack.c.l.b16 %v800
    %v1351 = vunpack.c.h.b16 %v800
    %v1352 = vunpack.c.l.b16 %v801
    %v1353 = vunpack.c.h.b16 %v801
    %v1354 = vunpack.c.l.b16 %v802
    %v1355 = vunpack.c.h.b16 %v802
    %v1356 = vunpack.c.l.b16 %v803
    %v1357 = vunpack.c.h.b16 %v803
    %v1358 = vunpack.c.l.b16 %v804
    %v1359 = vunpack.c.h.b16 %v804
    %v1360 = vunpack.c.l.b16 %v805
    %v1361 = vunpack.c.h.b16 %v805
    %v1362 = vunpack.c.l.b16 %v806
    %v1363 = vunpack.c.h.b16 %v806
    %v1364 = vunpack.c.l.b16 %v807
    %v1365 = vunpack.c.h.b16 %v807
    %v1366 = vunpack.c.l.b16 %v808
    %v1367 = vunpack.c.h.b16 %v808
    %v1368 = vunpack.c.l.b16 %v809
    %v1369 = vunpack.c.h.b16 %v809
    %v1370 = vpack.c.b16 %v1340, %v1338
    %v1371 = vpack.c.b16 %v1341, %v1339
    %v1372 = vpack.c.b16 %v1344, %v1342
    %v1373 = vpack.c.b16 %v1345, %v1343
    %v1374 = vpack.c.b16 %v1348, %v1346
    %v1375 = vpack.c.b16 %v1349, %v1347
    %v1376 = vpack.c.b16 %v1352, %v1350
    %v1377 = vpack.c.b16 %v1353, %v1351
    %v1378 = vpack.c.b16 %v1356, %v1354
    %v1379 = vpack.c.b16 %v1357, %v1355
    %v1380 = vpack.c.b16 %v1360, %v1358
    %v1381 = vpack.c.b16 %v1361, %v1359
    %v1382 = vpack.c.b16 %v1364, %v1362
    %v1383 = vpack.c.b16 %v1365, %v1363
    %v1384 = vpack.c.b16 %v1368, %v1366
    %v1385 = vpack.c.b16 %v1369, %v1367
    %1402 = vmatpush.bf16.msra.mxu0 %v1384
    %1403 = vmatpush.bf16.msra.mxu0 %v1382
    %1404 = vmatpush.bf16.msra.mxu0 %v1380
    %1405 = vmatpush.bf16.msra.mxu0 %v1378
    %1406 = vmatpush.bf16.msra.mxu0 %v1376
    %1407 = vmatpush.bf16.msra.mxu0 %v1374
    %1408 = vmatpush.bf16.msra.mxu0 %v1372
    %1409 = vmatpush.bf16.msra.mxu0 %v1370
    %1410 = vmatmul.bf16.gmra.mxu0 %v790
    %v1411 = vpop.f32.mrf.mxu0
    %v1412 = vadd.f32 %v1274, %v1411
    %v1413 = vpop.f32.mrf.mxu0
    %v1414 = vadd.f32 %v1276, %v1413
    %1415 = vmatmul.bf16.gmra.mxu0 %v791
    %v1416 = vpop.f32.mrf.mxu0
    %v1417 = vadd.f32 %v1279, %v1416
    %v1418 = vpop.f32.mrf.mxu0
    %v1419 = vadd.f32 %v1281, %v1418
    %1420 = vmatmul.bf16.gmra.mxu0 %v792
    %v1421 = vpop.f32.mrf.mxu0
    %v1422 = vadd.f32 %v1284, %v1421
    %v1423 = vpop.f32.mrf.mxu0
    %v1424 = vadd.f32 %v1286, %v1423
    %1425 = vmatmul.bf16.gmra.mxu0 %v793
    %v1426 = vpop.f32.mrf.mxu0
    %v1427 = vadd.f32 %v1289, %v1426
    %v1428 = vpop.f32.mrf.mxu0
    %v1429 = vadd.f32 %v1291, %v1428
    %1430 = vdwg.mxu0
    %1431 = vmatpush.bf16.msra.mxu0 %v1385
    %1432 = vmatpush.bf16.msra.mxu0 %v1383
    %1433 = vmatpush.bf16.msra.mxu0 %v1381
    %1434 = vmatpush.bf16.msra.mxu0 %v1379
    %1435 = vmatpush.bf16.msra.mxu0 %v1377
    %1436 = vmatpush.bf16.msra.mxu0 %v1375
    %1437 = vmatpush.bf16.msra.mxu0 %v1373
    %1438 = vmatpush.bf16.msra.mxu0 %v1371
    %1439 = vmatmul.bf16.gmra.mxu0 %v790
    %v1440 = vpop.f32.mrf.mxu0
    %v1441 = vadd.f32 %v1303, %v1440
    %v1442 = vpop.f32.mrf.mxu0
    %v1443 = vadd.f32 %v1305, %v1442
    %1444 = vmatmul.bf16.gmra.mxu0 %v791
    %v1445 = vpop.f32.mrf.mxu0
    %v1446 = vadd.f32 %v1308, %v1445
    %v1447 = vpop.f32.mrf.mxu0
    %v1448 = vadd.f32 %v1310, %v1447
    %1449 = vmatmul.bf16.gmra.mxu0 %v792
    %v1450 = vpop.f32.mrf.mxu0
    %v1451 = vadd.f32 %v1313, %v1450
    %v1452 = vpop.f32.mrf.mxu0
    %v1453 = vadd.f32 %v1315, %v1452
    %1454 = vmatmul.bf16.gmra.mxu0 %v793
    %v1455 = vpop.f32.mrf.mxu0
    %v1456 = vadd.f32 %v1318, %v1455
    %v1457 = vpop.f32.mrf.mxu0
    %v1458 = vadd.f32 %v1320, %v1457
    %1459 = vdwg.mxu0
    %s1460 = scalar_lea.vmem [#allocation11], 1
    %v1461 = vld [vmem:[%s1460] ss:$8 sm:$0x3]
    %s1462 = scalar_lea.vmem [#allocation11], 2
    %v1463 = vld [vmem:[%s1462] ss:$8 sm:$0x3]
    %v1464 = vadd.f32 %v1412, %v1414
    %v1465 = vadd.f32 %v1464, %v1417
    %v1466 = vadd.f32 %v1465, %v1419
    %v1467 = vadd.f32 %v1466, %v1422
    %v1468 = vadd.f32 %v1467, %v1424
    %v1469 = vadd.f32 %v1468, %v1427
    %v1470 = vadd.f32 %v1469, %v1429
    %v1471 = vrot.slane %v1470, 4
    %v1472 = vadd.f32 %v1470, %v1471
    %v1473 = vrot.slane %v1472, 2
    %v1474 = vadd.f32 %v1472, %v1473
    %v1475 = vrot.slane %v1474, 1
    %v1476 = vadd.f32 %v1474, %v1475
    %v1477 = vadd.f32 %v1441, %v1443
    %v1478 = vadd.f32 %v1477, %v1446
    %v1479 = vadd.f32 %v1478, %v1448
    %v1480 = vadd.f32 %v1479, %v1451
    %v1481 = vadd.f32 %v1480, %v1453
    %v1482 = vadd.f32 %v1481, %v1456
    %v1483 = vadd.f32 %v1482, %v1458
    %v1484 = vrot.slane %v1483, 4
    %v1485 = vadd.f32 %v1483, %v1484
    %v1486 = vrot.slane %v1485, 2
    %v1487 = vadd.f32 %v1485, %v1486
    %v1488 = vrot.slane %v1487, 1
    %v1489 = vadd.f32 %v1487, %v1488
    %1490 = vrot.lane.b32.xlu0 %v1476, 8
    %v1491 = vpop.permute.xlu0 %1490
    %1492 = vrot.lane.b32.xlu0 %v1489, 8
    %v1493 = vpop.permute.xlu0 %1492
    %vm1494 = vcmp.lt.s32.totalorder %v156, 8
    %v1495 = vsel %vm1494, %v1491, %v1493
    %v1496 = vsel %vm1494, %v1493, %v1491
    %v1497 = vadd.f32 %v1476, %v1496
    %v1498 = vadd.f32 %v1489, %v1495
    %1499 = vrot.lane.b32.xlu0 %v1497, 16
    %v1500 = vpop.permute.xlu0 %1499
    %1501 = vrot.lane.b32.xlu0 %v1498, 16
    %v1502 = vpop.permute.xlu0 %1501
    %vm1503 = vcmp.lt.s32.totalorder %v156, 16
    %v1504 = vsel %vm1503, %v1500, %v1502
    %v1505 = vsel %vm1503, %v1502, %v1500
    %v1506 = vadd.f32 %v1497, %v1505
    %v1507 = vadd.f32 %v1498, %v1504
    %1508 = vrot.lane.b32.xlu0 %v1506, 32
    %v1509 = vpop.permute.xlu0 %1508
    %1510 = vrot.lane.b32.xlu0 %v1507, 32
    %v1511 = vpop.permute.xlu0 %1510
    %vm1512 = vcmp.lt.s32.totalorder %v156, 32
    %v1513 = vsel %vm1512, %v1509, %v1511
    %v1514 = vsel %vm1512, %v1511, %v1509
    %v1515 = vadd.f32 %v1506, %v1514
    %v1516 = vadd.f32 %v1507, %v1513
    %1517 = vrot.lane.b32.xlu0 %v1515, 64
    %v1518 = vpop.permute.xlu0 %1517
    %1519 = vrot.lane.b32.xlu0 %v1516, 64
    %v1520 = vpop.permute.xlu0 %1519
    %vm1521 = vcmp.lt.s32.totalorder %v156, 64
    %v1522 = vsel %vm1521, %v1518, %v1520
    %v1523 = vsel %vm1521, %v1520, %v1518
    %v1524 = vadd.f32 %v1515, %v1523
    %v1525 = vadd.f32 %v1516, %v1522
    %v1526 = vadd.f32 %v1524, %v1525
    %v1527 = vmul.f32 %v1526, 0.00048828125
    %v1528 = vperm.slane %v1527, 0
    %v1529 = vsub.f32 %v1412, %v1528
    %v1530 = vsub.f32 %v1441, %v1528
    %v1531 = vsub.f32 %v1414, %v1528
    %v1532 = vsub.f32 %v1443, %v1528
    %v1533 = vsub.f32 %v1417, %v1528
    %v1534 = vsub.f32 %v1446, %v1528
    %v1535 = vsub.f32 %v1419, %v1528
    %v1536 = vsub.f32 %v1448, %v1528
    %v1537 = vsub.f32 %v1422, %v1528
    %v1538 = vsub.f32 %v1451, %v1528
    %v1539 = vsub.f32 %v1424, %v1528
    %v1540 = vsub.f32 %v1453, %v1528
    %v1541 = vsub.f32 %v1427, %v1528
    %v1542 = vsub.f32 %v1456, %v1528
    %v1543 = vsub.f32 %v1429, %v1528
    %v1544 = vsub.f32 %v1458, %v1528
    %v1545 = vmul.f32 %v1529, %v1529
    %v1546 = vmul.f32 %v1530, %v1530
    %v1547 = vmul.f32 %v1531, %v1531
    %v1548 = vmul.f32 %v1532, %v1532
    %v1549 = vmul.f32 %v1533, %v1533
    %v1550 = vmul.f32 %v1534, %v1534
    %v1551 = vmul.f32 %v1535, %v1535
    %v1552 = vmul.f32 %v1536, %v1536
    %v1553 = vmul.f32 %v1537, %v1537
    %v1554 = vmul.f32 %v1538, %v1538
    %v1555 = vmul.f32 %v1539, %v1539
    %v1556 = vmul.f32 %v1540, %v1540
    %v1557 = vmul.f32 %v1541, %v1541
    %v1558 = vmul.f32 %v1542, %v1542
    %v1559 = vmul.f32 %v1543, %v1543
    %v1560 = vmul.f32 %v1544, %v1544
    %v1561 = vadd.f32 %v1545, %v1547
    %v1562 = vadd.f32 %v1561, %v1549
    %v1563 = vadd.f32 %v1562, %v1551
    %v1564 = vadd.f32 %v1563, %v1553
    %v1565 = vadd.f32 %v1564, %v1555
    %v1566 = vadd.f32 %v1565, %v1557
    %v1567 = vadd.f32 %v1566, %v1559
    %v1568 = vrot.slane %v1567, 4
    %v1569 = vadd.f32 %v1567, %v1568
    %v1570 = vrot.slane %v1569, 2
    %v1571 = vadd.f32 %v1569, %v1570
    %v1572 = vrot.slane %v1571, 1
    %v1573 = vadd.f32 %v1571, %v1572
    %v1574 = vadd.f32 %v1546, %v1548
    %v1575 = vadd.f32 %v1574, %v1550
    %v1576 = vadd.f32 %v1575, %v1552
    %v1577 = vadd.f32 %v1576, %v1554
    %v1578 = vadd.f32 %v1577, %v1556
    %v1579 = vadd.f32 %v1578, %v1558
    %v1580 = vadd.f32 %v1579, %v1560
    %v1581 = vrot.slane %v1580, 4
    %v1582 = vadd.f32 %v1580, %v1581
    %v1583 = vrot.slane %v1582, 2
    %v1584 = vadd.f32 %v1582, %v1583
    %v1585 = vrot.slane %v1584, 1
    %v1586 = vadd.f32 %v1584, %v1585
    %1587 = vrot.lane.b32.xlu0 %v1573, 8
    %v1588 = vpop.permute.xlu0 %1587
    %1589 = vrot.lane.b32.xlu0 %v1586, 8
    %v1590 = vpop.permute.xlu0 %1589
    %v1591 = vsel %vm1494, %v1588, %v1590
    %v1592 = vsel %vm1494, %v1590, %v1588
    %v1593 = vadd.f32 %v1573, %v1592
    %v1594 = vadd.f32 %v1586, %v1591
    %1595 = vrot.lane.b32.xlu0 %v1593, 16
    %v1596 = vpop.permute.xlu0 %1595
    %1597 = vrot.lane.b32.xlu0 %v1594, 16
    %v1598 = vpop.permute.xlu0 %1597
    %v1599 = vsel %vm1503, %v1596, %v1598
    %v1600 = vsel %vm1503, %v1598, %v1596
    %v1601 = vadd.f32 %v1593, %v1600
    %v1602 = vadd.f32 %v1594, %v1599
    %1603 = vrot.lane.b32.xlu0 %v1601, 32
    %v1604 = vpop.permute.xlu0 %1603
    %1605 = vrot.lane.b32.xlu0 %v1602, 32
    %v1606 = vpop.permute.xlu0 %1605
    %v1607 = vsel %vm1512, %v1604, %v1606
    %v1608 = vsel %vm1512, %v1606, %v1604
    %v1609 = vadd.f32 %v1601, %v1608
    %v1610 = vadd.f32 %v1602, %v1607
    %1611 = vrot.lane.b32.xlu0 %v1609, 64
    %v1612 = vpop.permute.xlu0 %1611
    %1613 = vrot.lane.b32.xlu0 %v1610, 64
    %v1614 = vpop.permute.xlu0 %1613
    %v1615 = vsel %vm1521, %v1612, %v1614
    %v1616 = vsel %vm1521, %v1614, %v1612
    %v1617 = vadd.f32 %v1609, %v1616
    %v1618 = vadd.f32 %v1610, %v1615
    %v1619 = vadd.f32 %v1617, %v1618
    %v1620 = vmul.f32 %v1619, 0.00048828125
    %v1621 = vadd.f32 %v1620, 1e-05
    %v1622 = vrsqrt.pop %v1621
    %v1623 = vmul.f32 %v1622, %v1621
    %v1624 = vmul.f32 %v1623, %v1622
    %v1625 = vmul.f32 0.5, %v1624
    %v1626 = vsub.f32 1.5, %v1625
    %v1627 = vmul.f32 %v1622, %v1626
    %vm1628 = vweird.f32 %v1621
    %vm1629 = vweird.f32 %v1622
    %vm1630 = vmor %vm1628, %vm1629
    %v1631 = vsel %vm1630, %v1622, %v1627
    %v1633 = vperm.slane %v1461, 0
    %v1634 = vperm.slane %v1461, 1
    %v1637 = vmul.f32 %v1631, %v1633
    %v1638 = vmul.f32 %v1631, %v1634
    %v1639 = vperm.slane %v1637, 0
    %v1640 = vperm.slane %v1638, 0
    %v1641 = vmul.f32 %v1529, %v1639
    %v1642 = vmul.f32 %v1530, %v1640
    %v1643 = vmul.f32 %v1531, %v1639
    %v1644 = vmul.f32 %v1532, %v1640
    %v1645 = vmul.f32 %v1533, %v1639
    %v1646 = vmul.f32 %v1534, %v1640
    %v1647 = vmul.f32 %v1535, %v1639
    %v1648 = vmul.f32 %v1536, %v1640
    %v1649 = vmul.f32 %v1537, %v1639
    %v1650 = vmul.f32 %v1538, %v1640
    %v1651 = vmul.f32 %v1539, %v1639
    %v1652 = vmul.f32 %v1540, %v1640
    %v1653 = vmul.f32 %v1541, %v1639
    %v1654 = vmul.f32 %v1542, %v1640
    %v1655 = vmul.f32 %v1543, %v1639
    %v1656 = vmul.f32 %v1544, %v1640
    %v1658 = vperm.slane %v1463, 0
    %v1659 = vperm.slane %v1463, 1
    %v1662 = vadd.f32 %v1641, %v1658
    %v1663 = vadd.f32 %v1642, %v1659
    %v1664 = vadd.f32 %v1643, %v1658
    %v1665 = vadd.f32 %v1644, %v1659
    %v1666 = vadd.f32 %v1645, %v1658
    %v1667 = vadd.f32 %v1646, %v1659
    %v1668 = vadd.f32 %v1647, %v1658
    %v1669 = vadd.f32 %v1648, %v1659
    %v1670 = vadd.f32 %v1649, %v1658
    %v1671 = vadd.f32 %v1650, %v1659
    %v1672 = vadd.f32 %v1651, %v1658
    %v1673 = vadd.f32 %v1652, %v1659
    %v1674 = vadd.f32 %v1653, %v1658
    %v1675 = vadd.f32 %v1654, %v1659
    %v1676 = vadd.f32 %v1655, %v1658
    %v1677 = vadd.f32 %v1656, %v1659
    %1678 = vrot.lane.b32.xlu0 %v1662, 8
    %v1679 = vpop.permute.xlu0 %1678
    %1680 = vrot.lane.b32.xlu0 %v1664, 8
    %v1681 = vpop.permute.xlu0 %1680
    %1682 = vrot.lane.b32.xlu0 %v1666, 8
    %v1683 = vpop.permute.xlu0 %1682
    %1684 = vrot.lane.b32.xlu0 %v1668, 8
    %v1685 = vpop.permute.xlu0 %1684
    %1686 = vrot.lane.b32.xlu0 %v1670, 8
    %v1687 = vpop.permute.xlu0 %1686
    %1688 = vrot.lane.b32.xlu0 %v1672, 8
    %v1689 = vpop.permute.xlu0 %1688
    %1690 = vrot.lane.b32.xlu0 %v1674, 8
    %v1691 = vpop.permute.xlu0 %1690
    %1692 = vrot.lane.b32.xlu0 %v1676, 8
    %v1693 = vpop.permute.xlu0 %1692
    %1694 = vrot.lane.b32.xlu0 %v1663, 8
    %v1695 = vpop.permute.xlu0 %1694
    %1696 = vrot.lane.b32.xlu0 %v1665, 8
    %v1697 = vpop.permute.xlu0 %1696
    %1698 = vrot.lane.b32.xlu0 %v1667, 8
    %v1699 = vpop.permute.xlu0 %1698
    %1700 = vrot.lane.b32.xlu0 %v1669, 8
    %v1701 = vpop.permute.xlu0 %1700
    %1702 = vrot.lane.b32.xlu0 %v1671, 8
    %v1703 = vpop.permute.xlu0 %1702
    %1704 = vrot.lane.b32.xlu0 %v1673, 8
    %v1705 = vpop.permute.xlu0 %1704
    %1706 = vrot.lane.b32.xlu0 %v1675, 8
    %v1707 = vpop.permute.xlu0 %1706
    %1708 = vrot.lane.b32.xlu0 %v1677, 8
    %v1709 = vpop.permute.xlu0 %1708
    %v1710 = vsel %vm1494, %v1679, %v1695
    %v1711 = vsel %vm1494, %v1681, %v1697
    %v1712 = vsel %vm1494, %v1683, %v1699
    %v1713 = vsel %vm1494, %v1685, %v1701
    %v1714 = vsel %vm1494, %v1687, %v1703
    %v1715 = vsel %vm1494, %v1689, %v1705
    %v1716 = vsel %vm1494, %v1691, %v1707
    %v1717 = vsel %vm1494, %v1693, %v1709
    %v1718 = vsel %vm1494, %v1695, %v1679
    %v1719 = vsel %vm1494, %v1697, %v1681
    %v1720 = vsel %vm1494, %v1699, %v1683
    %v1721 = vsel %vm1494, %v1701, %v1685
    %v1722 = vsel %vm1494, %v1703, %v1687
    %v1723 = vsel %vm1494, %v1705, %v1689
    %v1724 = vsel %vm1494, %v1707, %v1691
    %v1725 = vsel %vm1494, %v1709, %v1693
    %v1726 = vmul.f32 %v1718, %v168
    %v1727 = vmul.f32 %v1710, %v169
    %v1728 = vmul.f32 %v1719, %v168
    %v1729 = vmul.f32 %v1711, %v169
    %v1730 = vmul.f32 %v1720, %v168
    %v1731 = vmul.f32 %v1712, %v169
    %v1732 = vmul.f32 %v1721, %v168
    %v1733 = vmul.f32 %v1713, %v169
    %v1734 = vmul.f32 %v1722, %v168
    %v1735 = vmul.f32 %v1714, %v169
    %v1736 = vmul.f32 %v1723, %v168
    %v1737 = vmul.f32 %v1715, %v169
    %v1738 = vmul.f32 %v1724, %v168
    %v1739 = vmul.f32 %v1716, %v169
    %v1740 = vmul.f32 %v1725, %v168
    %v1741 = vmul.f32 %v1717, %v169
    %v1742 = vrot.slane %v1726, 7
    %v1743 = vrot.slane %v1727, 7
    %v1744 = vrot.slane %v1728, 7
    %v1745 = vrot.slane %v1729, 7
    %v1746 = vrot.slane %v1730, 7
    %v1747 = vrot.slane %v1731, 7
    %v1748 = vrot.slane %v1732, 7
    %v1749 = vrot.slane %v1733, 7
    %v1750 = vrot.slane %v1734, 7
    %v1751 = vrot.slane %v1735, 7
    %v1752 = vrot.slane %v1736, 7
    %v1753 = vrot.slane %v1737, 7
    %v1754 = vrot.slane %v1738, 7
    %v1755 = vrot.slane %v1739, 7
    %v1756 = vrot.slane %v1740, 7
    %v1757 = vrot.slane %v1741, 7
    %v1758 = vsel %vm474, %v1754, %v1756
    %v1759 = vsel %vm474, %v1755, %v1757
    %v1760 = vsel %vm474, %v1752, %v1754
    %v1761 = vsel %vm474, %v1753, %v1755
    %v1762 = vsel %vm474, %v1750, %v1752
    %v1763 = vsel %vm474, %v1751, %v1753
    %v1764 = vsel %vm474, %v1748, %v1750
    %v1765 = vsel %vm474, %v1749, %v1751
    %v1766 = vsel %vm474, %v1746, %v1748
    %v1767 = vsel %vm474, %v1747, %v1749
    %v1768 = vsel %vm474, %v1744, %v1746
    %v1769 = vsel %vm474, %v1745, %v1747
    %v1770 = vsel %vm474, %v1742, %v1744
    %v1771 = vsel %vm474, %v1743, %v1745
    %v1772 = vsel %vm474, %v1756, %v1742
    %v1773 = vsel %vm474, %v1757, %v1743
    %v1774 = vmul.f32 %v1772, %v139
    %v1775 = vmul.f32 %v1773, %v139
    %v1776 = vmul.f32 %v1770, %v140
    %v1777 = vmul.f32 %v1771, %v140
    %v1778 = vmul.f32 %v1768, %v141
    %v1779 = vmul.f32 %v1769, %v141
    %v1780 = vmul.f32 %v1766, %v142
    %v1781 = vmul.f32 %v1767, %v142
    %v1782 = vmul.f32 %v1764, %v139
    %v1783 = vmul.f32 %v1765, %v139
    %v1784 = vmul.f32 %v1762, %v140
    %v1785 = vmul.f32 %v1763, %v140
    %v1786 = vmul.f32 %v1760, %v141
    %v1787 = vmul.f32 %v1761, %v141
    %v1788 = vmul.f32 %v1758, %v142
    %v1789 = vmul.f32 %v1759, %v142
    %v1790 = vld [vmem:[#allocation10] ss:$8 sm:$0x3]
    %v1792 = vperm.slane %v1790, 0
    %v1793 = vperm.slane %v1790, 1
    %v1796 = vmul.f32 %v1774, %v1792
    %v1797 = vmul.f32 %v1775, %v1793
    %v1798 = vmul.f32 %v1776, %v1792
    %v1799 = vmul.f32 %v1777, %v1793
    %v1800 = vmul.f32 %v1778, %v1792
    %v1801 = vmul.f32 %v1779, %v1793
    %v1802 = vmul.f32 %v1780, %v1792
    %v1803 = vmul.f32 %v1781, %v1793
    %v1804 = vmul.f32 %v1782, %v1792
    %v1805 = vmul.f32 %v1783, %v1793
    %v1806 = vmul.f32 %v1784, %v1792
    %v1807 = vmul.f32 %v1785, %v1793
    %v1808 = vmul.f32 %v1786, %v1792
    %v1809 = vmul.f32 %v1787, %v1793
    %v1810 = vmul.f32 %v1788, %v1792
    %v1811 = vmul.f32 %v1789, %v1793
    %s1812 = scalar_lea.vmem [#allocation10], 3
    %v1813 = vld [vmem:[%s1812] ss:$8 sm:$0x3]
    %v1815 = vperm.slane %v1813, 0
    %v1816 = vperm.slane %v1813, 1
    %v1819 = vmul.f32 %v1726, %v1815
    %v1820 = vmul.f32 %v1727, %v1816
    %v1821 = vmul.f32 %v1728, %v1815
    %v1822 = vmul.f32 %v1729, %v1816
    %v1823 = vmul.f32 %v1730, %v1815
    %v1824 = vmul.f32 %v1731, %v1816
    %v1825 = vmul.f32 %v1732, %v1815
    %v1826 = vmul.f32 %v1733, %v1816
    %v1827 = vmul.f32 %v1734, %v1815
    %v1828 = vmul.f32 %v1735, %v1816
    %v1829 = vmul.f32 %v1736, %v1815
    %v1830 = vmul.f32 %v1737, %v1816
    %v1831 = vmul.f32 %v1738, %v1815
    %v1832 = vmul.f32 %v1739, %v1816
    %v1833 = vmul.f32 %v1740, %v1815
    %v1834 = vmul.f32 %v1741, %v1816
    %v1835 = vadd.f32 %v1796, %v1819
    %v1836 = vadd.f32 %v1797, %v1820
    %v1837 = vadd.f32 %v1798, %v1821
    %v1838 = vadd.f32 %v1799, %v1822
    %v1839 = vadd.f32 %v1800, %v1823
    %v1840 = vadd.f32 %v1801, %v1824
    %v1841 = vadd.f32 %v1802, %v1825
    %v1842 = vadd.f32 %v1803, %v1826
    %v1843 = vadd.f32 %v1804, %v1827
    %v1844 = vadd.f32 %v1805, %v1828
    %v1845 = vadd.f32 %v1806, %v1829
    %v1846 = vadd.f32 %v1807, %v1830
    %v1847 = vadd.f32 %v1808, %v1831
    %v1848 = vadd.f32 %v1809, %v1832
    %v1849 = vadd.f32 %v1810, %v1833
    %v1850 = vadd.f32 %v1811, %v1834
    %v1851 = vrot.slane %v1726, 1
    %v1852 = vrot.slane %v1727, 1
    %v1853 = vrot.slane %v1728, 1
    %v1854 = vrot.slane %v1729, 1
    %v1855 = vrot.slane %v1730, 1
    %v1856 = vrot.slane %v1731, 1
    %v1857 = vrot.slane %v1732, 1
    %v1858 = vrot.slane %v1733, 1
    %v1859 = vrot.slane %v1734, 1
    %v1860 = vrot.slane %v1735, 1
    %v1861 = vrot.slane %v1736, 1
    %v1862 = vrot.slane %v1737, 1
    %v1863 = vrot.slane %v1738, 1
    %v1864 = vrot.slane %v1739, 1
    %v1865 = vrot.slane %v1740, 1
    %v1866 = vrot.slane %v1741, 1
    %v1867 = vsel %vm527, %v1863, %v1865
    %v1868 = vsel %vm527, %v1864, %v1866
    %v1869 = vsel %vm527, %v1861, %v1863
    %v1870 = vsel %vm527, %v1862, %v1864
    %v1871 = vsel %vm527, %v1859, %v1861
    %v1872 = vsel %vm527, %v1860, %v1862
    %v1873 = vsel %vm527, %v1857, %v1859
    %v1874 = vsel %vm527, %v1858, %v1860
    %v1875 = vsel %vm527, %v1855, %v1857
    %v1876 = vsel %vm527, %v1856, %v1858
    %v1877 = vsel %vm527, %v1853, %v1855
    %v1878 = vsel %vm527, %v1854, %v1856
    %v1879 = vsel %vm527, %v1851, %v1853
    %v1880 = vsel %vm527, %v1852, %v1854
    %v1881 = vsel %vm527, %v1865, %v1851
    %v1882 = vsel %vm527, %v1866, %v1852
    %v1883 = vmul.f32 %v1879, %v151
    %v1884 = vmul.f32 %v1880, %v151
    %v1885 = vmul.f32 %v1877, %v152
    %v1886 = vmul.f32 %v1878, %v152
    %v1887 = vmul.f32 %v1875, %v153
    %v1888 = vmul.f32 %v1876, %v153
    %v1889 = vmul.f32 %v1873, %v154
    %v1890 = vmul.f32 %v1874, %v154
    %v1891 = vmul.f32 %v1871, %v151
    %v1892 = vmul.f32 %v1872, %v151
    %v1893 = vmul.f32 %v1869, %v152
    %v1894 = vmul.f32 %v1870, %v152
    %v1895 = vmul.f32 %v1867, %v153
    %v1896 = vmul.f32 %v1868, %v153
    %v1897 = vmul.f32 %v1881, %v154
    %v1898 = vmul.f32 %v1882, %v154
    %s1899 = scalar_lea.vmem [#allocation10], 6
    %v1900 = vld [vmem:[%s1899] ss:$8 sm:$0x3]
    %v1902 = vperm.slane %v1900, 0
    %v1903 = vperm.slane %v1900, 1
    %v1906 = vmul.f32 %v1883, %v1902
    %v1907 = vmul.f32 %v1884, %v1903
    %v1908 = vmul.f32 %v1885, %v1902
    %v1909 = vmul.f32 %v1886, %v1903
    %v1910 = vmul.f32 %v1887, %v1902
    %v1911 = vmul.f32 %v1888, %v1903
    %v1912 = vmul.f32 %v1889, %v1902
    %v1913 = vmul.f32 %v1890, %v1903
    %v1914 = vmul.f32 %v1891, %v1902
    %v1915 = vmul.f32 %v1892, %v1903
    %v1916 = vmul.f32 %v1893, %v1902
    %v1917 = vmul.f32 %v1894, %v1903
    %v1918 = vmul.f32 %v1895, %v1902
    %v1919 = vmul.f32 %v1896, %v1903
    %v1920 = vmul.f32 %v1897, %v1902
    %v1921 = vmul.f32 %v1898, %v1903
    %v1922 = vadd.f32 %v1835, %v1906
    %v1923 = vadd.f32 %v1836, %v1907
    %v1924 = vadd.f32 %v1837, %v1908
    %v1925 = vadd.f32 %v1838, %v1909
    %v1926 = vadd.f32 %v1839, %v1910
    %v1927 = vadd.f32 %v1840, %v1911
    %v1928 = vadd.f32 %v1841, %v1912
    %v1929 = vadd.f32 %v1842, %v1913
    %v1930 = vadd.f32 %v1843, %v1914
    %v1931 = vadd.f32 %v1844, %v1915
    %v1932 = vadd.f32 %v1845, %v1916
    %v1933 = vadd.f32 %v1846, %v1917
    %v1934 = vadd.f32 %v1847, %v1918
    %v1935 = vadd.f32 %v1848, %v1919
    %v1936 = vadd.f32 %v1849, %v1920
    %v1937 = vadd.f32 %v1850, %v1921
    %v1938 = vrot.slane %v1662, 7
    %v1939 = vrot.slane %v1663, 7
    %v1940 = vrot.slane %v1664, 7
    %v1941 = vrot.slane %v1665, 7
    %v1942 = vrot.slane %v1666, 7
    %v1943 = vrot.slane %v1667, 7
    %v1944 = vrot.slane %v1668, 7
    %v1945 = vrot.slane %v1669, 7
    %v1946 = vrot.slane %v1670, 7
    %v1947 = vrot.slane %v1671, 7
    %v1948 = vrot.slane %v1672, 7
    %v1949 = vrot.slane %v1673, 7
    %v1950 = vrot.slane %v1674, 7
    %v1951 = vrot.slane %v1675, 7
    %v1952 = vrot.slane %v1676, 7
    %v1953 = vrot.slane %v1677, 7
    %v1954 = vsel %vm474, %v1950, %v1952
    %v1955 = vsel %vm474, %v1951, %v1953
    %v1956 = vsel %vm474, %v1948, %v1950
    %v1957 = vsel %vm474, %v1949, %v1951
    %v1958 = vsel %vm474, %v1946, %v1948
    %v1959 = vsel %vm474, %v1947, %v1949
    %v1960 = vsel %vm474, %v1944, %v1946
    %v1961 = vsel %vm474, %v1945, %v1947
    %v1962 = vsel %vm474, %v1942, %v1944
    %v1963 = vsel %vm474, %v1943, %v1945
    %v1964 = vsel %vm474, %v1940, %v1942
    %v1965 = vsel %vm474, %v1941, %v1943
    %v1966 = vsel %vm474, %v1938, %v1940
    %v1967 = vsel %vm474, %v1939, %v1941
    %v1968 = vsel %vm474, %v1952, %v1938
    %v1969 = vsel %vm474, %v1953, %v1939
    %v1970 = vmul.f32 %v1968, %v139
    %v1971 = vmul.f32 %v1969, %v139
    %v1972 = vmul.f32 %v1966, %v140
    %v1973 = vmul.f32 %v1967, %v140
    %v1974 = vmul.f32 %v1964, %v141
    %v1975 = vmul.f32 %v1965, %v141
    %v1976 = vmul.f32 %v1962, %v142
    %v1977 = vmul.f32 %v1963, %v142
    %v1978 = vmul.f32 %v1960, %v139
    %v1979 = vmul.f32 %v1961, %v139
    %v1980 = vmul.f32 %v1958, %v140
    %v1981 = vmul.f32 %v1959, %v140
    %v1982 = vmul.f32 %v1956, %v141
    %v1983 = vmul.f32 %v1957, %v141
    %v1984 = vmul.f32 %v1954, %v142
    %v1985 = vmul.f32 %v1955, %v142
    %s1986 = scalar_lea.vmem [#allocation10], 1
    %v1987 = vld [vmem:[%s1986] ss:$8 sm:$0x3]
    %v1989 = vperm.slane %v1987, 0
    %v1990 = vperm.slane %v1987, 1
    %v1993 = vmul.f32 %v1970, %v1989
    %v1994 = vmul.f32 %v1971, %v1990
    %v1995 = vmul.f32 %v1972, %v1989
    %v1996 = vmul.f32 %v1973, %v1990
    %v1997 = vmul.f32 %v1974, %v1989
    %v1998 = vmul.f32 %v1975, %v1990
    %v1999 = vmul.f32 %v1976, %v1989
    %v2000 = vmul.f32 %v1977, %v1990
    %v2001 = vmul.f32 %v1978, %v1989
    %v2002 = vmul.f32 %v1979, %v1990
    %v2003 = vmul.f32 %v1980, %v1989
    %v2004 = vmul.f32 %v1981, %v1990
    %v2005 = vmul.f32 %v1982, %v1989
    %v2006 = vmul.f32 %v1983, %v1990
    %v2007 = vmul.f32 %v1984, %v1989
    %v2008 = vmul.f32 %v1985, %v1990
    %v2009 = vadd.f32 %v1922, %v1993
    %v2010 = vadd.f32 %v1923, %v1994
    %v2011 = vadd.f32 %v1924, %v1995
    %v2012 = vadd.f32 %v1925, %v1996
    %v2013 = vadd.f32 %v1926, %v1997
    %v2014 = vadd.f32 %v1927, %v1998
    %v2015 = vadd.f32 %v1928, %v1999
    %v2016 = vadd.f32 %v1929, %v2000
    %v2017 = vadd.f32 %v1930, %v2001
    %v2018 = vadd.f32 %v1931, %v2002
    %v2019 = vadd.f32 %v1932, %v2003
    %v2020 = vadd.f32 %v1933, %v2004
    %v2021 = vadd.f32 %v1934, %v2005
    %v2022 = vadd.f32 %v1935, %v2006
    %v2023 = vadd.f32 %v1936, %v2007
    %v2024 = vadd.f32 %v1937, %v2008
    %s2025 = scalar_lea.vmem [#allocation10], 4
    %v2026 = vld [vmem:[%s2025] ss:$8 sm:$0x3]
    %v2028 = vperm.slane %v2026, 0
    %v2029 = vperm.slane %v2026, 1
    %v2032 = vmul.f32 %v1662, %v2028
    %v2033 = vmul.f32 %v1663, %v2029
    %v2034 = vmul.f32 %v1664, %v2028
    %v2035 = vmul.f32 %v1665, %v2029
    %v2036 = vmul.f32 %v1666, %v2028
    %v2037 = vmul.f32 %v1667, %v2029
    %v2038 = vmul.f32 %v1668, %v2028
    %v2039 = vmul.f32 %v1669, %v2029
    %v2040 = vmul.f32 %v1670, %v2028
    %v2041 = vmul.f32 %v1671, %v2029
    %v2042 = vmul.f32 %v1672, %v2028
    %v2043 = vmul.f32 %v1673, %v2029
    %v2044 = vmul.f32 %v1674, %v2028
    %v2045 = vmul.f32 %v1675, %v2029
    %v2046 = vmul.f32 %v1676, %v2028
    %v2047 = vmul.f32 %v1677, %v2029
    %v2048 = vadd.f32 %v2009, %v2032
    %v2049 = vadd.f32 %v2010, %v2033
    %v2050 = vadd.f32 %v2011, %v2034
    %v2051 = vadd.f32 %v2012, %v2035
    %v2052 = vadd.f32 %v2013, %v2036
    %v2053 = vadd.f32 %v2014, %v2037
    %v2054 = vadd.f32 %v2015, %v2038
    %v2055 = vadd.f32 %v2016, %v2039
    %v2056 = vadd.f32 %v2017, %v2040
    %v2057 = vadd.f32 %v2018, %v2041
    %v2058 = vadd.f32 %v2019, %v2042
    %v2059 = vadd.f32 %v2020, %v2043
    %v2060 = vadd.f32 %v2021, %v2044
    %v2061 = vadd.f32 %v2022, %v2045
    %v2062 = vadd.f32 %v2023, %v2046
    %v2063 = vadd.f32 %v2024, %v2047
    %v2064 = vrot.slane %v1662, 1
    %v2065 = vrot.slane %v1663, 1
    %v2066 = vrot.slane %v1664, 1
    %v2067 = vrot.slane %v1665, 1
    %v2068 = vrot.slane %v1666, 1
    %v2069 = vrot.slane %v1667, 1
    %v2070 = vrot.slane %v1668, 1
    %v2071 = vrot.slane %v1669, 1
    %v2072 = vrot.slane %v1670, 1
    %v2073 = vrot.slane %v1671, 1
    %v2074 = vrot.slane %v1672, 1
    %v2075 = vrot.slane %v1673, 1
    %v2076 = vrot.slane %v1674, 1
    %v2077 = vrot.slane %v1675, 1
    %v2078 = vrot.slane %v1676, 1
    %v2079 = vrot.slane %v1677, 1
    %v2080 = vsel %vm527, %v2076, %v2078
    %v2081 = vsel %vm527, %v2077, %v2079
    %v2082 = vsel %vm527, %v2074, %v2076
    %v2083 = vsel %vm527, %v2075, %v2077
    %v2084 = vsel %vm527, %v2072, %v2074
    %v2085 = vsel %vm527, %v2073, %v2075
    %v2086 = vsel %vm527, %v2070, %v2072
    %v2087 = vsel %vm527, %v2071, %v2073
    %v2088 = vsel %vm527, %v2068, %v2070
    %v2089 = vsel %vm527, %v2069, %v2071
    %v2090 = vsel %vm527, %v2066, %v2068
    %v2091 = vsel %vm527, %v2067, %v2069
    %v2092 = vsel %vm527, %v2064, %v2066
    %v2093 = vsel %vm527, %v2065, %v2067
    %v2094 = vsel %vm527, %v2078, %v2064
    %v2095 = vsel %vm527, %v2079, %v2065
    %v2096 = vmul.f32 %v2092, %v151
    %v2097 = vmul.f32 %v2093, %v151
    %v2098 = vmul.f32 %v2090, %v152
    %v2099 = vmul.f32 %v2091, %v152
    %v2100 = vmul.f32 %v2088, %v153
    %v2101 = vmul.f32 %v2089, %v153
    %v2102 = vmul.f32 %v2086, %v154
    %v2103 = vmul.f32 %v2087, %v154
    %v2104 = vmul.f32 %v2084, %v151
    %v2105 = vmul.f32 %v2085, %v151
    %v2106 = vmul.f32 %v2082, %v152
    %v2107 = vmul.f32 %v2083, %v152
    %v2108 = vmul.f32 %v2080, %v153
    %v2109 = vmul.f32 %v2081, %v153
    %v2110 = vmul.f32 %v2094, %v154
    %v2111 = vmul.f32 %v2095, %v154
    %s2112 = scalar_lea.vmem [#allocation10], 7
    %v2113 = vld [vmem:[%s2112] ss:$8 sm:$0x3]
    %v2115 = vperm.slane %v2113, 0
    %v2116 = vperm.slane %v2113, 1
    %v2119 = vmul.f32 %v2096, %v2115
    %v2120 = vmul.f32 %v2097, %v2116
    %v2121 = vmul.f32 %v2098, %v2115
    %v2122 = vmul.f32 %v2099, %v2116
    %v2123 = vmul.f32 %v2100, %v2115
    %v2124 = vmul.f32 %v2101, %v2116
    %v2125 = vmul.f32 %v2102, %v2115
    %v2126 = vmul.f32 %v2103, %v2116
    %v2127 = vmul.f32 %v2104, %v2115
    %v2128 = vmul.f32 %v2105, %v2116
    %v2129 = vmul.f32 %v2106, %v2115
    %v2130 = vmul.f32 %v2107, %v2116
    %v2131 = vmul.f32 %v2108, %v2115
    %v2132 = vmul.f32 %v2109, %v2116
    %v2133 = vmul.f32 %v2110, %v2115
    %v2134 = vmul.f32 %v2111, %v2116
    %v2135 = vadd.f32 %v2048, %v2119
    %v2136 = vadd.f32 %v2049, %v2120
    %v2137 = vadd.f32 %v2050, %v2121
    %v2138 = vadd.f32 %v2051, %v2122
    %v2139 = vadd.f32 %v2052, %v2123
    %v2140 = vadd.f32 %v2053, %v2124
    %v2141 = vadd.f32 %v2054, %v2125
    %v2142 = vadd.f32 %v2055, %v2126
    %v2143 = vadd.f32 %v2056, %v2127
    %v2144 = vadd.f32 %v2057, %v2128
    %v2145 = vadd.f32 %v2058, %v2129
    %v2146 = vadd.f32 %v2059, %v2130
    %v2147 = vadd.f32 %v2060, %v2131
    %v2148 = vadd.f32 %v2061, %v2132
    %v2149 = vadd.f32 %v2062, %v2133
    %v2150 = vadd.f32 %v2063, %v2134
    %2151 = vrot.lane.b32.xlu0 %v1662, 120
    %v2152 = vpop.permute.xlu0 %2151
    %2153 = vrot.lane.b32.xlu0 %v1664, 120
    %v2154 = vpop.permute.xlu0 %2153
    %2155 = vrot.lane.b32.xlu0 %v1666, 120
    %v2156 = vpop.permute.xlu0 %2155
    %2157 = vrot.lane.b32.xlu0 %v1668, 120
    %v2158 = vpop.permute.xlu0 %2157
    %2159 = vrot.lane.b32.xlu0 %v1670, 120
    %v2160 = vpop.permute.xlu0 %2159
    %2161 = vrot.lane.b32.xlu0 %v1672, 120
    %v2162 = vpop.permute.xlu0 %2161
    %2163 = vrot.lane.b32.xlu0 %v1674, 120
    %v2164 = vpop.permute.xlu0 %2163
    %2165 = vrot.lane.b32.xlu0 %v1676, 120
    %v2166 = vpop.permute.xlu0 %2165
    %2167 = vrot.lane.b32.xlu0 %v1663, 120
    %v2168 = vpop.permute.xlu0 %2167
    %2169 = vrot.lane.b32.xlu0 %v1665, 120
    %v2170 = vpop.permute.xlu0 %2169
    %2171 = vrot.lane.b32.xlu0 %v1667, 120
    %v2172 = vpop.permute.xlu0 %2171
    %2173 = vrot.lane.b32.xlu0 %v1669, 120
    %v2174 = vpop.permute.xlu0 %2173
    %2175 = vrot.lane.b32.xlu0 %v1671, 120
    %v2176 = vpop.permute.xlu0 %2175
    %2177 = vrot.lane.b32.xlu0 %v1673, 120
    %v2178 = vpop.permute.xlu0 %2177
    %2179 = vrot.lane.b32.xlu0 %v1675, 120
    %v2180 = vpop.permute.xlu0 %2179
    %2181 = vrot.lane.b32.xlu0 %v1677, 120
    %v2182 = vpop.permute.xlu0 %2181
    %vm2183 = vcmp.lt.s32.totalorder %v156, 120
    %v2184 = vsel %vm2183, %v2152, %v2168
    %v2185 = vsel %vm2183, %v2154, %v2170
    %v2186 = vsel %vm2183, %v2156, %v2172
    %v2187 = vsel %vm2183, %v2158, %v2174
    %v2188 = vsel %vm2183, %v2160, %v2176
    %v2189 = vsel %vm2183, %v2162, %v2178
    %v2190 = vsel %vm2183, %v2164, %v2180
    %v2191 = vsel %vm2183, %v2166, %v2182
    %v2192 = vsel %vm2183, %v2168, %v2152
    %v2193 = vsel %vm2183, %v2170, %v2154
    %v2194 = vsel %vm2183, %v2172, %v2156
    %v2195 = vsel %vm2183, %v2174, %v2158
    %v2196 = vsel %vm2183, %v2176, %v2160
    %v2197 = vsel %vm2183, %v2178, %v2162
    %v2198 = vsel %vm2183, %v2180, %v2164
    %v2199 = vsel %vm2183, %v2182, %v2166
    %v2200 = vmul.f32 %v2184, %v174
    %v2201 = vmul.f32 %v2192, %v175
    %v2202 = vmul.f32 %v2185, %v174
    %v2203 = vmul.f32 %v2193, %v175
    %v2204 = vmul.f32 %v2186, %v174
    %v2205 = vmul.f32 %v2194, %v175
    %v2206 = vmul.f32 %v2187, %v174
    %v2207 = vmul.f32 %v2195, %v175
    %v2208 = vmul.f32 %v2188, %v174
    %v2209 = vmul.f32 %v2196, %v175
    %v2210 = vmul.f32 %v2189, %v174
    %v2211 = vmul.f32 %v2197, %v175
    %v2212 = vmul.f32 %v2190, %v174
    %v2213 = vmul.f32 %v2198, %v175
    %v2214 = vmul.f32 %v2191, %v174
    %v2215 = vmul.f32 %v2199, %v175
    %v2216 = vrot.slane %v2200, 7
    %v2217 = vrot.slane %v2201, 7
    %v2218 = vrot.slane %v2202, 7
    %v2219 = vrot.slane %v2203, 7
    %v2220 = vrot.slane %v2204, 7
    %v2221 = vrot.slane %v2205, 7
    %v2222 = vrot.slane %v2206, 7
    %v2223 = vrot.slane %v2207, 7
    %v2224 = vrot.slane %v2208, 7
    %v2225 = vrot.slane %v2209, 7
    %v2226 = vrot.slane %v2210, 7
    %v2227 = vrot.slane %v2211, 7
    %v2228 = vrot.slane %v2212, 7
    %v2229 = vrot.slane %v2213, 7
    %v2230 = vrot.slane %v2214, 7
    %v2231 = vrot.slane %v2215, 7
    %v2232 = vsel %vm474, %v2228, %v2230
    %v2233 = vsel %vm474, %v2229, %v2231
    %v2234 = vsel %vm474, %v2226, %v2228
    %v2235 = vsel %vm474, %v2227, %v2229
    %v2236 = vsel %vm474, %v2224, %v2226
    %v2237 = vsel %vm474, %v2225, %v2227
    %v2238 = vsel %vm474, %v2222, %v2224
    %v2239 = vsel %vm474, %v2223, %v2225
    %v2240 = vsel %vm474, %v2220, %v2222
    %v2241 = vsel %vm474, %v2221, %v2223
    %v2242 = vsel %vm474, %v2218, %v2220
    %v2243 = vsel %vm474, %v2219, %v2221
    %v2244 = vsel %vm474, %v2216, %v2218
    %v2245 = vsel %vm474, %v2217, %v2219
    %v2246 = vsel %vm474, %v2230, %v2216
    %v2247 = vsel %vm474, %v2231, %v2217
    %v2248 = vmul.f32 %v2246, %v139
    %v2249 = vmul.f32 %v2247, %v139
    %v2250 = vmul.f32 %v2244, %v140
    %v2251 = vmul.f32 %v2245, %v140
    %v2252 = vmul.f32 %v2242, %v141
    %v2253 = vmul.f32 %v2243, %v141
    %v2254 = vmul.f32 %v2240, %v142
    %v2255 = vmul.f32 %v2241, %v142
    %v2256 = vmul.f32 %v2238, %v139
    %v2257 = vmul.f32 %v2239, %v139
    %v2258 = vmul.f32 %v2236, %v140
    %v2259 = vmul.f32 %v2237, %v140
    %v2260 = vmul.f32 %v2234, %v141
    %v2261 = vmul.f32 %v2235, %v141
    %v2262 = vmul.f32 %v2232, %v142
    %v2263 = vmul.f32 %v2233, %v142
    %s2264 = scalar_lea.vmem [#allocation10], 2
    %v2265 = vld [vmem:[%s2264] ss:$8 sm:$0x3]
    %v2267 = vperm.slane %v2265, 0
    %v2268 = vperm.slane %v2265, 1
    %v2271 = vmul.f32 %v2248, %v2267
    %v2272 = vmul.f32 %v2249, %v2268
    %v2273 = vmul.f32 %v2250, %v2267
    %v2274 = vmul.f32 %v2251, %v2268
    %v2275 = vmul.f32 %v2252, %v2267
    %v2276 = vmul.f32 %v2253, %v2268
    %v2277 = vmul.f32 %v2254, %v2267
    %v2278 = vmul.f32 %v2255, %v2268
    %v2279 = vmul.f32 %v2256, %v2267
    %v2280 = vmul.f32 %v2257, %v2268
    %v2281 = vmul.f32 %v2258, %v2267
    %v2282 = vmul.f32 %v2259, %v2268
    %v2283 = vmul.f32 %v2260, %v2267
    %v2284 = vmul.f32 %v2261, %v2268
    %v2285 = vmul.f32 %v2262, %v2267
    %v2286 = vmul.f32 %v2263, %v2268
    %v2287 = vadd.f32 %v2135, %v2271
    %v2288 = vadd.f32 %v2136, %v2272
    %v2289 = vadd.f32 %v2137, %v2273
    %v2290 = vadd.f32 %v2138, %v2274
    %v2291 = vadd.f32 %v2139, %v2275
    %v2292 = vadd.f32 %v2140, %v2276
    %v2293 = vadd.f32 %v2141, %v2277
    %v2294 = vadd.f32 %v2142, %v2278
    %v2295 = vadd.f32 %v2143, %v2279
    %v2296 = vadd.f32 %v2144, %v2280
    %v2297 = vadd.f32 %v2145, %v2281
    %v2298 = vadd.f32 %v2146, %v2282
    %v2299 = vadd.f32 %v2147, %v2283
    %v2300 = vadd.f32 %v2148, %v2284
    %v2301 = vadd.f32 %v2149, %v2285
    %v2302 = vadd.f32 %v2150, %v2286
    %s2303 = scalar_lea.vmem [#allocation10], 5
    %v2304 = vld [vmem:[%s2303] ss:$8 sm:$0x3]
    %v2306 = vperm.slane %v2304, 0
    %v2307 = vperm.slane %v2304, 1
    %v2310 = vmul.f32 %v2200, %v2306
    %v2311 = vmul.f32 %v2201, %v2307
    %v2312 = vmul.f32 %v2202, %v2306
    %v2313 = vmul.f32 %v2203, %v2307
    %v2314 = vmul.f32 %v2204, %v2306
    %v2315 = vmul.f32 %v2205, %v2307
    %v2316 = vmul.f32 %v2206, %v2306
    %v2317 = vmul.f32 %v2207, %v2307
    %v2318 = vmul.f32 %v2208, %v2306
    %v2319 = vmul.f32 %v2209, %v2307
    %v2320 = vmul.f32 %v2210, %v2306
    %v2321 = vmul.f32 %v2211, %v2307
    %v2322 = vmul.f32 %v2212, %v2306
    %v2323 = vmul.f32 %v2213, %v2307
    %v2324 = vmul.f32 %v2214, %v2306
    %v2325 = vmul.f32 %v2215, %v2307
    %v2326 = vadd.f32 %v2287, %v2310
    %v2327 = vadd.f32 %v2288, %v2311
    %v2328 = vadd.f32 %v2289, %v2312
    %v2329 = vadd.f32 %v2290, %v2313
    %v2330 = vadd.f32 %v2291, %v2314
    %v2331 = vadd.f32 %v2292, %v2315
    %v2332 = vadd.f32 %v2293, %v2316
    %v2333 = vadd.f32 %v2294, %v2317
    %v2334 = vadd.f32 %v2295, %v2318
    %v2335 = vadd.f32 %v2296, %v2319
    %v2336 = vadd.f32 %v2297, %v2320
    %v2337 = vadd.f32 %v2298, %v2321
    %v2338 = vadd.f32 %v2299, %v2322
    %v2339 = vadd.f32 %v2300, %v2323
    %v2340 = vadd.f32 %v2301, %v2324
    %v2341 = vadd.f32 %v2302, %v2325
    %v2342 = vrot.slane %v2200, 1
    %v2343 = vrot.slane %v2201, 1
    %v2344 = vrot.slane %v2202, 1
    %v2345 = vrot.slane %v2203, 1
    %v2346 = vrot.slane %v2204, 1
    %v2347 = vrot.slane %v2205, 1
    %v2348 = vrot.slane %v2206, 1
    %v2349 = vrot.slane %v2207, 1
    %v2350 = vrot.slane %v2208, 1
    %v2351 = vrot.slane %v2209, 1
    %v2352 = vrot.slane %v2210, 1
    %v2353 = vrot.slane %v2211, 1
    %v2354 = vrot.slane %v2212, 1
    %v2355 = vrot.slane %v2213, 1
    %v2356 = vrot.slane %v2214, 1
    %v2357 = vrot.slane %v2215, 1
    %v2358 = vsel %vm527, %v2354, %v2356
    %v2359 = vsel %vm527, %v2355, %v2357
    %v2360 = vsel %vm527, %v2352, %v2354
    %v2361 = vsel %vm527, %v2353, %v2355
    %v2362 = vsel %vm527, %v2350, %v2352
    %v2363 = vsel %vm527, %v2351, %v2353
    %v2364 = vsel %vm527, %v2348, %v2350
    %v2365 = vsel %vm527, %v2349, %v2351
    %v2366 = vsel %vm527, %v2346, %v2348
    %v2367 = vsel %vm527, %v2347, %v2349
    %v2368 = vsel %vm527, %v2344, %v2346
    %v2369 = vsel %vm527, %v2345, %v2347
    %v2370 = vsel %vm527, %v2342, %v2344
    %v2371 = vsel %vm527, %v2343, %v2345
    %v2372 = vsel %vm527, %v2356, %v2342
    %v2373 = vsel %vm527, %v2357, %v2343
    %v2374 = vmul.f32 %v2370, %v151
    %v2375 = vmul.f32 %v2371, %v151
    %v2376 = vmul.f32 %v2368, %v152
    %v2377 = vmul.f32 %v2369, %v152
    %v2378 = vmul.f32 %v2366, %v153
    %v2379 = vmul.f32 %v2367, %v153
    %v2380 = vmul.f32 %v2364, %v154
    %v2381 = vmul.f32 %v2365, %v154
    %v2382 = vmul.f32 %v2362, %v151
    %v2383 = vmul.f32 %v2363, %v151
    %v2384 = vmul.f32 %v2360, %v152
    %v2385 = vmul.f32 %v2361, %v152
    %v2386 = vmul.f32 %v2358, %v153
    %v2387 = vmul.f32 %v2359, %v153
    %v2388 = vmul.f32 %v2372, %v154
    %v2389 = vmul.f32 %v2373, %v154
    %s2390 = scalar_lea.vmem [#allocation10], 16
    %v2391 = vld [vmem:[%s2390] ss:$8 sm:$0x3]
    %v2393 = vperm.slane %v2391, 0
    %v2394 = vperm.slane %v2391, 1
    %v2397 = vmul.f32 %v2374, %v2393
    %v2398 = vmul.f32 %v2375, %v2394
    %v2399 = vmul.f32 %v2376, %v2393
    %v2400 = vmul.f32 %v2377, %v2394
    %v2401 = vmul.f32 %v2378, %v2393
    %v2402 = vmul.f32 %v2379, %v2394
    %v2403 = vmul.f32 %v2380, %v2393
    %v2404 = vmul.f32 %v2381, %v2394
    %v2405 = vmul.f32 %v2382, %v2393
    %v2406 = vmul.f32 %v2383, %v2394
    %v2407 = vmul.f32 %v2384, %v2393
    %v2408 = vmul.f32 %v2385, %v2394
    %v2409 = vmul.f32 %v2386, %v2393
    %v2410 = vmul.f32 %v2387, %v2394
    %v2411 = vmul.f32 %v2388, %v2393
    %v2412 = vmul.f32 %v2389, %v2394
    %v2413 = vadd.f32 %v2326, %v2397
    %v2414 = vadd.f32 %v2327, %v2398
    %v2415 = vadd.f32 %v2328, %v2399
    %v2416 = vadd.f32 %v2329, %v2400
    %v2417 = vadd.f32 %v2330, %v2401
    %v2418 = vadd.f32 %v2331, %v2402
    %v2419 = vadd.f32 %v2332, %v2403
    %v2420 = vadd.f32 %v2333, %v2404
    %v2421 = vadd.f32 %v2334, %v2405
    %v2422 = vadd.f32 %v2335, %v2406
    %v2423 = vadd.f32 %v2336, %v2407
    %v2424 = vadd.f32 %v2337, %v2408
    %v2425 = vadd.f32 %v2338, %v2409
    %v2426 = vadd.f32 %v2339, %v2410
    %v2427 = vadd.f32 %v2340, %v2411
    %v2428 = vadd.f32 %v2341, %v2412
    %v2429 = vpack.c.bf16 %v2415, %v2413
    %v2430 = vpack.c.bf16 %v2416, %v2414
    %v2431 = vpack.c.bf16 %v2419, %v2417
    %v2432 = vpack.c.bf16 %v2420, %v2418
    %v2433 = vpack.c.bf16 %v2423, %v2421
    %v2434 = vpack.c.bf16 %v2424, %v2422
    %v2435 = vpack.c.bf16 %v2427, %v2425
    %v2436 = vpack.c.bf16 %v2428, %v2426
    %v2437 = vld [vmem:[#allocation7 + $0x140] sm:$0xff]
    %v2438 = vld [vmem:[#allocation7 + $0x148] sm:$0xff]
    %v2439 = vld [vmem:[#allocation7 + $0x150] sm:$0xff]
    %v2440 = vld [vmem:[#allocation7 + $0x158] sm:$0xff]
    %v2441 = vld [vmem:[#allocation7 + $0x160] sm:$0xff]
    %v2442 = vld [vmem:[#allocation7 + $0x168] sm:$0xff]
    %v2443 = vld [vmem:[#allocation7 + $0x170] sm:$0xff]
    %v2444 = vld [vmem:[#allocation7 + $0x178] sm:$0xff]
    %v2445 = vld [vmem:[#allocation7 + $0x180] sm:$0xff]
    %v2446 = vld [vmem:[#allocation7 + $0x188] sm:$0xff]
    %v2447 = vld [vmem:[#allocation7 + $0x190] sm:$0xff]
    %v2448 = vld [vmem:[#allocation7 + $0x198] sm:$0xff]
    %v2449 = vld [vmem:[#allocation7 + $0x1a0] sm:$0xff]
    %v2450 = vld [vmem:[#allocation7 + $0x1a8] sm:$0xff]
    %v2451 = vld [vmem:[#allocation7 + $0x1b0] sm:$0xff]
    %v2452 = vld [vmem:[#allocation7 + $0x1b8] sm:$0xff]
    %v2453 = vld [vmem:[#allocation7 + $0x1c0] sm:$0xff]
    %v2454 = vld [vmem:[#allocation7 + $0x1c8] sm:$0xff]
    %v2455 = vld [vmem:[#allocation7 + $0x1d0] sm:$0xff]
    %v2456 = vld [vmem:[#allocation7 + $0x1d8] sm:$0xff]
    %v2457 = vld [vmem:[#allocation7 + $0x1e0] sm:$0xff]
    %v2458 = vld [vmem:[#allocation7 + $0x1e8] sm:$0xff]
    %v2459 = vld [vmem:[#allocation7 + $0x1f0] sm:$0xff]
    %v2460 = vld [vmem:[#allocation7 + $0x1f8] sm:$0xff]
    %v2461 = vld [vmem:[#allocation7 + $0x200] sm:$0xff]
    %v2462 = vld [vmem:[#allocation7 + $0x208] sm:$0xff]
    %v2463 = vld [vmem:[#allocation7 + $0x210] sm:$0xff]
    %v2464 = vld [vmem:[#allocation7 + $0x218] sm:$0xff]
    %v2465 = vld [vmem:[#allocation7 + $0x220] sm:$0xff]
    %v2466 = vld [vmem:[#allocation7 + $0x228] sm:$0xff]
    %v2467 = vld [vmem:[#allocation7 + $0x230] sm:$0xff]
    %v2468 = vld [vmem:[#allocation7 + $0x238] sm:$0xff]
    %v2501 = vunpack.c.l.b16 %v2437
    %v2502 = vunpack.c.h.b16 %v2437
    %v2503 = vunpack.c.l.b16 %v2438
    %v2504 = vunpack.c.h.b16 %v2438
    %v2505 = vunpack.c.l.b16 %v2439
    %v2506 = vunpack.c.h.b16 %v2439
    %v2507 = vunpack.c.l.b16 %v2440
    %v2508 = vunpack.c.h.b16 %v2440
    %v2509 = vunpack.c.l.b16 %v2441
    %v2510 = vunpack.c.h.b16 %v2441
    %v2511 = vunpack.c.l.b16 %v2442
    %v2512 = vunpack.c.h.b16 %v2442
    %v2513 = vunpack.c.l.b16 %v2443
    %v2514 = vunpack.c.h.b16 %v2443
    %v2515 = vunpack.c.l.b16 %v2444
    %v2516 = vunpack.c.h.b16 %v2444
    %v2517 = vunpack.c.l.b16 %v2445
    %v2518 = vunpack.c.h.b16 %v2445
    %v2519 = vunpack.c.l.b16 %v2446
    %v2520 = vunpack.c.h.b16 %v2446
    %v2521 = vunpack.c.l.b16 %v2447
    %v2522 = vunpack.c.h.b16 %v2447
    %v2523 = vunpack.c.l.b16 %v2448
    %v2524 = vunpack.c.h.b16 %v2448
    %v2525 = vunpack.c.l.b16 %v2449
    %v2526 = vunpack.c.h.b16 %v2449
    %v2527 = vunpack.c.l.b16 %v2450
    %v2528 = vunpack.c.h.b16 %v2450
    %v2529 = vunpack.c.l.b16 %v2451
    %v2530 = vunpack.c.h.b16 %v2451
    %v2531 = vunpack.c.l.b16 %v2452
    %v2532 = vunpack.c.h.b16 %v2452
    %v2533 = vunpack.c.l.b16 %v2453
    %v2534 = vunpack.c.h.b16 %v2453
    %v2535 = vunpack.c.l.b16 %v2454
    %v2536 = vunpack.c.h.b16 %v2454
    %v2537 = vunpack.c.l.b16 %v2455
    %v2538 = vunpack.c.h.b16 %v2455
    %v2539 = vunpack.c.l.b16 %v2456
    %v2540 = vunpack.c.h.b16 %v2456
    %v2541 = vunpack.c.l.b16 %v2457
    %v2542 = vunpack.c.h.b16 %v2457
    %v2543 = vunpack.c.l.b16 %v2458
    %v2544 = vunpack.c.h.b16 %v2458
    %v2545 = vunpack.c.l.b16 %v2459
    %v2546 = vunpack.c.h.b16 %v2459
    %v2547 = vunpack.c.l.b16 %v2460
    %v2548 = vunpack.c.h.b16 %v2460
    %v2549 = vunpack.c.l.b16 %v2461
    %v2550 = vunpack.c.h.b16 %v2461
    %v2551 = vunpack.c.l.b16 %v2462
    %v2552 = vunpack.c.h.b16 %v2462
    %v2553 = vunpack.c.l.b16 %v2463
    %v2554 = vunpack.c.h.b16 %v2463
    %v2555 = vunpack.c.l.b16 %v2464
    %v2556 = vunpack.c.h.b16 %v2464
    %v2557 = vunpack.c.l.b16 %v2465
    %v2558 = vunpack.c.h.b16 %v2465
    %v2559 = vunpack.c.l.b16 %v2466
    %v2560 = vunpack.c.h.b16 %v2466
    %v2561 = vunpack.c.l.b16 %v2467
    %v2562 = vunpack.c.h.b16 %v2467
    %v2563 = vunpack.c.l.b16 %v2468
    %v2564 = vunpack.c.h.b16 %v2468
    %v2565 = vpack.c.b16 %v2503, %v2501
    %v2566 = vpack.c.b16 %v2504, %v2502
    %v2567 = vpack.c.b16 %v2507, %v2505
    %v2568 = vpack.c.b16 %v2508, %v2506
    %v2569 = vpack.c.b16 %v2511, %v2509
    %v2570 = vpack.c.b16 %v2512, %v2510
    %v2571 = vpack.c.b16 %v2515, %v2513
    %v2572 = vpack.c.b16 %v2516, %v2514
    %v2573 = vpack.c.b16 %v2519, %v2517
    %v2574 = vpack.c.b16 %v2520, %v2518
    %v2575 = vpack.c.b16 %v2523, %v2521
    %v2576 = vpack.c.b16 %v2524, %v2522
    %v2577 = vpack.c.b16 %v2527, %v2525
    %v2578 = vpack.c.b16 %v2528, %v2526
    %v2579 = vpack.c.b16 %v2531, %v2529
    %v2580 = vpack.c.b16 %v2532, %v2530
    %v2581 = vpack.c.b16 %v2535, %v2533
    %v2582 = vpack.c.b16 %v2536, %v2534
    %v2583 = vpack.c.b16 %v2539, %v2537
    %v2584 = vpack.c.b16 %v2540, %v2538
    %v2585 = vpack.c.b16 %v2543, %v2541
    %v2586 = vpack.c.b16 %v2544, %v2542
    %v2587 = vpack.c.b16 %v2547, %v2545
    %v2588 = vpack.c.b16 %v2548, %v2546
    %v2589 = vpack.c.b16 %v2551, %v2549
    %v2590 = vpack.c.b16 %v2552, %v2550
    %v2591 = vpack.c.b16 %v2555, %v2553
    %v2592 = vpack.c.b16 %v2556, %v2554
    %v2593 = vpack.c.b16 %v2559, %v2557
    %v2594 = vpack.c.b16 %v2560, %v2558
    %v2595 = vpack.c.b16 %v2563, %v2561
    %v2596 = vpack.c.b16 %v2564, %v2562
    %2629 = vmatpush.bf16.msra.mxu0 %v2579
    %2630 = vmatpush.bf16.msra.mxu0 %v2577
    %2631 = vmatpush.bf16.msra.mxu0 %v2575
    %2632 = vmatpush.bf16.msra.mxu0 %v2573
    %2633 = vmatpush.bf16.msra.mxu0 %v2571
    %2634 = vmatpush.bf16.msra.mxu0 %v2569
    %2635 = vmatpush.bf16.msra.mxu0 %v2567
    %2636 = vmatpush.bf16.msra.mxu0 %v2565
    %2637 = vmatmul.bf16.gmra.mxu0 %v2429
    %v2638 = vpop.f32.mrf.mxu0
    %v2639 = vadd.f32 0.0, %v2638
    %v2640 = vpop.f32.mrf.mxu0
    %v2641 = vadd.f32 0.0, %v2640
    %2642 = vmatmul.bf16.gmra.mxu0 %v2431
    %v2643 = vpop.f32.mrf.mxu0
    %v2644 = vadd.f32 0.0, %v2643
    %v2645 = vpop.f32.mrf.mxu0
    %v2646 = vadd.f32 0.0, %v2645
    %2647 = vmatmul.bf16.gmra.mxu0 %v2433
    %v2648 = vpop.f32.mrf.mxu0
    %v2649 = vadd.f32 0.0, %v2648
    %v2650 = vpop.f32.mrf.mxu0
    %v2651 = vadd.f32 0.0, %v2650
    %2652 = vmatmul.bf16.gmra.mxu0 %v2435
    %v2653 = vpop.f32.mrf.mxu0
    %v2654 = vadd.f32 0.0, %v2653
    %v2655 = vpop.f32.mrf.mxu0
    %v2656 = vadd.f32 0.0, %v2655
    %2657 = vdwg.mxu0
    %2658 = vmatpush.bf16.msra.mxu0 %v2595
    %2659 = vmatpush.bf16.msra.mxu0 %v2593
    %2660 = vmatpush.bf16.msra.mxu0 %v2591
    %2661 = vmatpush.bf16.msra.mxu0 %v2589
    %2662 = vmatpush.bf16.msra.mxu0 %v2587
    %2663 = vmatpush.bf16.msra.mxu0 %v2585
    %2664 = vmatpush.bf16.msra.mxu0 %v2583
    %2665 = vmatpush.bf16.msra.mxu0 %v2581
    %2666 = vmatmul.bf16.gmra.mxu0 %v2430
    %v2667 = vpop.f32.mrf.mxu0
    %v2668 = vadd.f32 %v2639, %v2667
    %v2669 = vpop.f32.mrf.mxu0
    %v2670 = vadd.f32 %v2641, %v2669
    %2671 = vmatmul.bf16.gmra.mxu0 %v2432
    %v2672 = vpop.f32.mrf.mxu0
    %v2673 = vadd.f32 %v2644, %v2672
    %v2674 = vpop.f32.mrf.mxu0
    %v2675 = vadd.f32 %v2646, %v2674
    %2676 = vmatmul.bf16.gmra.mxu0 %v2434
    %v2677 = vpop.f32.mrf.mxu0
    %v2678 = vadd.f32 %v2649, %v2677
    %v2679 = vpop.f32.mrf.mxu0
    %v2680 = vadd.f32 %v2651, %v2679
    %2681 = vmatmul.bf16.gmra.mxu0 %v2436
    %v2682 = vpop.f32.mrf.mxu0
    %v2683 = vadd.f32 %v2654, %v2682
    %v2684 = vpop.f32.mrf.mxu0
    %v2685 = vadd.f32 %v2656, %v2684
    %2686 = vdwg.mxu0
    %2687 = vmatpush.bf16.msra.mxu0 %v2580
    %2688 = vmatpush.bf16.msra.mxu0 %v2578
    %2689 = vmatpush.bf16.msra.mxu0 %v2576
    %2690 = vmatpush.bf16.msra.mxu0 %v2574
    %2691 = vmatpush.bf16.msra.mxu0 %v2572
    %2692 = vmatpush.bf16.msra.mxu0 %v2570
    %2693 = vmatpush.bf16.msra.mxu0 %v2568
    %2694 = vmatpush.bf16.msra.mxu0 %v2566
    %2695 = vmatmul.bf16.gmra.mxu0 %v2429
    %v2696 = vpop.f32.mrf.mxu0
    %v2697 = vadd.f32 0.0, %v2696
    %v2698 = vpop.f32.mrf.mxu0
    %v2699 = vadd.f32 0.0, %v2698
    %2700 = vmatmul.bf16.gmra.mxu0 %v2431
    %v2701 = vpop.f32.mrf.mxu0
    %v2702 = vadd.f32 0.0, %v2701
    %v2703 = vpop.f32.mrf.mxu0
    %v2704 = vadd.f32 0.0, %v2703
    %2705 = vmatmul.bf16.gmra.mxu0 %v2433
    %v2706 = vpop.f32.mrf.mxu0
    %v2707 = vadd.f32 0.0, %v2706
    %v2708 = vpop.f32.mrf.mxu0
    %v2709 = vadd.f32 0.0, %v2708
    %2710 = vmatmul.bf16.gmra.mxu0 %v2435
    %v2711 = vpop.f32.mrf.mxu0
    %v2712 = vadd.f32 0.0, %v2711
    %v2713 = vpop.f32.mrf.mxu0
    %v2714 = vadd.f32 0.0, %v2713
    %2715 = vdwg.mxu0
    %2716 = vmatpush.bf16.msra.mxu0 %v2596
    %2717 = vmatpush.bf16.msra.mxu0 %v2594
    %2718 = vmatpush.bf16.msra.mxu0 %v2592
    %2719 = vmatpush.bf16.msra.mxu0 %v2590
    %2720 = vmatpush.bf16.msra.mxu0 %v2588
    %2721 = vmatpush.bf16.msra.mxu0 %v2586
    %2722 = vmatpush.bf16.msra.mxu0 %v2584
    %2723 = vmatpush.bf16.msra.mxu0 %v2582
    %2724 = vmatmul.bf16.gmra.mxu0 %v2430
    %v2725 = vpop.f32.mrf.mxu0
    %v2726 = vadd.f32 %v2697, %v2725
    %v2727 = vpop.f32.mrf.mxu0
    %v2728 = vadd.f32 %v2699, %v2727
    %2729 = vmatmul.bf16.gmra.mxu0 %v2432
    %v2730 = vpop.f32.mrf.mxu0
    %v2731 = vadd.f32 %v2702, %v2730
    %v2732 = vpop.f32.mrf.mxu0
    %v2733 = vadd.f32 %v2704, %v2732
    %2734 = vmatmul.bf16.gmra.mxu0 %v2434
    %v2735 = vpop.f32.mrf.mxu0
    %v2736 = vadd.f32 %v2707, %v2735
    %v2737 = vpop.f32.mrf.mxu0
    %v2738 = vadd.f32 %v2709, %v2737
    %2739 = vmatmul.bf16.gmra.mxu0 %v2436
    %v2740 = vpop.f32.mrf.mxu0
    %v2741 = vadd.f32 %v2712, %v2740
    %v2742 = vpop.f32.mrf.mxu0
    %v2743 = vadd.f32 %v2714, %v2742
    %2744 = vdwg.mxu0
    %s2745 = scalar_lea.vmem [#allocation11], 3
    %v2746 = vld [vmem:[%s2745] ss:$8 sm:$0x3]
    %s2747 = scalar_lea.vmem [#allocation11], 4
    %v2748 = vld [vmem:[%s2747] ss:$8 sm:$0x3]
    %v2749 = vadd.f32 %v2668, %v2670
    %v2750 = vadd.f32 %v2749, %v2673
    %v2751 = vadd.f32 %v2750, %v2675
    %v2752 = vadd.f32 %v2751, %v2678
    %v2753 = vadd.f32 %v2752, %v2680
    %v2754 = vadd.f32 %v2753, %v2683
    %v2755 = vadd.f32 %v2754, %v2685
    %v2756 = vrot.slane %v2755, 4
    %v2757 = vadd.f32 %v2755, %v2756
    %v2758 = vrot.slane %v2757, 2
    %v2759 = vadd.f32 %v2757, %v2758
    %v2760 = vrot.slane %v2759, 1
    %v2761 = vadd.f32 %v2759, %v2760
    %v2762 = vadd.f32 %v2726, %v2728
    %v2763 = vadd.f32 %v2762, %v2731
    %v2764 = vadd.f32 %v2763, %v2733
    %v2765 = vadd.f32 %v2764, %v2736
    %v2766 = vadd.f32 %v2765, %v2738
    %v2767 = vadd.f32 %v2766, %v2741
    %v2768 = vadd.f32 %v2767, %v2743
    %v2769 = vrot.slane %v2768, 4
    %v2770 = vadd.f32 %v2768, %v2769
    %v2771 = vrot.slane %v2770, 2
    %v2772 = vadd.f32 %v2770, %v2771
    %v2773 = vrot.slane %v2772, 1
    %v2774 = vadd.f32 %v2772, %v2773
    %2775 = vrot.lane.b32.xlu0 %v2761, 8
    %v2776 = vpop.permute.xlu0 %2775
    %2777 = vrot.lane.b32.xlu0 %v2774, 8
    %v2778 = vpop.permute.xlu0 %2777
    %v2779 = vsel %vm1494, %v2776, %v2778
    %v2780 = vsel %vm1494, %v2778, %v2776
    %v2781 = vadd.f32 %v2761, %v2780
    %v2782 = vadd.f32 %v2774, %v2779
    %2783 = vrot.lane.b32.xlu0 %v2781, 16
    %v2784 = vpop.permute.xlu0 %2783
    %2785 = vrot.lane.b32.xlu0 %v2782, 16
    %v2786 = vpop.permute.xlu0 %2785
    %v2787 = vsel %vm1503, %v2784, %v2786
    %v2788 = vsel %vm1503, %v2786, %v2784
    %v2789 = vadd.f32 %v2781, %v2788
    %v2790 = vadd.f32 %v2782, %v2787
    %2791 = vrot.lane.b32.xlu0 %v2789, 32
    %v2792 = vpop.permute.xlu0 %2791
    %2793 = vrot.lane.b32.xlu0 %v2790, 32
    %v2794 = vpop.permute.xlu0 %2793
    %v2795 = vsel %vm1512, %v2792, %v2794
    %v2796 = vsel %vm1512, %v2794, %v2792
    %v2797 = vadd.f32 %v2789, %v2796
    %v2798 = vadd.f32 %v2790, %v2795
    %2799 = vrot.lane.b32.xlu0 %v2797, 64
    %v2800 = vpop.permute.xlu0 %2799
    %2801 = vrot.lane.b32.xlu0 %v2798, 64
    %v2802 = vpop.permute.xlu0 %2801
    %v2803 = vsel %vm1521, %v2800, %v2802
    %v2804 = vsel %vm1521, %v2802, %v2800
    %v2805 = vadd.f32 %v2797, %v2804
    %v2806 = vadd.f32 %v2798, %v2803
    %v2807 = vadd.f32 %v2805, %v2806
    %v2808 = vmul.f32 %v2807, 0.00048828125
    %v2809 = vperm.slane %v2808, 0
    %v2810 = vsub.f32 %v2668, %v2809
    %v2811 = vsub.f32 %v2726, %v2809
    %v2812 = vsub.f32 %v2670, %v2809
    %v2813 = vsub.f32 %v2728, %v2809
    %v2814 = vsub.f32 %v2673, %v2809
    %v2815 = vsub.f32 %v2731, %v2809
    %v2816 = vsub.f32 %v2675, %v2809
    %v2817 = vsub.f32 %v2733, %v2809
    %v2818 = vsub.f32 %v2678, %v2809
    %v2819 = vsub.f32 %v2736, %v2809
    %v2820 = vsub.f32 %v2680, %v2809
    %v2821 = vsub.f32 %v2738, %v2809
    %v2822 = vsub.f32 %v2683, %v2809
    %v2823 = vsub.f32 %v2741, %v2809
    %v2824 = vsub.f32 %v2685, %v2809
    %v2825 = vsub.f32 %v2743, %v2809
    %v2826 = vmul.f32 %v2810, %v2810
    %v2827 = vmul.f32 %v2811, %v2811
    %v2828 = vmul.f32 %v2812, %v2812
    %v2829 = vmul.f32 %v2813, %v2813
    %v2830 = vmul.f32 %v2814, %v2814
    %v2831 = vmul.f32 %v2815, %v2815
    %v2832 = vmul.f32 %v2816, %v2816
    %v2833 = vmul.f32 %v2817, %v2817
    %v2834 = vmul.f32 %v2818, %v2818
    %v2835 = vmul.f32 %v2819, %v2819
    %v2836 = vmul.f32 %v2820, %v2820
    %v2837 = vmul.f32 %v2821, %v2821
    %v2838 = vmul.f32 %v2822, %v2822
    %v2839 = vmul.f32 %v2823, %v2823
    %v2840 = vmul.f32 %v2824, %v2824
    %v2841 = vmul.f32 %v2825, %v2825
    %v2842 = vadd.f32 %v2826, %v2828
    %v2843 = vadd.f32 %v2842, %v2830
    %v2844 = vadd.f32 %v2843, %v2832
    %v2845 = vadd.f32 %v2844, %v2834
    %v2846 = vadd.f32 %v2845, %v2836
    %v2847 = vadd.f32 %v2846, %v2838
    %v2848 = vadd.f32 %v2847, %v2840
    %v2849 = vrot.slane %v2848, 4
    %v2850 = vadd.f32 %v2848, %v2849
    %v2851 = vrot.slane %v2850, 2
    %v2852 = vadd.f32 %v2850, %v2851
    %v2853 = vrot.slane %v2852, 1
    %v2854 = vadd.f32 %v2852, %v2853
    %v2855 = vadd.f32 %v2827, %v2829
    %v2856 = vadd.f32 %v2855, %v2831
    %v2857 = vadd.f32 %v2856, %v2833
    %v2858 = vadd.f32 %v2857, %v2835
    %v2859 = vadd.f32 %v2858, %v2837
    %v2860 = vadd.f32 %v2859, %v2839
    %v2861 = vadd.f32 %v2860, %v2841
    %v2862 = vrot.slane %v2861, 4
    %v2863 = vadd.f32 %v2861, %v2862
    %v2864 = vrot.slane %v2863, 2
    %v2865 = vadd.f32 %v2863, %v2864
    %v2866 = vrot.slane %v2865, 1
    %v2867 = vadd.f32 %v2865, %v2866
    %2868 = vrot.lane.b32.xlu0 %v2854, 8
    %v2869 = vpop.permute.xlu0 %2868
    %2870 = vrot.lane.b32.xlu0 %v2867, 8
    %v2871 = vpop.permute.xlu0 %2870
    %v2872 = vsel %vm1494, %v2869, %v2871
    %v2873 = vsel %vm1494, %v2871, %v2869
    %v2874 = vadd.f32 %v2854, %v2873
    %v2875 = vadd.f32 %v2867, %v2872
    %2876 = vrot.lane.b32.xlu0 %v2874, 16
    %v2877 = vpop.permute.xlu0 %2876
    %2878 = vrot.lane.b32.xlu0 %v2875, 16
    %v2879 = vpop.permute.xlu0 %2878
    %v2880 = vsel %vm1503, %v2877, %v2879
    %v2881 = vsel %vm1503, %v2879, %v2877
    %v2882 = vadd.f32 %v2874, %v2881
    %v2883 = vadd.f32 %v2875, %v2880
    %2884 = vrot.lane.b32.xlu0 %v2882, 32
    %v2885 = vpop.permute.xlu0 %2884
    %2886 = vrot.lane.b32.xlu0 %v2883, 32
    %v2887 = vpop.permute.xlu0 %2886
    %v2888 = vsel %vm1512, %v2885, %v2887
    %v2889 = vsel %vm1512, %v2887, %v2885
    %v2890 = vadd.f32 %v2882, %v2889
    %v2891 = vadd.f32 %v2883, %v2888
    %2892 = vrot.lane.b32.xlu0 %v2890, 64
    %v2893 = vpop.permute.xlu0 %2892
    %2894 = vrot.lane.b32.xlu0 %v2891, 64
    %v2895 = vpop.permute.xlu0 %2894
    %v2896 = vsel %vm1521, %v2893, %v2895
    %v2897 = vsel %vm1521, %v2895, %v2893
    %v2898 = vadd.f32 %v2890, %v2897
    %v2899 = vadd.f32 %v2891, %v2896
    %v2900 = vadd.f32 %v2898, %v2899
    %v2901 = vmul.f32 %v2900, 0.00048828125
    %v2902 = vadd.f32 %v2901, 1e-05
    %v2903 = vrsqrt.pop %v2902
    %v2904 = vmul.f32 %v2903, %v2902
    %v2905 = vmul.f32 %v2904, %v2903
    %v2906 = vmul.f32 0.5, %v2905
    %v2907 = vsub.f32 1.5, %v2906
    %v2908 = vmul.f32 %v2903, %v2907
    %vm2909 = vweird.f32 %v2902
    %vm2910 = vweird.f32 %v2903
    %vm2911 = vmor %vm2909, %vm2910
    %v2912 = vsel %vm2911, %v2903, %v2908
    %v2914 = vperm.slane %v2746, 0
    %v2915 = vperm.slane %v2746, 1
    %v2918 = vmul.f32 %v2912, %v2914
    %v2919 = vmul.f32 %v2912, %v2915
    %v2920 = vperm.slane %v2918, 0
    %v2921 = vperm.slane %v2919, 0
    %v2922 = vmul.f32 %v2810, %v2920
    %v2923 = vmul.f32 %v2811, %v2921
    %v2924 = vmul.f32 %v2812, %v2920
    %v2925 = vmul.f32 %v2813, %v2921
    %v2926 = vmul.f32 %v2814, %v2920
    %v2927 = vmul.f32 %v2815, %v2921
    %v2928 = vmul.f32 %v2816, %v2920
    %v2929 = vmul.f32 %v2817, %v2921
    %v2930 = vmul.f32 %v2818, %v2920
    %v2931 = vmul.f32 %v2819, %v2921
    %v2932 = vmul.f32 %v2820, %v2920
    %v2933 = vmul.f32 %v2821, %v2921
    %v2934 = vmul.f32 %v2822, %v2920
    %v2935 = vmul.f32 %v2823, %v2921
    %v2936 = vmul.f32 %v2824, %v2920
    %v2937 = vmul.f32 %v2825, %v2921
    %v2939 = vperm.slane %v2748, 0
    %v2940 = vperm.slane %v2748, 1
    %v2943 = vadd.f32 %v2922, %v2939
    %v2944 = vadd.f32 %v2923, %v2940
    %v2945 = vadd.f32 %v2924, %v2939
    %v2946 = vadd.f32 %v2925, %v2940
    %v2947 = vadd.f32 %v2926, %v2939
    %v2948 = vadd.f32 %v2927, %v2940
    %v2949 = vadd.f32 %v2928, %v2939
    %v2950 = vadd.f32 %v2929, %v2940
    %v2951 = vadd.f32 %v2930, %v2939
    %v2952 = vadd.f32 %v2931, %v2940
    %v2953 = vadd.f32 %v2932, %v2939
    %v2954 = vadd.f32 %v2933, %v2940
    %v2955 = vadd.f32 %v2934, %v2939
    %v2956 = vadd.f32 %v2935, %v2940
    %v2957 = vadd.f32 %v2936, %v2939
    %v2958 = vadd.f32 %v2937, %v2940
    %v2959 = vadd.f32 %v2943, %v394
    %v2960 = vadd.f32 %v2944, %v423
    %v2961 = vadd.f32 %v2945, %v396
    %v2962 = vadd.f32 %v2946, %v425
    %v2963 = vadd.f32 %v2947, %v399
    %v2964 = vadd.f32 %v2948, %v428
    %v2965 = vadd.f32 %v2949, %v401
    %v2966 = vadd.f32 %v2950, %v430
    %v2967 = vadd.f32 %v2951, %v404
    %v2968 = vadd.f32 %v2952, %v433
    %v2969 = vadd.f32 %v2953, %v406
    %v2970 = vadd.f32 %v2954, %v435
    %v2971 = vadd.f32 %v2955, %v409
    %v2972 = vadd.f32 %v2956, %v438
    %v2973 = vadd.f32 %v2957, %v411
    %v2974 = vadd.f32 %v2958, %v440
    %2975 = vst [vmem:[#allocation13] sm:$0xff] %v2959
    %2976 = vst [vmem:[#allocation13 + $0x8] sm:$0xff] %v2960
    %2977 = vst [vmem:[#allocation13 + $0x10] sm:$0xff] %v2961
    %2978 = vst [vmem:[#allocation13 + $0x18] sm:$0xff] %v2962
    %2979 = vst [vmem:[#allocation13 + $0x20] sm:$0xff] %v2963
    %2980 = vst [vmem:[#allocation13 + $0x28] sm:$0xff] %v2964
    %2981 = vst [vmem:[#allocation13 + $0x30] sm:$0xff] %v2965
    %2982 = vst [vmem:[#allocation13 + $0x38] sm:$0xff] %v2966
    %2983 = vst [vmem:[#allocation13 + $0x40] sm:$0xff] %v2967
    %2984 = vst [vmem:[#allocation13 + $0x48] sm:$0xff] %v2968
    %2985 = vst [vmem:[#allocation13 + $0x50] sm:$0xff] %v2969
    %2986 = vst [vmem:[#allocation13 + $0x58] sm:$0xff] %v2970
    %2987 = vst [vmem:[#allocation13 + $0x60] sm:$0xff] %v2971
    %2988 = vst [vmem:[#allocation13 + $0x68] sm:$0xff] %v2972
    %2989 = vst [vmem:[#allocation13 + $0x70] sm:$0xff] %v2973
    %2990 = vst [vmem:[#allocation13 + $0x78] sm:$0xff] %v2974
    // Predicated region
    $region62: #{tpu_custom_call.1} parent=1 // pred_check
      _
    $region63: #{tpu_custom_call.1} parent=1 // pred_check_branch
      %2992 = sbr.rel (0) target = $region65
    $region64: #{tpu_custom_call.1} parent=1 // pred_region
      %2994 = vsyncadd [#allocation4], 0
      %s2995 = sshll.u32 [#allocation13], 4
      %s2996 = int_to_ptr.vmem [resolvable:$true] %s2995
      %s2997 = sshll.u32 %s9, 4
      %s2998 = int_to_ptr.hbm [resolvable:$true] %s2997
      %3003 = dma.vmem_to_hbm [thread:$0]  %s2996, 2048, %s2998, [#allocation4], 256, 256, 16
    $region65: #{tpu_custom_call.1} parent=1 // pred_fallthru
      _
    // Predicated region
    $region66: #{tpu_custom_call.1} parent=1 // pred_check
      _
    $region67: #{tpu_custom_call.1} parent=1 // pred_check_branch
      %3005 = sbr.rel (0) target = $region69
    $region68: #{tpu_custom_call.1} parent=1 // pred_region
      %3007 = dma.done [#allocation4], 2048
    $region69: #{tpu_custom_call.1} parent=1 // pred_fallthru
      _
    %3008 = vsyncpa [#allocation3], 1
    %3009 = vsyncpa [#allocation6], 1
    %3010 = vsyncpa [#allocation9], 1
    %3011 = vsyncpa [#allocation12], 1
    %3012 = vsyncpa [#allocation4], 1

</llo_original>
